<compile_context>
chip_gen: v7x
topology: tpu7x:2x2x1
jax: 0.10.0
libtpu: 0.0.40
codegen_flags: <defaults>
</compile_context>

<pallas_src>
import jax
import jax.numpy as jnp
import numpy as np
from jax.experimental import pallas as pl
from jax.experimental.pallas import tpu as pltpu


PAD = 16  # guard rows around the padded image (bf16 sublane tile); must be >= 1


# ----------------------------------------------------------------------------
# Fused Bridge kernel: (Conv3x3 + BN + ReLU) -> (Conv3x3 + BN + ReLU)
# ----------------------------------------------------------------------------
def _make_bridge_kernel(H, W, Cin, Cmid, Cout):
    HW = H * W               # output rows per image (flattened spatial)
    R = (H + 2) * W          # rows of the zero-row-padded image (flattened)

    def _conv_block(xp_ref, xcat_ref, w_ref, scale, shift, keep_l, keep_r, Cx):
        """Conv3x3(pad=1) + folded BN on a padded, flattened (rows, Cx) image.

        xp_ref   : (2*PAD + R, Cx) bf16; rows [PAD, PAD+R) hold the padded
                   image (top/bottom zero rows included), guard rows are zero.
        xcat_ref : (R, 3*Cx) bf16 scratch; column block kx holds the image
                   shifted by (kx-1) columns, with wrapped elements zeroed.
        """
        left = xp_ref[pl.ds(PAD - 1, R)]     # x[r, c-1]   (1-row shift)
        mid = xp_ref[pl.ds(PAD, R)]          # x[r, c]
        right = xp_ref[pl.ds(PAD + 1, R)]    # x[r, c+1]
        zero = jnp.zeros((), xcat_ref.dtype)
        xcat_ref[:, 0:Cx] = jnp.where(keep_l, left, zero)
        xcat_ref[:, Cx:2 * Cx] = mid
        xcat_ref[:, 2 * Cx:3 * Cx] = jnp.where(keep_r, right, zero)

        # 3 fat-K MXU matmuls (one per kernel row), f32 accumulation.
        # LHS slices start at 0/W/2W (sublane-aligned for W % 16 == 0).
        acc = jnp.dot(xcat_ref[pl.ds(0, HW)], w_ref[0],
                      preferred_element_type=jnp.float32)
        acc = acc + jnp.dot(xcat_ref[pl.ds(W, HW)], w_ref[1],
                            preferred_element_type=jnp.float32)
        acc = acc + jnp.dot(xcat_ref[pl.ds(2 * W, HW)], w_ref[2],
                            preferred_element_type=jnp.float32)
        return acc * scale + shift           # folded BN (+ conv bias)

    def kernel(x_ref, w1_ref, s1_ref, b1_ref, w2_ref, s2_ref, b2_ref, o_ref,
               xp1_ref, xcat1_ref, xp2_ref, xcat2_ref):
        # Zero the guard rows + top/bottom zero-padding rows of both padded
        # buffers (cheap; done every step for megacore safety).
        for xp, c in ((xp1_ref, Cin), (xp2_ref, Cmid)):
            z = jnp.zeros((PAD + W, c), xp.dtype)
            xp[pl.ds(0, PAD + W)] = z
            xp[pl.ds(PAD + W + HW, PAD + W)] = z

        # Column-boundary masks (zero the elements that wrapped across rows).
        col = jax.lax.broadcasted_iota(jnp.int32, (R, 1), 0)
        col = (col & (W - 1)) if (W & (W - 1)) == 0 else col % W
        keep_l = col > 0
        keep_r = col < (W - 1)

        # ---- ConvBlock 1: Conv3x3 + BN + ReLU -------------------------------
        xp1_ref[pl.ds(PAD + W, HW)] = x_ref[...]
        y1 = _conv_block(xp1_ref, xcat1_ref, w1_ref, s1_ref[...], b1_ref[...],
                         keep_l, keep_r, Cin)
        y1 = jnp.maximum(y1, 0.0)
        # Intermediate stays in VMEM (bf16), written straight into conv2's
        # padded buffer -- no HBM round trip.
        xp2_ref[pl.ds(PAD + W, HW)] = y1.astype(xp2_ref.dtype)

        # ---- ConvBlock 2: Conv3x3 + BN + ReLU -------------------------------
        y2 = _conv_block(xp2_ref, xcat2_ref, w2_ref, s2_ref[...], b2_ref[...],
                         keep_l, keep_r, Cmid)
        o_ref[...] = jnp.maximum(y2, 0.0).astype(o_ref.dtype)

    return kernel


def _fold_bn(p, eps):
    """Fold conv bias + inference BN into scale/shift; reshape conv weight to
    (kH, kW*Cin, Cout) bf16 for the fat-K matmul."""
    cout, cin = p["w"].shape[0], p["w"].shape[1]
    scale = p["gamma"] * jax.lax.rsqrt(p["var"] + eps)
    shift = p["beta"] + (p["b"] - p["mean"]) * scale
    w = jnp.transpose(p["w"], (2, 3, 1, 0)).reshape(3, 3 * cin, cout)
    return (w.astype(jnp.bfloat16),
            scale.reshape(1, cout).astype(jnp.float32),
            shift.reshape(1, cout).astype(jnp.float32))


def _vmem_estimate_bytes(H, W, Cin, Cmid, Cout):
    HW, R = H * W, (H + 2) * W
    blocks = 2 * (HW * Cin * 2 + 3 * 3 * Cin * Cmid * 2 + 3 * 3 * Cmid * Cout * 2
                  + 2 * Cmid * 4 + 2 * Cout * 4 + HW * Cout * 4)
    scratch = ((2 * PAD + R) * (Cin + Cmid) * 2
               + R * 3 * (Cin + Cmid) * 2)
    return blocks + scratch


# ----------------------------------------------------------------------------
# Bridge forward (one fused pallas_call)
# ----------------------------------------------------------------------------
def bridge_forward(params, x_nchw, *, eps=1e-5):
    N, Cin, H, W = x_nchw.shape
    w1, s1, b1 = _fold_bn(params["cb1"], eps)
    w2, s2, b2 = _fold_bn(params["cb2"], eps)
    Cmid, Cout = w1.shape[-1], w2.shape[-1]
    HW, R = H * W, (H + 2) * W

    # Whole-image-per-step tiling: budget VMEM (fits easily at the UNet
    # bottleneck; re-tile with row strips for big spatial inputs).
    assert _vmem_estimate_bytes(H, W, Cin, Cmid, Cout) < 20 * 1024 * 1024, (
        "whole-image tile does not fit VMEM; strip tiling needed")

    # NCHW -> lane-dense (H*W, C) bf16 slab per image (cast fused here).
    x = jnp.transpose(x_nchw, (0, 2, 3, 1)).astype(jnp.bfloat16)
    x = x.reshape(N, HW, Cin)

    kernel = _make_bridge_kernel(H, W, Cin, Cmid, Cout)
    out = pl.pallas_call(
        kernel,
        out_shape=jax.ShapeDtypeStruct((N, HW, Cout), jnp.float32),
        grid=(N,),
        in_specs=[
            pl.BlockSpec((None, HW, Cin), lambda n: (n, 0, 0)),        # x
            pl.BlockSpec((3, 3 * Cin, Cmid), lambda n: (0, 0, 0)),     # w1
            pl.BlockSpec((1, Cmid), lambda n: (0, 0)),                 # scale1
            pl.BlockSpec((1, Cmid), lambda n: (0, 0)),                 # shift1
            pl.BlockSpec((3, 3 * Cmid, Cout), lambda n: (0, 0, 0)),    # w2
            pl.BlockSpec((1, Cout), lambda n: (0, 0)),                 # scale2
            pl.BlockSpec((1, Cout), lambda n: (0, 0)),                 # shift2
        ],
        out_specs=pl.BlockSpec((None, HW, Cout), lambda n: (n, 0, 0)),
        scratch_shapes=[
            pltpu.VMEM((2 * PAD + R, Cin), jnp.bfloat16),   # padded input
            pltpu.VMEM((R, 3 * Cin), jnp.bfloat16),         # im2col (conv1)
            pltpu.VMEM((2 * PAD + R, Cmid), jnp.bfloat16),  # padded intermediate
            pltpu.VMEM((R, 3 * Cmid), jnp.bfloat16),        # im2col (conv2)
        ],
        compiler_params=pltpu.CompilerParams(
            dimension_semantics=("parallel",),
            vmem_limit_bytes=32 * 1024 * 1024),
    )(x, w1, s1, b1, w2, s2, b2)

    return jnp.transpose(out.reshape(N, H, W, Cout), (0, 3, 1, 2))   # NCHW


# ----------------------------------------------------------------------------
# Pure-JAX reference (mirrors the kernel's bf16 quantization points)
# ----------------------------------------------------------------------------
def _q_bf16(x):
    return x.astype(jnp.bfloat16).astype(jnp.float32)


def _ref_conv_block(x_nhwc, p, eps=1e-5, relu=True):
    w = jnp.transpose(p["w"], (2, 3, 1, 0))                       # HWIO
    y = jax.lax.conv_general_dilated(
        _q_bf16(x_nhwc), _q_bf16(w),
        window_strides=(1, 1), padding=((1, 1), (1, 1)),
        dimension_numbers=("NHWC", "HWIO", "NHWC"),
        precision=jax.lax.Precision.HIGHEST)
    y = y + p["b"]
    y = (y - p["mean"]) / jnp.sqrt(p["var"] + eps) * p["gamma"] + p["beta"]
    return jnp.maximum(y, 0.0) if relu else y


def bridge_reference(params, x_nchw):
    x = jnp.transpose(x_nchw, (0, 2, 3, 1)).astype(jnp.float32)
    h = _ref_conv_block(x, params["cb1"])
    h = _q_bf16(h)                        # kernel keeps the intermediate in bf16
    y = _ref_conv_block(h, params["cb2"])
    return jnp.transpose(y, (0, 3, 1, 2))


# ----------------------------------------------------------------------------
# Deterministic parameter init (PyTorch layouts)
# ----------------------------------------------------------------------------
def init_bridge_params(key, in_channels, out_channels):
    k1, k2 = jax.random.split(key)

    def conv_block_params(k, cin, cout):
        ks = jax.random.split(k, 6)
        return {
            "w": 0.05 * jax.random.normal(ks[0], (cout, cin, 3, 3), jnp.float32),
            "b": 0.05 * jax.random.normal(ks[1], (cout,), jnp.float32),
            "gamma": 1.0 + 0.1 * jax.random.normal(ks[2], (cout,), jnp.float32),
            "beta": 0.1 * jax.random.normal(ks[3], (cout,), jnp.float32),
            "mean": 0.1 * jax.random.normal(ks[4], (cout,), jnp.float32),
            "var": 0.5 + jax.random.uniform(ks[5], (cout,), jnp.float32),
        }

    return {"cb1": conv_block_params(k1, in_channels, out_channels),
            "cb2": conv_block_params(k2, out_channels, out_channels)}


# ----------------------------------------------------------------------------
if __name__ == "__main__":
    # The Bridge sits at the UNet bottleneck: channel-heavy, small spatial.
    N, C_in, C_out, H, W = 2, 128, 128, 16, 16

    key = jax.random.PRNGKey(0)
    kx, kp = jax.random.split(key)
    x = jax.random.normal(kx, (N, C_in, H, W), jnp.float32)
    params = init_bridge_params(kp, C_in, C_out)

    fwd = jax.jit(bridge_forward)
    out = jax.block_until_ready(fwd(params, x))
    assert out.shape == (N, C_out, H, W), out.shape

    ref = jax.block_until_ready(bridge_reference(params, x))
    np.testing.assert_allclose(np.asarray(out), np.asarray(ref),
                               atol=5e-3, rtol=5e-3)

    print("KERNEL_OK")
</pallas_src>

<mosaic_0001>
module attributes {stable_mosaic.version = 11 : i64} {
  func.func @kernel(%arg0: i32, %arg1: memref<1x256x128xbf16, #tpu.memory_space<vmem>>, %arg2: memref<3x384x128xbf16, #tpu.memory_space<vmem>>, %arg3: memref<1x128xf32, #tpu.memory_space<vmem>>, %arg4: memref<1x128xf32, #tpu.memory_space<vmem>>, %arg5: memref<3x384x128xbf16, #tpu.memory_space<vmem>>, %arg6: memref<1x128xf32, #tpu.memory_space<vmem>>, %arg7: memref<1x128xf32, #tpu.memory_space<vmem>>, %arg8: memref<1x256x128xf32, #tpu.memory_space<vmem>>, %arg9: memref<320x128xbf16, #tpu.memory_space<vmem>>, %arg10: memref<288x384xbf16, #tpu.memory_space<vmem>>, %arg11: memref<320x128xbf16, #tpu.memory_space<vmem>>, %arg12: memref<288x384xbf16, #tpu.memory_space<vmem>>) attributes {dimension_semantics = [#tpu.dimension_semantics<parallel>], iteration_bounds = array<i64: 2>, scalar_prefetch = 0 : i64, scratch_operands = 4 : i64, tpu.core_type = #tpu.core_type<tc>, window_params = [{transform_indices = @transform_0, window_bounds = array<i64: 1, 256, 128>}, {pipeline_mode = #tpu.pipeline_mode<synchronous>, transform_indices = @transform_1, window_bounds = array<i64: 3, 384, 128>}, {pipeline_mode = #tpu.pipeline_mode<synchronous>, transform_indices = @transform_2, window_bounds = array<i64: 1, 128>}, {pipeline_mode = #tpu.pipeline_mode<synchronous>, transform_indices = @transform_3, window_bounds = array<i64: 1, 128>}, {pipeline_mode = #tpu.pipeline_mode<synchronous>, transform_indices = @transform_4, window_bounds = array<i64: 3, 384, 128>}, {pipeline_mode = #tpu.pipeline_mode<synchronous>, transform_indices = @transform_5, window_bounds = array<i64: 1, 128>}, {pipeline_mode = #tpu.pipeline_mode<synchronous>, transform_indices = @transform_6, window_bounds = array<i64: 1, 128>}, {transform_indices = @transform_7, window_bounds = array<i64: 1, 256, 128>}]} {
    %cst = arith.constant 0.000000e+00 : bf16
    %0 = vector.broadcast %cst : bf16 to vector<32x128xbf16>
    %c0 = arith.constant 0 : index
    %c0_0 = arith.constant 0 : index
    %1 = vector.load %arg9[%c0, %c0_0] : memref<320x128xbf16, #tpu.memory_space<vmem>>, vector<32x128xbf16>
    tpu.vector_store %arg9[%c0, %c0_0], %0 {strides = array<i32>} : memref<320x128xbf16, #tpu.memory_space<vmem>>, vector<32x128xbf16>,
    %c288 = arith.constant 288 : index
    %c0_1 = arith.constant 0 : index
    %2 = vector.load %arg9[%c288, %c0_1] : memref<320x128xbf16, #tpu.memory_space<vmem>>, vector<32x128xbf16>
    tpu.vector_store %arg9[%c288, %c0_1], %0 {strides = array<i32>} : memref<320x128xbf16, #tpu.memory_space<vmem>>, vector<32x128xbf16>,
    %cst_2 = arith.constant 0.000000e+00 : bf16
    %3 = vector.broadcast %cst_2 : bf16 to vector<32x128xbf16>
    %c0_3 = arith.constant 0 : index
    %c0_4 = arith.constant 0 : index
    %4 = vector.load %arg11[%c0_3, %c0_4] : memref<320x128xbf16, #tpu.memory_space<vmem>>, vector<32x128xbf16>
    tpu.vector_store %arg11[%c0_3, %c0_4], %3 {strides = array<i32>} : memref<320x128xbf16, #tpu.memory_space<vmem>>, vector<32x128xbf16>,
    %c288_5 = arith.constant 288 : index
    %c0_6 = arith.constant 0 : index
    %5 = vector.load %arg11[%c288_5, %c0_6] : memref<320x128xbf16, #tpu.memory_space<vmem>>, vector<32x128xbf16>
    tpu.vector_store %arg11[%c288_5, %c0_6], %3 {strides = array<i32>} : memref<320x128xbf16, #tpu.memory_space<vmem>>, vector<32x128xbf16>,
    %6 = tpu.iota {dimensions = array<i32: 0>} : vector<288x1xi32>
    %c15_i32 = arith.constant 15 : i32
    %7 = vector.broadcast %c15_i32 : i32 to vector<288x1xi32>
    %8 = arith.andi %6, %7 : vector<288x1xi32>
    %c0_i32 = arith.constant 0 : i32
    %9 = vector.broadcast %c0_i32 : i32 to vector<288x1xi32>
    %10 = arith.cmpi sgt, %8, %9 : vector<288x1xi32>
    %c15_i32_7 = arith.constant 15 : i32
    %11 = vector.broadcast %c15_i32_7 : i32 to vector<288x1xi32>
    %12 = arith.cmpi slt, %8, %11 : vector<288x1xi32>
    %c0_8 = arith.constant 0 : index
    %c0_9 = arith.constant 0 : index
    %c0_10 = arith.constant 0 : index
    %13 = vector.load %arg1[%c0_8, %c0_9, %c0_10] : memref<1x256x128xbf16, #tpu.memory_space<vmem>>, vector<1x256x128xbf16>
    %14 = vector.shape_cast %13 : vector<1x256x128xbf16> to vector<256x128xbf16>
    %c32 = arith.constant 32 : index
    %c0_11 = arith.constant 0 : index
    %15 = vector.load %arg9[%c32, %c0_11] : memref<320x128xbf16, #tpu.memory_space<vmem>>, vector<256x128xbf16>
    tpu.vector_store %arg9[%c32, %c0_11], %14 {strides = array<i32>} : memref<320x128xbf16, #tpu.memory_space<vmem>>, vector<256x128xbf16>,
    %c0_12 = arith.constant 0 : index
    %c0_13 = arith.constant 0 : index
    %16 = vector.load %arg3[%c0_12, %c0_13] : memref<1x128xf32, #tpu.memory_space<vmem>>, vector<1x128xf32>
    %c0_14 = arith.constant 0 : index
    %c0_15 = arith.constant 0 : index
    %17 = vector.load %arg4[%c0_14, %c0_15] : memref<1x128xf32, #tpu.memory_space<vmem>>, vector<1x128xf32>
    %c15 = arith.constant 15 : index
    %c0_16 = arith.constant 0 : index
    %18 = vector.load %arg9[%c15, %c0_16] : memref<320x128xbf16, #tpu.memory_space<vmem>>, vector<288x128xbf16>
    %c16 = arith.constant 16 : index
    %c0_17 = arith.constant 0 : index
    %19 = vector.load %arg9[%c16, %c0_17] : memref<320x128xbf16, #tpu.memory_space<vmem>>, vector<288x128xbf16>
    %c17 = arith.constant 17 : index
    %c0_18 = arith.constant 0 : index
    %20 = vector.load %arg9[%c17, %c0_18] : memref<320x128xbf16, #tpu.memory_space<vmem>>, vector<288x128xbf16>
    %cst_19 = arith.constant 0.000000e+00 : bf16
    %21 = vector.shape_cast %10 : vector<288x1xi1> to vector<288x1xi1>
    %22 = vector.broadcast %21 : vector<288x1xi1> to vector<288x128xi1>
    %23 = vector.broadcast %cst_19 : bf16 to vector<288x128xbf16>
    %24 = arith.select %22, %18, %23 : vector<288x128xi1>, vector<288x128xbf16>
    %c0_20 = arith.constant 0 : index
    %c0_21 = arith.constant 0 : index
    %25 = vector.load %arg10[%c0_20, %c0_21] : memref<288x384xbf16, #tpu.memory_space<vmem>>, vector<288x128xbf16>
    tpu.vector_store %arg10[%c0_20, %c0_21], %24 {strides = array<i32>} : memref<288x384xbf16, #tpu.memory_space<vmem>>, vector<288x128xbf16>,
    %c0_22 = arith.constant 0 : index
    %c128 = arith.constant 128 : index
    %26 = vector.load %arg10[%c0_22, %c128] : memref<288x384xbf16, #tpu.memory_space<vmem>>, vector<288x128xbf16>
    tpu.vector_store %arg10[%c0_22, %c128], %19 {strides = array<i32>} : memref<288x384xbf16, #tpu.memory_space<vmem>>, vector<288x128xbf16>,
    %cst_23 = arith.constant 0.000000e+00 : bf16
    %27 = vector.shape_cast %12 : vector<288x1xi1> to vector<288x1xi1>
    %28 = vector.broadcast %27 : vector<288x1xi1> to vector<288x128xi1>
    %29 = vector.broadcast %cst_23 : bf16 to vector<288x128xbf16>
    %30 = arith.select %28, %20, %29 : vector<288x128xi1>, vector<288x128xbf16>
    %c0_24 = arith.constant 0 : index
    %c256 = arith.constant 256 : index
    %31 = vector.load %arg10[%c0_24, %c256] : memref<288x384xbf16, #tpu.memory_space<vmem>>, vector<288x128xbf16>
    tpu.vector_store %arg10[%c0_24, %c256], %30 {strides = array<i32>} : memref<288x384xbf16, #tpu.memory_space<vmem>>, vector<288x128xbf16>,
    %c0_25 = arith.constant 0 : index
    %c0_26 = arith.constant 0 : index
    %32 = vector.load %arg10[%c0_25, %c0_26] : memref<288x384xbf16, #tpu.memory_space<vmem>>, vector<256x384xbf16>
    %c0_27 = arith.constant 0 : index
    %c0_28 = arith.constant 0 : index
    %c0_29 = arith.constant 0 : index
    %33 = vector.load %arg2[%c0_27, %c0_28, %c0_29] : memref<3x384x128xbf16, #tpu.memory_space<vmem>>, vector<1x384x128xbf16>
    %34 = vector.shape_cast %33 : vector<1x384x128xbf16> to vector<384x128xbf16>
    %cst_30 = arith.constant dense<0.000000e+00> : vector<256x128xf32>
    %35 = tpu.matmul %32, %34, %cst_30 {dimension_numbers = #tpu.dot_dimension_numbers<[1], [0], [0], [1], [0, 0, 1, 1], [], []>} : vector<256x384xbf16>, vector<384x128xbf16>, vector<256x128xf32> -> vector<256x128xf32>
    %c16_31 = arith.constant 16 : index
    %c0_32 = arith.constant 0 : index
    %36 = vector.load %arg10[%c16_31, %c0_32] : memref<288x384xbf16, #tpu.memory_space<vmem>>, vector<256x384xbf16>
    %c1 = arith.constant 1 : index
    %c0_33 = arith.constant 0 : index
    %c0_34 = arith.constant 0 : index
    %37 = vector.load %arg2[%c1, %c0_33, %c0_34] : memref<3x384x128xbf16, #tpu.memory_space<vmem>>, vector<1x384x128xbf16>
    %38 = vector.shape_cast %37 : vector<1x384x128xbf16> to vector<384x128xbf16>
    %cst_35 = arith.constant dense<0.000000e+00> : vector<256x128xf32>
    %39 = tpu.matmul %36, %38, %cst_35 {dimension_numbers = #tpu.dot_dimension_numbers<[1], [0], [0], [1], [0, 0, 1, 1], [], []>} : vector<256x384xbf16>, vector<384x128xbf16>, vector<256x128xf32> -> vector<256x128xf32>
    %40 = arith.addf %35, %39 : vector<256x128xf32>
    %c32_36 = arith.constant 32 : index
    %c0_37 = arith.constant 0 : index
    %41 = vector.load %arg10[%c32_36, %c0_37] : memref<288x384xbf16, #tpu.memory_space<vmem>>, vector<256x384xbf16>
    %c2 = arith.constant 2 : index
    %c0_38 = arith.constant 0 : index
    %c0_39 = arith.constant 0 : index
    %42 = vector.load %arg2[%c2, %c0_38, %c0_39] : memref<3x384x128xbf16, #tpu.memory_space<vmem>>, vector<1x384x128xbf16>
    %43 = vector.shape_cast %42 : vector<1x384x128xbf16> to vector<384x128xbf16>
    %cst_40 = arith.constant dense<0.000000e+00> : vector<256x128xf32>
    %44 = tpu.matmul %41, %43, %cst_40 {dimension_numbers = #tpu.dot_dimension_numbers<[1], [0], [0], [1], [0, 0, 1, 1], [], []>} : vector<256x384xbf16>, vector<384x128xbf16>, vector<256x128xf32> -> vector<256x128xf32>
    %45 = arith.addf %40, %44 : vector<256x128xf32>
    %46 = vector.broadcast %16 : vector<1x128xf32> to vector<256x128xf32>
    %47 = arith.mulf %45, %46 : vector<256x128xf32>
    %48 = vector.broadcast %17 : vector<1x128xf32> to vector<256x128xf32>
    %49 = arith.addf %47, %48 : vector<256x128xf32>
    %cst_41 = arith.constant 0.000000e+00 : f32
    %50 = vector.broadcast %cst_41 : f32 to vector<256x128xf32>
    %51 = arith.maximumf %49, %50 : vector<256x128xf32>
    %52 = arith.truncf %51 : vector<256x128xf32> to vector<256x128xbf16>
    %c32_42 = arith.constant 32 : index
    %c0_43 = arith.constant 0 : index
    %53 = vector.load %arg11[%c32_42, %c0_43] : memref<320x128xbf16, #tpu.memory_space<vmem>>, vector<256x128xbf16>
    tpu.vector_store %arg11[%c32_42, %c0_43], %52 {strides = array<i32>} : memref<320x128xbf16, #tpu.memory_space<vmem>>, vector<256x128xbf16>,
    %c0_44 = arith.constant 0 : index
    %c0_45 = arith.constant 0 : index
    %54 = vector.load %arg6[%c0_44, %c0_45] : memref<1x128xf32, #tpu.memory_space<vmem>>, vector<1x128xf32>
    %c0_46 = arith.constant 0 : index
    %c0_47 = arith.constant 0 : index
    %55 = vector.load %arg7[%c0_46, %c0_47] : memref<1x128xf32, #tpu.memory_space<vmem>>, vector<1x128xf32>
    %c15_48 = arith.constant 15 : index
    %c0_49 = arith.constant 0 : index
    %56 = vector.load %arg11[%c15_48, %c0_49] : memref<320x128xbf16, #tpu.memory_space<vmem>>, vector<288x128xbf16>
    %c16_50 = arith.constant 16 : index
    %c0_51 = arith.constant 0 : index
    %57 = vector.load %arg11[%c16_50, %c0_51] : memref<320x128xbf16, #tpu.memory_space<vmem>>, vector<288x128xbf16>
    %c17_52 = arith.constant 17 : index
    %c0_53 = arith.constant 0 : index
    %58 = vector.load %arg11[%c17_52, %c0_53] : memref<320x128xbf16, #tpu.memory_space<vmem>>, vector<288x128xbf16>
    %cst_54 = arith.constant 0.000000e+00 : bf16
    %59 = vector.shape_cast %10 : vector<288x1xi1> to vector<288x1xi1>
    %60 = vector.broadcast %59 : vector<288x1xi1> to vector<288x128xi1>
    %61 = vector.broadcast %cst_54 : bf16 to vector<288x128xbf16>
    %62 = arith.select %60, %56, %61 : vector<288x128xi1>, vector<288x128xbf16>
    %c0_55 = arith.constant 0 : index
    %c0_56 = arith.constant 0 : index
    %63 = vector.load %arg12[%c0_55, %c0_56] : memref<288x384xbf16, #tpu.memory_space<vmem>>, vector<288x128xbf16>
    tpu.vector_store %arg12[%c0_55, %c0_56], %62 {strides = array<i32>} : memref<288x384xbf16, #tpu.memory_space<vmem>>, vector<288x128xbf16>,
    %c0_57 = arith.constant 0 : index
    %c128_58 = arith.constant 128 : index
    %64 = vector.load %arg12[%c0_57, %c128_58] : memref<288x384xbf16, #tpu.memory_space<vmem>>, vector<288x128xbf16>
    tpu.vector_store %arg12[%c0_57, %c128_58], %57 {strides = array<i32>} : memref<288x384xbf16, #tpu.memory_space<vmem>>, vector<288x128xbf16>,
    %cst_59 = arith.constant 0.000000e+00 : bf16
    %65 = vector.shape_cast %12 : vector<288x1xi1> to vector<288x1xi1>
    %66 = vector.broadcast %65 : vector<288x1xi1> to vector<288x128xi1>
    %67 = vector.broadcast %cst_59 : bf16 to vector<288x128xbf16>
    %68 = arith.select %66, %58, %67 : vector<288x128xi1>, vector<288x128xbf16>
    %c0_60 = arith.constant 0 : index
    %c256_61 = arith.constant 256 : index
    %69 = vector.load %arg12[%c0_60, %c256_61] : memref<288x384xbf16, #tpu.memory_space<vmem>>, vector<288x128xbf16>
    tpu.vector_store %arg12[%c0_60, %c256_61], %68 {strides = array<i32>} : memref<288x384xbf16, #tpu.memory_space<vmem>>, vector<288x128xbf16>,
    %c0_62 = arith.constant 0 : index
    %c0_63 = arith.constant 0 : index
    %70 = vector.load %arg12[%c0_62, %c0_63] : memref<288x384xbf16, #tpu.memory_space<vmem>>, vector<256x384xbf16>
    %c0_64 = arith.constant 0 : index
    %c0_65 = arith.constant 0 : index
    %c0_66 = arith.constant 0 : index
    %71 = vector.load %arg5[%c0_64, %c0_65, %c0_66] : memref<3x384x128xbf16, #tpu.memory_space<vmem>>, vector<1x384x128xbf16>
    %72 = vector.shape_cast %71 : vector<1x384x128xbf16> to vector<384x128xbf16>
    %cst_67 = arith.constant dense<0.000000e+00> : vector<256x128xf32>
    %73 = tpu.matmul %70, %72, %cst_67 {dimension_numbers = #tpu.dot_dimension_numbers<[1], [0], [0], [1], [0, 0, 1, 1], [], []>} : vector<256x384xbf16>, vector<384x128xbf16>, vector<256x128xf32> -> vector<256x128xf32>
    %c16_68 = arith.constant 16 : index
    %c0_69 = arith.constant 0 : index
    %74 = vector.load %arg12[%c16_68, %c0_69] : memref<288x384xbf16, #tpu.memory_space<vmem>>, vector<256x384xbf16>
    %c1_70 = arith.constant 1 : index
    %c0_71 = arith.constant 0 : index
    %c0_72 = arith.constant 0 : index
    %75 = vector.load %arg5[%c1_70, %c0_71, %c0_72] : memref<3x384x128xbf16, #tpu.memory_space<vmem>>, vector<1x384x128xbf16>
    %76 = vector.shape_cast %75 : vector<1x384x128xbf16> to vector<384x128xbf16>
    %cst_73 = arith.constant dense<0.000000e+00> : vector<256x128xf32>
    %77 = tpu.matmul %74, %76, %cst_73 {dimension_numbers = #tpu.dot_dimension_numbers<[1], [0], [0], [1], [0, 0, 1, 1], [], []>} : vector<256x384xbf16>, vector<384x128xbf16>, vector<256x128xf32> -> vector<256x128xf32>
    %78 = arith.addf %73, %77 : vector<256x128xf32>
    %c32_74 = arith.constant 32 : index
    %c0_75 = arith.constant 0 : index
    %79 = vector.load %arg12[%c32_74, %c0_75] : memref<288x384xbf16, #tpu.memory_space<vmem>>, vector<256x384xbf16>
    %c2_76 = arith.constant 2 : index
    %c0_77 = arith.constant 0 : index
    %c0_78 = arith.constant 0 : index
    %80 = vector.load %arg5[%c2_76, %c0_77, %c0_78] : memref<3x384x128xbf16, #tpu.memory_space<vmem>>, vector<1x384x128xbf16>
    %81 = vector.shape_cast %80 : vector<1x384x128xbf16> to vector<384x128xbf16>
    %cst_79 = arith.constant dense<0.000000e+00> : vector<256x128xf32>
    %82 = tpu.matmul %79, %81, %cst_79 {dimension_numbers = #tpu.dot_dimension_numbers<[1], [0], [0], [1], [0, 0, 1, 1], [], []>} : vector<256x384xbf16>, vector<384x128xbf16>, vector<256x128xf32> -> vector<256x128xf32>
    %83 = arith.addf %78, %82 : vector<256x128xf32>
    %84 = vector.broadcast %54 : vector<1x128xf32> to vector<256x128xf32>
    %85 = arith.mulf %83, %84 : vector<256x128xf32>
    %86 = vector.broadcast %55 : vector<1x128xf32> to vector<256x128xf32>
    %87 = arith.addf %85, %86 : vector<256x128xf32>
    %cst_80 = arith.constant 0.000000e+00 : f32
    %88 = vector.broadcast %cst_80 : f32 to vector<256x128xf32>
    %89 = arith.maximumf %87, %88 : vector<256x128xf32>
    %c0_81 = arith.constant 0 : index
    %c0_82 = arith.constant 0 : index
    %c0_83 = arith.constant 0 : index
    %90 = vector.load %arg8[%c0_81, %c0_82, %c0_83] : memref<1x256x128xf32, #tpu.memory_space<vmem>>, vector<1x256x128xf32>
    %91 = vector.shape_cast %90 : vector<1x256x128xf32> to vector<256x128xf32>
    %92 = vector.shape_cast %89 : vector<256x128xf32> to vector<1x256x128xf32>
    tpu.vector_store %arg8[%c0_81, %c0_82, %c0_83], %92 {strides = array<i32>} : memref<1x256x128xf32, #tpu.memory_space<vmem>>, vector<1x256x128xf32>,
    return
  }
  func.func @transform_0(%arg0: i32) -> (i32, i32, i32) {
    %c0_i32 = arith.constant 0 : i32
    %c0_i32_0 = arith.constant 0 : i32
    %c0_i32_1 = arith.constant 0 : i32
    return %arg0, %c0_i32, %c0_i32_0 : i32, i32, i32
  }
  func.func @transform_1(%arg0: i32) -> (i32, i32, i32) {
    %c0_i32 = arith.constant 0 : i32
    %c0_i32_0 = arith.constant 0 : i32
    %c0_i32_1 = arith.constant 0 : i32
    %c0_i32_2 = arith.constant 0 : i32
    return %c0_i32, %c0_i32_0, %c0_i32_1 : i32, i32, i32
  }
  func.func @transform_2(%arg0: i32) -> (i32, i32) {
    %c0_i32 = arith.constant 0 : i32
    %c0_i32_0 = arith.constant 0 : i32
    %c0_i32_1 = arith.constant 0 : i32
    return %c0_i32, %c0_i32_0 : i32, i32
  }
  func.func @transform_3(%arg0: i32) -> (i32, i32) {
    %c0_i32 = arith.constant 0 : i32
    %c0_i32_0 = arith.constant 0 : i32
    %c0_i32_1 = arith.constant 0 : i32
    return %c0_i32, %c0_i32_0 : i32, i32
  }
  func.func @transform_4(%arg0: i32) -> (i32, i32, i32) {
    %c0_i32 = arith.constant 0 : i32
    %c0_i32_0 = arith.constant 0 : i32
    %c0_i32_1 = arith.constant 0 : i32
    %c0_i32_2 = arith.constant 0 : i32
    return %c0_i32, %c0_i32_0, %c0_i32_1 : i32, i32, i32
  }
  func.func @transform_5(%arg0: i32) -> (i32, i32) {
    %c0_i32 = arith.constant 0 : i32
    %c0_i32_0 = arith.constant 0 : i32
    %c0_i32_1 = arith.constant 0 : i32
    return %c0_i32, %c0_i32_0 : i32, i32
  }
  func.func @transform_6(%arg0: i32) -> (i32, i32) {
    %c0_i32 = arith.constant 0 : i32
    %c0_i32_0 = arith.constant 0 : i32
    %c0_i32_1 = arith.constant 0 : i32
    return %c0_i32, %c0_i32_0 : i32, i32
  }
  func.func @transform_7(%arg0: i32) -> (i32, i32, i32) {
    %c0_i32 = arith.constant 0 : i32
    %c0_i32_0 = arith.constant 0 : i32
    %c0_i32_1 = arith.constant 0 : i32
    return %arg0, %c0_i32, %c0_i32_0 : i32, i32, i32
  }
}

</mosaic_0001>

<llo_original>
// kernel: bridge_forward.1
$region0: #{bridge_forward.1}
  #allocation0 [shape = 'u32[]', space=smem, size = 0x4, offset = 0x4, fixed_abs, tag = 'smem constant byte address 0x4 - core index']
  #allocation1 [shape = 'u32[144,128]{1,0:T(1,128)}', space=vmem, size = 0x12000, scoped, tag = 'internal scratch']
  #allocation2 [shape = 'bf16[320,128]{1,0:T(16,128)(2,1)}', space=vmem, size = 0x14000, scoped, tag = 'scratch operand']
  #allocation3 [shape = 'bf16[288,384]{1,0:T(16,128)(2,1)}', space=vmem, size = 0x36000, scoped, tag = 'scratch operand']
  #allocation4 [shape = 'bf16[320,128]{1,0:T(16,128)(2,1)}', space=vmem, size = 0x14000, scoped, tag = 'scratch operand']
  #allocation5 [shape = 'bf16[288,384]{1,0:T(16,128)(2,1)}', space=vmem, size = 0x36000, scoped, tag = 'scratch operand']
  %s0 = inlined_call_operand.vmem [shape: bf16[2,256,128], index: 0, kind: input, shape index: {}]
  %s1 = inlined_call_operand.vmem [shape: bf16[3,384,128], index: 1, kind: input, shape index: {}]
  %s2 = inlined_call_operand.vmem [shape: f32[1,128], index: 2, kind: input, shape index: {}]
  %s3 = inlined_call_operand.vmem [shape: f32[1,128], index: 3, kind: input, shape index: {}]
  %s4 = inlined_call_operand.vmem [shape: bf16[3,384,128], index: 4, kind: input, shape index: {}]
  %s5 = inlined_call_operand.vmem [shape: f32[1,128], index: 5, kind: input, shape index: {}]
  %s6 = inlined_call_operand.vmem [shape: f32[1,128], index: 6, kind: input, shape index: {}]
  %s7 = inlined_call_operand.hbm [shape: f32[2,256,128], index: 7, kind: output, shape index: {}]
  %s8 = sld [smem:[#allocation0]]
  $region61: #{bridge_forward.1} parent=0
    _
  %s10 = ssub.s32 1, %s8
  %s11 = scalar_select 0, %s10, %s8
  $region1: #{bridge_forward.1} parent=0
    #allocation6 [shape = 'u8[262144]{0}', space=vmem, size = 0x40000, scoped, tag = 'output window, operand 0']
    #allocation7 [shape = 's32[2]{0}', space=sflag, size = 0x8, scoped, tag = 'scoped memory for bridge_forward.1']
    %12 = vsyncpa [#allocation7], 0
    %s13 = scalar_lea.sflag [#allocation7], 1
    %14 = vsyncpa %s13, 0
    loop: start=0, step=1, limit=4
    $region2: #{bridge_forward.1} parent=1 // loop_pre_header
      _
    $region3: #{bridge_forward.1} parent=1 // loop_header
      %s16 = sphi 0, %s20
      %p17 = scmp.ge.s32.totalorder %s16, 4
      %s26 = sphi 0, %s28
      %s29 = sphi 0, %s26
      %s30 = sphi 0, %s29
      %s46 = sphi 0, %s30
      %s50 = sphi 0, %s50
      %s52 = sphi 0, %s50
      %s53 = sphi 0, %s52
      %s67 = sphi 0, %s53
      %s71 = sphi 0, %s71
      %s73 = sphi 0, %s71
      %s74 = sphi 0, %s73
      %s88 = sphi 0, %s74
      %s92 = sphi 0, %s92
      %s94 = sphi 0, %s92
      %s95 = sphi 0, %s94
      %s109 = sphi 0, %s95
      %s113 = sphi 0, %s113
      %s115 = sphi 0, %s113
      %s116 = sphi 0, %s115
      %s130 = sphi 0, %s116
      %s134 = sphi 0, %s134
      %s136 = sphi 0, %s134
      %s137 = sphi 0, %s136
      %s151 = sphi 0, %s137
      %s155 = sphi 0, %s155
      %s157 = sphi 0, %s155
      %s158 = sphi 0, %s157
      %s172 = sphi 0, %s158
      %s178 = sphi 0, %s180
      %s181 = sphi 0, %s178
      %s182 = sphi 0, %s181
      %s198 = sphi 0, %s182
    $region4: #{bridge_forward.1} parent=1 // loop_header_branch
      %19 = sbr.rel (%p17) target = $region8
    $region5: #{bridge_forward.1} parent=1 // loop_body
      %s21 = ssub.s32 %s16, 1
      %s22 = ssub.s32 %s16, 2
      %s23 = sadd.s32 %s16, 1
      %s24 = ssub.s32 %s16, %s23
      %p25 = scmp.eq.s32.totalorder %s24, 0
      %s27 = sadd.s32 %s26, 1
      %s28 = scalar_select %p25, %s26, %s27
      %p31 = pneg %p25
      %p32 = scmp.eq.s32.totalorder %s16, 1
      %p33 = por %p31, %p32
      %p34 = scmp.ne.s32.totalorder %s26, %s29
      %p35 = scmp.eq.s32.totalorder %s16, 0
      %p36 = por %p34, %p35
      %p37 = scmp.ne.s32.totalorder %s26, %s29
      %p38 = scmp.eq.s32.totalorder %s21, 1
      %p39 = por %p37, %p38
      %p40 = scmp.ne.s32.totalorder %s29, %s30
      %p41 = scmp.eq.s32.totalorder %s21, 0
      %p42 = por %p40, %p41
      %p43 = scmp.ne.s32.totalorder %s29, %s30
      %p44 = scmp.eq.s32.totalorder %s22, 1
      %p45 = por %p43, %p44
      %p47 = scmp.ne.s32.totalorder %s30, %s46
      %p48 = scmp.eq.s32.totalorder %s22, 0
      %p49 = por %p47, %p48
      %s51 = sadd.s32 %s50, 1
      %p54 = scmp.eq.s32.totalorder %s16, 1
      %p55 = scmp.ne.s32.totalorder %s50, %s52
      %p56 = scmp.eq.s32.totalorder %s16, 0
      %p57 = por %p55, %p56
      %p58 = scmp.ne.s32.totalorder %s50, %s52
      %p59 = scmp.eq.s32.totalorder %s21, 1
      %p60 = por %p58, %p59
      %p61 = scmp.ne.s32.totalorder %s52, %s53
      %p62 = scmp.eq.s32.totalorder %s21, 0
      %p63 = por %p61, %p62
      %p64 = scmp.ne.s32.totalorder %s52, %s53
      %p65 = scmp.eq.s32.totalorder %s22, 1
      %p66 = por %p64, %p65
      %p68 = scmp.ne.s32.totalorder %s53, %s67
      %p69 = scmp.eq.s32.totalorder %s22, 0
      %p70 = por %p68, %p69
      %s72 = sadd.s32 %s71, 1
      %p75 = scmp.eq.s32.totalorder %s16, 1
      %p76 = scmp.ne.s32.totalorder %s71, %s73
      %p77 = scmp.eq.s32.totalorder %s16, 0
      %p78 = por %p76, %p77
      %p79 = scmp.ne.s32.totalorder %s71, %s73
      %p80 = scmp.eq.s32.totalorder %s21, 1
      %p81 = por %p79, %p80
      %p82 = scmp.ne.s32.totalorder %s73, %s74
      %p83 = scmp.eq.s32.totalorder %s21, 0
      %p84 = por %p82, %p83
      %p85 = scmp.ne.s32.totalorder %s73, %s74
      %p86 = scmp.eq.s32.totalorder %s22, 1
      %p87 = por %p85, %p86
      %p89 = scmp.ne.s32.totalorder %s74, %s88
      %p90 = scmp.eq.s32.totalorder %s22, 0
      %p91 = por %p89, %p90
      %s93 = sadd.s32 %s92, 1
      %p96 = scmp.eq.s32.totalorder %s16, 1
      %p97 = scmp.ne.s32.totalorder %s92, %s94
      %p98 = scmp.eq.s32.totalorder %s16, 0
      %p99 = por %p97, %p98
      %p100 = scmp.ne.s32.totalorder %s92, %s94
      %p101 = scmp.eq.s32.totalorder %s21, 1
      %p102 = por %p100, %p101
      %p103 = scmp.ne.s32.totalorder %s94, %s95
      %p104 = scmp.eq.s32.totalorder %s21, 0
      %p105 = por %p103, %p104
      %p106 = scmp.ne.s32.totalorder %s94, %s95
      %p107 = scmp.eq.s32.totalorder %s22, 1
      %p108 = por %p106, %p107
      %p110 = scmp.ne.s32.totalorder %s95, %s109
      %p111 = scmp.eq.s32.totalorder %s22, 0
      %p112 = por %p110, %p111
      %s114 = sadd.s32 %s113, 1
      %p117 = scmp.eq.s32.totalorder %s16, 1
      %p118 = scmp.ne.s32.totalorder %s113, %s115
      %p119 = scmp.eq.s32.totalorder %s16, 0
      %p120 = por %p118, %p119
      %p121 = scmp.ne.s32.totalorder %s113, %s115
      %p122 = scmp.eq.s32.totalorder %s21, 1
      %p123 = por %p121, %p122
      %p124 = scmp.ne.s32.totalorder %s115, %s116
      %p125 = scmp.eq.s32.totalorder %s21, 0
      %p126 = por %p124, %p125
      %p127 = scmp.ne.s32.totalorder %s115, %s116
      %p128 = scmp.eq.s32.totalorder %s22, 1
      %p129 = por %p127, %p128
      %p131 = scmp.ne.s32.totalorder %s116, %s130
      %p132 = scmp.eq.s32.totalorder %s22, 0
      %p133 = por %p131, %p132
      %s135 = sadd.s32 %s134, 1
      %p138 = scmp.eq.s32.totalorder %s16, 1
      %p139 = scmp.ne.s32.totalorder %s134, %s136
      %p140 = scmp.eq.s32.totalorder %s16, 0
      %p141 = por %p139, %p140
      %p142 = scmp.ne.s32.totalorder %s134, %s136
      %p143 = scmp.eq.s32.totalorder %s21, 1
      %p144 = por %p142, %p143
      %p145 = scmp.ne.s32.totalorder %s136, %s137
      %p146 = scmp.eq.s32.totalorder %s21, 0
      %p147 = por %p145, %p146
      %p148 = scmp.ne.s32.totalorder %s136, %s137
      %p149 = scmp.eq.s32.totalorder %s22, 1
      %p150 = por %p148, %p149
      %p152 = scmp.ne.s32.totalorder %s137, %s151
      %p153 = scmp.eq.s32.totalorder %s22, 0
      %p154 = por %p152, %p153
      %s156 = sadd.s32 %s155, 1
      %p159 = scmp.eq.s32.totalorder %s16, 1
      %p160 = scmp.ne.s32.totalorder %s155, %s157
      %p161 = scmp.eq.s32.totalorder %s16, 0
      %p162 = por %p160, %p161
      %p163 = scmp.ne.s32.totalorder %s155, %s157
      %p164 = scmp.eq.s32.totalorder %s21, 1
      %p165 = por %p163, %p164
      %p166 = scmp.ne.s32.totalorder %s157, %s158
      %p167 = scmp.eq.s32.totalorder %s21, 0
      %p168 = por %p166, %p167
      %p169 = scmp.ne.s32.totalorder %s157, %s158
      %p170 = scmp.eq.s32.totalorder %s22, 1
      %p171 = por %p169, %p170
      %p173 = scmp.ne.s32.totalorder %s158, %s172
      %p174 = scmp.eq.s32.totalorder %s22, 0
      %p175 = por %p173, %p174
      %s176 = ssub.s32 %s16, %s23
      %p177 = scmp.eq.s32.totalorder %s176, 0
      %s179 = sadd.s32 %s178, 1
      %s180 = scalar_select %p177, %s178, %s179
      %p183 = pneg %p177
      %p184 = scmp.eq.s32.totalorder %s16, 1
      %p185 = por %p183, %p184
      %p186 = scmp.ne.s32.totalorder %s178, %s181
      %p187 = scmp.eq.s32.totalorder %s16, 0
      %p188 = por %p186, %p187
      %p189 = scmp.ne.s32.totalorder %s178, %s181
      %p190 = scmp.eq.s32.totalorder %s21, 1
      %p191 = por %p189, %p190
      %p192 = scmp.ne.s32.totalorder %s181, %s182
      %p193 = scmp.eq.s32.totalorder %s21, 0
      %p194 = por %p192, %p193
      %p195 = scmp.ne.s32.totalorder %s181, %s182
      %p196 = scmp.eq.s32.totalorder %s22, 1
      %p197 = por %p195, %p196
      %p199 = scmp.ne.s32.totalorder %s182, %s198
      %p200 = scmp.eq.s32.totalorder %s22, 0
      %p201 = por %p199, %p200
      %p202 = scmp.le.s32.totalorder 1, %s16
      %p203 = scmp.lt.s32.totalorder %s16, 3
      %p204 = pnand %p202, %p203
      %p205 = pneg %p204
      // Predicated region
      $region9: #{bridge_forward.1} parent=5 // pred_check
        _
      $region10: #{bridge_forward.1} parent=5 // pred_check_branch
        %207 = sbr.rel (%p204) target = $region12
      $region11: #{bridge_forward.1} parent=5 // pred_region
        %s208 = ssub.s32 %s16, 1
        // Predicated region
        $region13: #{bridge_forward.1} parent=11 // pred_check
          %p209 = pneg %p63
        $region14: #{bridge_forward.1} parent=11 // pred_check_branch
          %211 = sbr.rel (%p209) target = $region16
        $region15: #{bridge_forward.1} parent=11 // pred_region
          _
        $region16: #{bridge_forward.1} parent=11 // pred_fallthru
          _
        // Predicated region
        $region17: #{bridge_forward.1} parent=11 // pred_check
          %p212 = pneg %p84
        $region18: #{bridge_forward.1} parent=11 // pred_check_branch
          %214 = sbr.rel (%p212) target = $region20
        $region19: #{bridge_forward.1} parent=11 // pred_region
          _
        $region20: #{bridge_forward.1} parent=11 // pred_fallthru
          _
        // Predicated region
        $region21: #{bridge_forward.1} parent=11 // pred_check
          %p215 = pneg %p105
        $region22: #{bridge_forward.1} parent=11 // pred_check_branch
          %217 = sbr.rel (%p215) target = $region24
        $region23: #{bridge_forward.1} parent=11 // pred_region
          _
        $region24: #{bridge_forward.1} parent=11 // pred_fallthru
          _
        // Predicated region
        $region25: #{bridge_forward.1} parent=11 // pred_check
          %p218 = pneg %p126
        $region26: #{bridge_forward.1} parent=11 // pred_check_branch
          %220 = sbr.rel (%p218) target = $region28
        $region27: #{bridge_forward.1} parent=11 // pred_region
          _
        $region28: #{bridge_forward.1} parent=11 // pred_fallthru
          _
        // Predicated region
        $region29: #{bridge_forward.1} parent=11 // pred_check
          %p221 = pneg %p147
        $region30: #{bridge_forward.1} parent=11 // pred_check_branch
          %223 = sbr.rel (%p221) target = $region32
        $region31: #{bridge_forward.1} parent=11 // pred_region
          _
        $region32: #{bridge_forward.1} parent=11 // pred_fallthru
          _
        // Predicated region
        $region33: #{bridge_forward.1} parent=11 // pred_check
          %p224 = pneg %p168
        $region34: #{bridge_forward.1} parent=11 // pred_check_branch
          %226 = sbr.rel (%p224) target = $region36
        $region35: #{bridge_forward.1} parent=11 // pred_region
          _
        $region36: #{bridge_forward.1} parent=11 // pred_fallthru
          _
      $region12: #{bridge_forward.1} parent=5 // pred_fallthru
        _
      %p227 = scmp.lt.s32.totalorder %s16, 2
      // Predicated region
      $region37: #{bridge_forward.1} parent=5 // pred_check
        %p228 = pneg %p227
      $region38: #{bridge_forward.1} parent=5 // pred_check_branch
        %230 = sbr.rel (%p228) target = $region40
      $region39: #{bridge_forward.1} parent=5 // pred_region
        // Predicated region
        $region41: #{bridge_forward.1} parent=39 // pred_check
          %p231 = pneg %p36
        $region42: #{bridge_forward.1} parent=39 // pred_check_branch
          %233 = sbr.rel (%p231) target = $region44
        $region43: #{bridge_forward.1} parent=39 // pred_region
          %p234 = scmp.lt.s32.totalorder %s16, 1
          %s235 = scalar_select %p234, %s16, 1
          %s236 = smul.addr %s235, 32
          %s237 = smul.addr %s236, 4
          %s238 = scalar_lea.vmem %s0, %s237
        $region44: #{bridge_forward.1} parent=39 // pred_fallthru
          _
      $region40: #{bridge_forward.1} parent=5 // pred_fallthru
        _
      %p239 = scmp.le.s32.totalorder 1, %s16
      %p240 = scmp.lt.s32.totalorder %s16, 3
      %p241 = pnand %p239, %p240
      %p242 = pneg %p241
      // Predicated region
      $region45: #{bridge_forward.1} parent=5 // pred_check
        _
      $region46: #{bridge_forward.1} parent=5 // pred_check_branch
        %244 = sbr.rel (%p241) target = $region48
      $region47: #{bridge_forward.1} parent=5 // pred_region
        %s245 = ssub.s32 %s16, 1
        %p246 = scmp.lt.s32.totalorder %s21, 1
        %s247 = scalar_select %p246, %s21, 1
        %s248 = smul.addr %s247, 32
        %s249 = smul.addr %s248, 4
        %s250 = scalar_lea.vmem %s0, %s249
        %p251 = pneg %p42
        %p252 = pneg %p39
        %p253 = pneg %p63
        %p254 = pneg %p60
        %p255 = pneg %p84
        %p256 = pneg %p81
        %p257 = pneg %p105
        %p258 = pneg %p102
        %p259 = pneg %p126
        %p260 = pneg %p123
        %p261 = pneg %p147
        %p262 = pneg %p144
        %p263 = pneg %p168
        %p264 = pneg %p165
        %p265 = pneg %p194
        %p266 = pneg %p191
        %s267 = sand.u32 %s181, 1
        %s268 = scalar_lea.sflag [#allocation7], %s267
        %s269 = sand.u32 %s181, 1
        %s270 = smul.addr %s269, 256
        %s271 = scalar_lea.vmem [#allocation6], %s270
        %p272 = scmp.lt.s32.totalorder %s21, 1
        %s273 = scalar_select %p272, %s21, 1
        %s274 = smul.addr %s273, 32
        %s275 = smul.addr %s274, 4
        %s276 = scalar_lea.vmem %s0, %s275
        %280 = vst [vmem:[#allocation2] sm:$0xff] 0
        %281 = vst [vmem:[#allocation2 + $0x8] sm:$0xff] 0
        %282 = vst [vmem:[#allocation2 + $0x90] sm:$0xff] 0
        %283 = vst [vmem:[#allocation2 + $0x98] sm:$0xff] 0
        %284 = vst [vmem:[#allocation4] sm:$0xff] 0
        %285 = vst [vmem:[#allocation4 + $0x8] sm:$0xff] 0
        %286 = vst [vmem:[#allocation4 + $0x90] sm:$0xff] 0
        %287 = vst [vmem:[#allocation4 + $0x98] sm:$0xff] 0
        %v288 = vlaneseq
        %v289 = vshrl.u32 %v288, 7
        %v290 = vadd.s32 %v289, 8
        %v291 = vadd.s32 %v289, 16
        %v292 = vadd.s32 %v289, 24
        %v293 = vadd.s32 %v289, 32
        %v294 = vadd.s32 %v289, 40
        %v295 = vadd.s32 %v289, 48
        %v296 = vadd.s32 %v289, 56
        %v297 = vadd.s32 %v289, 64
        %v298 = vadd.s32 %v289, 72
        %v299 = vadd.s32 %v289, 80
        %v300 = vadd.s32 %v289, 88
        %v301 = vadd.s32 %v289, 96
        %v302 = vadd.s32 %v289, 104
        %v303 = vadd.s32 %v289, 112
        %v304 = vadd.s32 %v289, 120
        %v305 = vadd.s32 %v289, 128
        %v306 = vadd.s32 %v289, 136
        %v307 = vadd.s32 %v289, 144
        %v308 = vadd.s32 %v289, 152
        %v309 = vadd.s32 %v289, 160
        %v310 = vadd.s32 %v289, 168
        %v311 = vadd.s32 %v289, 176
        %v312 = vadd.s32 %v289, 184
        %v313 = vadd.s32 %v289, 192
        %v314 = vadd.s32 %v289, 200
        %v315 = vadd.s32 %v289, 208
        %v316 = vadd.s32 %v289, 216
        %v317 = vadd.s32 %v289, 224
        %v318 = vadd.s32 %v289, 232
        %v319 = vadd.s32 %v289, 240
        %v320 = vadd.s32 %v289, 248
        %v321 = vadd.s32 %v289, 256
        %v322 = vadd.s32 %v289, 264
        %v323 = vadd.s32 %v289, 272
        %v324 = vadd.s32 %v289, 280
        %v325 = vand.u32 %v289, 15
        %v326 = vand.u32 %v290, 15
        %v327 = vand.u32 %v291, 15
        %v328 = vand.u32 %v292, 15
        %v329 = vand.u32 %v293, 15
        %v330 = vand.u32 %v294, 15
        %v331 = vand.u32 %v295, 15
        %v332 = vand.u32 %v296, 15
        %v333 = vand.u32 %v297, 15
        %v334 = vand.u32 %v298, 15
        %v335 = vand.u32 %v299, 15
        %v336 = vand.u32 %v300, 15
        %v337 = vand.u32 %v301, 15
        %v338 = vand.u32 %v302, 15
        %v339 = vand.u32 %v303, 15
        %v340 = vand.u32 %v304, 15
        %v341 = vand.u32 %v305, 15
        %v342 = vand.u32 %v306, 15
        %v343 = vand.u32 %v307, 15
        %v344 = vand.u32 %v308, 15
        %v345 = vand.u32 %v309, 15
        %v346 = vand.u32 %v310, 15
        %v347 = vand.u32 %v311, 15
        %v348 = vand.u32 %v312, 15
        %v349 = vand.u32 %v313, 15
        %v350 = vand.u32 %v314, 15
        %v351 = vand.u32 %v315, 15
        %v352 = vand.u32 %v316, 15
        %v353 = vand.u32 %v317, 15
        %v354 = vand.u32 %v318, 15
        %v355 = vand.u32 %v319, 15
        %v356 = vand.u32 %v320, 15
        %v357 = vand.u32 %v321, 15
        %v358 = vand.u32 %v322, 15
        %v359 = vand.u32 %v323, 15
        %v360 = vand.u32 %v324, 15
        %vm361 = vcmp.gt.s32.totalorder %v325, 0
        %vm362 = vcmp.gt.s32.totalorder %v326, 0
        %vm363 = vcmp.gt.s32.totalorder %v327, 0
        %vm364 = vcmp.gt.s32.totalorder %v328, 0
        %vm365 = vcmp.gt.s32.totalorder %v329, 0
        %vm366 = vcmp.gt.s32.totalorder %v330, 0
        %vm367 = vcmp.gt.s32.totalorder %v331, 0
        %vm368 = vcmp.gt.s32.totalorder %v332, 0
        %vm369 = vcmp.gt.s32.totalorder %v333, 0
        %vm370 = vcmp.gt.s32.totalorder %v334, 0
        %vm371 = vcmp.gt.s32.totalorder %v335, 0
        %vm372 = vcmp.gt.s32.totalorder %v336, 0
        %vm373 = vcmp.gt.s32.totalorder %v337, 0
        %vm374 = vcmp.gt.s32.totalorder %v338, 0
        %vm375 = vcmp.gt.s32.totalorder %v339, 0
        %vm376 = vcmp.gt.s32.totalorder %v340, 0
        %vm377 = vcmp.gt.s32.totalorder %v341, 0
        %vm378 = vcmp.gt.s32.totalorder %v342, 0
        %vm379 = vcmp.gt.s32.totalorder %v343, 0
        %vm380 = vcmp.gt.s32.totalorder %v344, 0
        %vm381 = vcmp.gt.s32.totalorder %v345, 0
        %vm382 = vcmp.gt.s32.totalorder %v346, 0
        %vm383 = vcmp.gt.s32.totalorder %v347, 0
        %vm384 = vcmp.gt.s32.totalorder %v348, 0
        %vm385 = vcmp.gt.s32.totalorder %v349, 0
        %vm386 = vcmp.gt.s32.totalorder %v350, 0
        %vm387 = vcmp.gt.s32.totalorder %v351, 0
        %vm388 = vcmp.gt.s32.totalorder %v352, 0
        %vm389 = vcmp.gt.s32.totalorder %v353, 0
        %vm390 = vcmp.gt.s32.totalorder %v354, 0
        %vm391 = vcmp.gt.s32.totalorder %v355, 0
        %vm392 = vcmp.gt.s32.totalorder %v356, 0
        %vm393 = vcmp.gt.s32.totalorder %v357, 0
        %vm394 = vcmp.gt.s32.totalorder %v358, 0
        %vm395 = vcmp.gt.s32.totalorder %v359, 0
        %vm396 = vcmp.gt.s32.totalorder %v360, 0
        %vm397 = vcmp.lt.s32.totalorder %v325, 15
        %vm398 = vcmp.lt.s32.totalorder %v326, 15
        %vm399 = vcmp.lt.s32.totalorder %v327, 15
        %vm400 = vcmp.lt.s32.totalorder %v328, 15
        %vm401 = vcmp.lt.s32.totalorder %v329, 15
        %vm402 = vcmp.lt.s32.totalorder %v330, 15
        %vm403 = vcmp.lt.s32.totalorder %v331, 15
        %vm404 = vcmp.lt.s32.totalorder %v332, 15
        %vm405 = vcmp.lt.s32.totalorder %v333, 15
        %vm406 = vcmp.lt.s32.totalorder %v334, 15
        %vm407 = vcmp.lt.s32.totalorder %v335, 15
        %vm408 = vcmp.lt.s32.totalorder %v336, 15
        %vm409 = vcmp.lt.s32.totalorder %v337, 15
        %vm410 = vcmp.lt.s32.totalorder %v338, 15
        %vm411 = vcmp.lt.s32.totalorder %v339, 15
        %vm412 = vcmp.lt.s32.totalorder %v340, 15
        %vm413 = vcmp.lt.s32.totalorder %v341, 15
        %vm414 = vcmp.lt.s32.totalorder %v342, 15
        %vm415 = vcmp.lt.s32.totalorder %v343, 15
        %vm416 = vcmp.lt.s32.totalorder %v344, 15
        %vm417 = vcmp.lt.s32.totalorder %v345, 15
        %vm418 = vcmp.lt.s32.totalorder %v346, 15
        %vm419 = vcmp.lt.s32.totalorder %v347, 15
        %vm420 = vcmp.lt.s32.totalorder %v348, 15
        %vm421 = vcmp.lt.s32.totalorder %v349, 15
        %vm422 = vcmp.lt.s32.totalorder %v350, 15
        %vm423 = vcmp.lt.s32.totalorder %v351, 15
        %vm424 = vcmp.lt.s32.totalorder %v352, 15
        %vm425 = vcmp.lt.s32.totalorder %v353, 15
        %vm426 = vcmp.lt.s32.totalorder %v354, 15
        %vm427 = vcmp.lt.s32.totalorder %v355, 15
        %vm428 = vcmp.lt.s32.totalorder %v356, 15
        %vm429 = vcmp.lt.s32.totalorder %v357, 15
        %vm430 = vcmp.lt.s32.totalorder %v358, 15
        %vm431 = vcmp.lt.s32.totalorder %v359, 15
        %vm432 = vcmp.lt.s32.totalorder %v360, 15
        %v433 = vld [vmem:[%s276] sm:$0xf]
        %v434 = vld [vmem:[%s276 + $0x4] sm:$0xf]
        %v435 = vld [vmem:[%s276 + $0x8] sm:$0xf]
        %v436 = vld [vmem:[%s276 + $0xc] sm:$0xf]
        %v437 = vld [vmem:[%s276 + $0x10] sm:$0xf]
        %v438 = vld [vmem:[%s276 + $0x14] sm:$0xf]
        %v439 = vld [vmem:[%s276 + $0x18] sm:$0xf]
        %v440 = vld [vmem:[%s276 + $0x1c] sm:$0xf]
        %v441 = vld [vmem:[%s276 + $0x20] sm:$0xf]
        %v442 = vld [vmem:[%s276 + $0x24] sm:$0xf]
        %v443 = vld [vmem:[%s276 + $0x28] sm:$0xf]
        %v444 = vld [vmem:[%s276 + $0x2c] sm:$0xf]
        %v445 = vld [vmem:[%s276 + $0x30] sm:$0xf]
        %v446 = vld [vmem:[%s276 + $0x34] sm:$0xf]
        %v447 = vld [vmem:[%s276 + $0x38] sm:$0xf]
        %v448 = vld [vmem:[%s276 + $0x3c] sm:$0xf]
        %v449 = vld [vmem:[%s276 + $0x40] sm:$0xf]
        %v450 = vld [vmem:[%s276 + $0x44] sm:$0xf]
        %v451 = vld [vmem:[%s276 + $0x48] sm:$0xf]
        %v452 = vld [vmem:[%s276 + $0x4c] sm:$0xf]
        %v453 = vld [vmem:[%s276 + $0x50] sm:$0xf]
        %v454 = vld [vmem:[%s276 + $0x54] sm:$0xf]
        %v455 = vld [vmem:[%s276 + $0x58] sm:$0xf]
        %v456 = vld [vmem:[%s276 + $0x5c] sm:$0xf]
        %v457 = vld [vmem:[%s276 + $0x60] sm:$0xf]
        %v458 = vld [vmem:[%s276 + $0x64] sm:$0xf]
        %v459 = vld [vmem:[%s276 + $0x68] sm:$0xf]
        %v460 = vld [vmem:[%s276 + $0x6c] sm:$0xf]
        %v461 = vld [vmem:[%s276 + $0x70] sm:$0xf]
        %v462 = vld [vmem:[%s276 + $0x74] sm:$0xf]
        %v463 = vld [vmem:[%s276 + $0x78] sm:$0xf]
        %v464 = vld [vmem:[%s276 + $0x7c] sm:$0xf]
        %v497 = vunpack.c.l.b16 %v433
        %v498 = vunpack.c.l.b16 %v434
        %v499 = vunpack.c.l.b16 %v435
        %v500 = vunpack.c.l.b16 %v436
        %v501 = vunpack.c.l.b16 %v437
        %v502 = vunpack.c.l.b16 %v438
        %v503 = vunpack.c.l.b16 %v439
        %v504 = vunpack.c.l.b16 %v440
        %v505 = vunpack.c.l.b16 %v441
        %v506 = vunpack.c.l.b16 %v442
        %v507 = vunpack.c.l.b16 %v443
        %v508 = vunpack.c.l.b16 %v444
        %v509 = vunpack.c.l.b16 %v445
        %v510 = vunpack.c.l.b16 %v446
        %v511 = vunpack.c.l.b16 %v447
        %v512 = vunpack.c.l.b16 %v448
        %v513 = vunpack.c.l.b16 %v449
        %v514 = vunpack.c.l.b16 %v450
        %v515 = vunpack.c.l.b16 %v451
        %v516 = vunpack.c.l.b16 %v452
        %v517 = vunpack.c.l.b16 %v453
        %v518 = vunpack.c.l.b16 %v454
        %v519 = vunpack.c.l.b16 %v455
        %v520 = vunpack.c.l.b16 %v456
        %v521 = vunpack.c.l.b16 %v457
        %v522 = vunpack.c.l.b16 %v458
        %v523 = vunpack.c.l.b16 %v459
        %v524 = vunpack.c.l.b16 %v460
        %v525 = vunpack.c.l.b16 %v461
        %v526 = vunpack.c.l.b16 %v462
        %v527 = vunpack.c.l.b16 %v463
        %v528 = vunpack.c.l.b16 %v464
        %v529 = vpack.c.b16 %v498, %v497
        %v530 = vpack.c.b16 %v500, %v499
        %v531 = vpack.c.b16 %v502, %v501
        %v532 = vpack.c.b16 %v504, %v503
        %v533 = vpack.c.b16 %v506, %v505
        %v534 = vpack.c.b16 %v508, %v507
        %v535 = vpack.c.b16 %v510, %v509
        %v536 = vpack.c.b16 %v512, %v511
        %v537 = vpack.c.b16 %v514, %v513
        %v538 = vpack.c.b16 %v516, %v515
        %v539 = vpack.c.b16 %v518, %v517
        %v540 = vpack.c.b16 %v520, %v519
        %v541 = vpack.c.b16 %v522, %v521
        %v542 = vpack.c.b16 %v524, %v523
        %v543 = vpack.c.b16 %v526, %v525
        %v544 = vpack.c.b16 %v528, %v527
        %561 = vst [vmem:[#allocation2 + $0x10] sm:$0xff] %v529
        %562 = vst [vmem:[#allocation2 + $0x18] sm:$0xff] %v530
        %563 = vst [vmem:[#allocation2 + $0x20] sm:$0xff] %v531
        %564 = vst [vmem:[#allocation2 + $0x28] sm:$0xff] %v532
        %565 = vst [vmem:[#allocation2 + $0x30] sm:$0xff] %v533
        %566 = vst [vmem:[#allocation2 + $0x38] sm:$0xff] %v534
        %567 = vst [vmem:[#allocation2 + $0x40] sm:$0xff] %v535
        %568 = vst [vmem:[#allocation2 + $0x48] sm:$0xff] %v536
        %569 = vst [vmem:[#allocation2 + $0x50] sm:$0xff] %v537
        %570 = vst [vmem:[#allocation2 + $0x58] sm:$0xff] %v538
        %571 = vst [vmem:[#allocation2 + $0x60] sm:$0xff] %v539
        %572 = vst [vmem:[#allocation2 + $0x68] sm:$0xff] %v540
        %573 = vst [vmem:[#allocation2 + $0x70] sm:$0xff] %v541
        %574 = vst [vmem:[#allocation2 + $0x78] sm:$0xff] %v542
        %575 = vst [vmem:[#allocation2 + $0x80] sm:$0xff] %v543
        %576 = vst [vmem:[#allocation2 + $0x88] sm:$0xff] %v544
        %v577 = vld [vmem:[%s2] sm:$0x1]
        %v578 = vld [vmem:[%s3] sm:$0x1]
        %v579 = vld [vmem:[#allocation2] sm:$0x80]
        %v580 = vld [vmem:[#allocation2 + $0x8] sm:$0xff]
        %v581 = vld [vmem:[#allocation2 + $0x10] sm:$0xff]
        %v582 = vld [vmem:[#allocation2 + $0x18] sm:$0xff]
        %v583 = vld [vmem:[#allocation2 + $0x20] sm:$0xff]
        %v584 = vld [vmem:[#allocation2 + $0x28] sm:$0xff]
        %v585 = vld [vmem:[#allocation2 + $0x30] sm:$0xff]
        %v586 = vld [vmem:[#allocation2 + $0x38] sm:$0xff]
        %v587 = vld [vmem:[#allocation2 + $0x40] sm:$0xff]
        %v588 = vld [vmem:[#allocation2 + $0x48] sm:$0xff]
        %v589 = vld [vmem:[#allocation2 + $0x50] sm:$0xff]
        %v590 = vld [vmem:[#allocation2 + $0x58] sm:$0xff]
        %v591 = vld [vmem:[#allocation2 + $0x60] sm:$0xff]
        %v592 = vld [vmem:[#allocation2 + $0x68] sm:$0xff]
        %v593 = vld [vmem:[#allocation2 + $0x70] sm:$0xff]
        %v594 = vld [vmem:[#allocation2 + $0x78] sm:$0xff]
        %v595 = vld [vmem:[#allocation2 + $0x80] sm:$0xff]
        %v596 = vld [vmem:[#allocation2 + $0x88] sm:$0xff]
        %v597 = vld [vmem:[#allocation2 + $0x90] sm:$0xff]
        %v598 = vld [vmem:[#allocation2 + $0x8] sm:$0xff]
        %v599 = vld [vmem:[#allocation2 + $0x10] sm:$0xff]
        %v600 = vld [vmem:[#allocation2 + $0x18] sm:$0xff]
        %v601 = vld [vmem:[#allocation2 + $0x20] sm:$0xff]
        %v602 = vld [vmem:[#allocation2 + $0x28] sm:$0xff]
        %v603 = vld [vmem:[#allocation2 + $0x30] sm:$0xff]
        %v604 = vld [vmem:[#allocation2 + $0x38] sm:$0xff]
        %v605 = vld [vmem:[#allocation2 + $0x40] sm:$0xff]
        %v606 = vld [vmem:[#allocation2 + $0x48] sm:$0xff]
        %v607 = vld [vmem:[#allocation2 + $0x50] sm:$0xff]
        %v608 = vld [vmem:[#allocation2 + $0x58] sm:$0xff]
        %v609 = vld [vmem:[#allocation2 + $0x60] sm:$0xff]
        %v610 = vld [vmem:[#allocation2 + $0x68] sm:$0xff]
        %v611 = vld [vmem:[#allocation2 + $0x70] sm:$0xff]
        %v612 = vld [vmem:[#allocation2 + $0x78] sm:$0xff]
        %v613 = vld [vmem:[#allocation2 + $0x80] sm:$0xff]
        %v614 = vld [vmem:[#allocation2 + $0x88] sm:$0xff]
        %v615 = vld [vmem:[#allocation2 + $0x90] sm:$0xff]
        %v616 = vld [vmem:[#allocation2 + $0x98] sm:$0x1]
        %v617 = vsel %vm361, 1, 0
        %v618 = vsel %vm362, 1, 0
        %v619 = vsel %vm363, 1, 0
        %v620 = vsel %vm364, 1, 0
        %v621 = vsel %vm365, 1, 0
        %v622 = vsel %vm366, 1, 0
        %v623 = vsel %vm367, 1, 0
        %v624 = vsel %vm368, 1, 0
        %v625 = vsel %vm369, 1, 0
        %v626 = vsel %vm370, 1, 0
        %v627 = vsel %vm371, 1, 0
        %v628 = vsel %vm372, 1, 0
        %v629 = vsel %vm373, 1, 0
        %v630 = vsel %vm374, 1, 0
        %v631 = vsel %vm375, 1, 0
        %v632 = vsel %vm376, 1, 0
        %v633 = vsel %vm377, 1, 0
        %v634 = vsel %vm378, 1, 0
        %v635 = vsel %vm379, 1, 0
        %v636 = vsel %vm380, 1, 0
        %v637 = vsel %vm381, 1, 0
        %v638 = vsel %vm382, 1, 0
        %v639 = vsel %vm383, 1, 0
        %v640 = vsel %vm384, 1, 0
        %v641 = vsel %vm385, 1, 0
        %v642 = vsel %vm386, 1, 0
        %v643 = vsel %vm387, 1, 0
        %v644 = vsel %vm388, 1, 0
        %v645 = vsel %vm389, 1, 0
        %v646 = vsel %vm390, 1, 0
        %v647 = vsel %vm391, 1, 0
        %v648 = vsel %vm392, 1, 0
        %v649 = vsel %vm393, 1, 0
        %v650 = vsel %vm394, 1, 0
        %v651 = vsel %vm395, 1, 0
        %v652 = vsel %vm396, 1, 0
        %vm653 = vcmp.eq.s32.totalorder %v617, 1
        %vm654 = vcmp.eq.s32.totalorder %v618, 1
        %vm655 = vcmp.eq.s32.totalorder %v619, 1
        %vm656 = vcmp.eq.s32.totalorder %v620, 1
        %vm657 = vcmp.eq.s32.totalorder %v621, 1
        %vm658 = vcmp.eq.s32.totalorder %v622, 1
        %vm659 = vcmp.eq.s32.totalorder %v623, 1
        %vm660 = vcmp.eq.s32.totalorder %v624, 1
        %vm661 = vcmp.eq.s32.totalorder %v625, 1
        %vm662 = vcmp.eq.s32.totalorder %v626, 1
        %vm663 = vcmp.eq.s32.totalorder %v627, 1
        %vm664 = vcmp.eq.s32.totalorder %v628, 1
        %vm665 = vcmp.eq.s32.totalorder %v629, 1
        %vm666 = vcmp.eq.s32.totalorder %v630, 1
        %vm667 = vcmp.eq.s32.totalorder %v631, 1
        %vm668 = vcmp.eq.s32.totalorder %v632, 1
        %vm669 = vcmp.eq.s32.totalorder %v633, 1
        %vm670 = vcmp.eq.s32.totalorder %v634, 1
        %vm671 = vcmp.eq.s32.totalorder %v635, 1
        %vm672 = vcmp.eq.s32.totalorder %v636, 1
        %vm673 = vcmp.eq.s32.totalorder %v637, 1
        %vm674 = vcmp.eq.s32.totalorder %v638, 1
        %vm675 = vcmp.eq.s32.totalorder %v639, 1
        %vm676 = vcmp.eq.s32.totalorder %v640, 1
        %vm677 = vcmp.eq.s32.totalorder %v641, 1
        %vm678 = vcmp.eq.s32.totalorder %v642, 1
        %vm679 = vcmp.eq.s32.totalorder %v643, 1
        %vm680 = vcmp.eq.s32.totalorder %v644, 1
        %vm681 = vcmp.eq.s32.totalorder %v645, 1
        %vm682 = vcmp.eq.s32.totalorder %v646, 1
        %vm683 = vcmp.eq.s32.totalorder %v647, 1
        %vm684 = vcmp.eq.s32.totalorder %v648, 1
        %vm685 = vcmp.eq.s32.totalorder %v649, 1
        %vm686 = vcmp.eq.s32.totalorder %v650, 1
        %vm687 = vcmp.eq.s32.totalorder %v651, 1
        %vm688 = vcmp.eq.s32.totalorder %v652, 1
        %vm689 = vmpackc.low %vm653, %vm653
        %vm690 = vmpackc.low %vm654, %vm654
        %vm691 = vmpackc.low %vm655, %vm655
        %vm692 = vmpackc.low %vm656, %vm656
        %vm693 = vmpackc.low %vm657, %vm657
        %vm694 = vmpackc.low %vm658, %vm658
        %vm695 = vmpackc.low %vm659, %vm659
        %vm696 = vmpackc.low %vm660, %vm660
        %vm697 = vmpackc.low %vm661, %vm661
        %vm698 = vmpackc.low %vm662, %vm662
        %vm699 = vmpackc.low %vm663, %vm663
        %vm700 = vmpackc.low %vm664, %vm664
        %vm701 = vmpackc.low %vm665, %vm665
        %vm702 = vmpackc.low %vm666, %vm666
        %vm703 = vmpackc.low %vm667, %vm667
        %vm704 = vmpackc.low %vm668, %vm668
        %vm705 = vmpackc.low %vm669, %vm669
        %vm706 = vmpackc.low %vm670, %vm670
        %vm707 = vmpackc.low %vm671, %vm671
        %vm708 = vmpackc.low %vm672, %vm672
        %vm709 = vmpackc.low %vm673, %vm673
        %vm710 = vmpackc.low %vm674, %vm674
        %vm711 = vmpackc.low %vm675, %vm675
        %vm712 = vmpackc.low %vm676, %vm676
        %vm713 = vmpackc.low %vm677, %vm677
        %vm714 = vmpackc.low %vm678, %vm678
        %vm715 = vmpackc.low %vm679, %vm679
        %vm716 = vmpackc.low %vm680, %vm680
        %vm717 = vmpackc.low %vm681, %vm681
        %vm718 = vmpackc.low %vm682, %vm682
        %vm719 = vmpackc.low %vm683, %vm683
        %vm720 = vmpackc.low %vm684, %vm684
        %vm721 = vmpackc.low %vm685, %vm685
        %vm722 = vmpackc.low %vm686, %vm686
        %vm723 = vmpackc.low %vm687, %vm687
        %vm724 = vmpackc.low %vm688, %vm688
        %v725 = vsel %vm689, 65537, 0
        %v726 = vsel %vm690, 65537, 0
        %v727 = vsel %vm691, 65537, 0
        %v728 = vsel %vm692, 65537, 0
        %v729 = vsel %vm693, 65537, 0
        %v730 = vsel %vm694, 65537, 0
        %v731 = vsel %vm695, 65537, 0
        %v732 = vsel %vm696, 65537, 0
        %v733 = vsel %vm697, 65537, 0
        %v734 = vsel %vm698, 65537, 0
        %v735 = vsel %vm699, 65537, 0
        %v736 = vsel %vm700, 65537, 0
        %v737 = vsel %vm701, 65537, 0
        %v738 = vsel %vm702, 65537, 0
        %v739 = vsel %vm703, 65537, 0
        %v740 = vsel %vm704, 65537, 0
        %v741 = vsel %vm705, 65537, 0
        %v742 = vsel %vm706, 65537, 0
        %v743 = vsel %vm707, 65537, 0
        %v744 = vsel %vm708, 65537, 0
        %v745 = vsel %vm709, 65537, 0
        %v746 = vsel %vm710, 65537, 0
        %v747 = vsel %vm711, 65537, 0
        %v748 = vsel %vm712, 65537, 0
        %v749 = vsel %vm713, 65537, 0
        %v750 = vsel %vm714, 65537, 0
        %v751 = vsel %vm715, 65537, 0
        %v752 = vsel %vm716, 65537, 0
        %v753 = vsel %vm717, 65537, 0
        %v754 = vsel %vm718, 65537, 0
        %v755 = vsel %vm719, 65537, 0
        %v756 = vsel %vm720, 65537, 0
        %v757 = vsel %vm721, 65537, 0
        %v758 = vsel %vm722, 65537, 0
        %v759 = vsel %vm723, 65537, 0
        %v760 = vsel %vm724, 65537, 0
        %v761 = vunpack.c.l.b16 %v725
        %v762 = vunpack.c.l.b16 %v726
        %v763 = vunpack.c.l.b16 %v727
        %v764 = vunpack.c.l.b16 %v728
        %v765 = vunpack.c.l.b16 %v729
        %v766 = vunpack.c.l.b16 %v730
        %v767 = vunpack.c.l.b16 %v731
        %v768 = vunpack.c.l.b16 %v732
        %v769 = vunpack.c.l.b16 %v733
        %v770 = vunpack.c.l.b16 %v734
        %v771 = vunpack.c.l.b16 %v735
        %v772 = vunpack.c.l.b16 %v736
        %v773 = vunpack.c.l.b16 %v737
        %v774 = vunpack.c.l.b16 %v738
        %v775 = vunpack.c.l.b16 %v739
        %v776 = vunpack.c.l.b16 %v740
        %v777 = vunpack.c.l.b16 %v741
        %v778 = vunpack.c.l.b16 %v742
        %v779 = vunpack.c.l.b16 %v743
        %v780 = vunpack.c.l.b16 %v744
        %v781 = vunpack.c.l.b16 %v745
        %v782 = vunpack.c.l.b16 %v746
        %v783 = vunpack.c.l.b16 %v747
        %v784 = vunpack.c.l.b16 %v748
        %v785 = vunpack.c.l.b16 %v749
        %v786 = vunpack.c.l.b16 %v750
        %v787 = vunpack.c.l.b16 %v751
        %v788 = vunpack.c.l.b16 %v752
        %v789 = vunpack.c.l.b16 %v753
        %v790 = vunpack.c.l.b16 %v754
        %v791 = vunpack.c.l.b16 %v755
        %v792 = vunpack.c.l.b16 %v756
        %v793 = vunpack.c.l.b16 %v757
        %v794 = vunpack.c.l.b16 %v758
        %v795 = vunpack.c.l.b16 %v759
        %v796 = vunpack.c.l.b16 %v760
        %v797 = vpack.c.b16 %v762, %v761
        %v798 = vpack.c.b16 %v764, %v763
        %v799 = vpack.c.b16 %v766, %v765
        %v800 = vpack.c.b16 %v768, %v767
        %v801 = vpack.c.b16 %v770, %v769
        %v802 = vpack.c.b16 %v772, %v771
        %v803 = vpack.c.b16 %v774, %v773
        %v804 = vpack.c.b16 %v776, %v775
        %v805 = vpack.c.b16 %v778, %v777
        %v806 = vpack.c.b16 %v780, %v779
        %v807 = vpack.c.b16 %v782, %v781
        %v808 = vpack.c.b16 %v784, %v783
        %v809 = vpack.c.b16 %v786, %v785
        %v810 = vpack.c.b16 %v788, %v787
        %v811 = vpack.c.b16 %v790, %v789
        %v812 = vpack.c.b16 %v792, %v791
        %v813 = vpack.c.b16 %v794, %v793
        %v814 = vpack.c.b16 %v796, %v795
        %vm815 = vsmask.f32 7424
        %v817 = vshll.u32 %v797, 16
        %v819 = vrot.slane %v817, 1
        %v820 = vshrl.u32 %v797, 16
        %v822 = vor.u32 %v820, %v819
        %v824 = vshll.u32 %v798, 16
        %v826 = vrot.slane %v824, 1
        %v827 = vsel %vm815, %v822, %v826
        %v828 = vshrl.u32 %v798, 16
        %v830 = vor.u32 %v828, %v826
        %v832 = vshll.u32 %v799, 16
        %v834 = vrot.slane %v832, 1
        %v835 = vsel %vm815, %v830, %v834
        %v836 = vshrl.u32 %v799, 16
        %v838 = vor.u32 %v836, %v834
        %v840 = vshll.u32 %v800, 16
        %v842 = vrot.slane %v840, 1
        %v843 = vsel %vm815, %v838, %v842
        %v844 = vshrl.u32 %v800, 16
        %v846 = vor.u32 %v844, %v842
        %v848 = vshll.u32 %v801, 16
        %v850 = vrot.slane %v848, 1
        %v851 = vsel %vm815, %v846, %v850
        %v852 = vshrl.u32 %v801, 16
        %v854 = vor.u32 %v852, %v850
        %v856 = vshll.u32 %v802, 16
        %v858 = vrot.slane %v856, 1
        %v859 = vsel %vm815, %v854, %v858
        %v860 = vshrl.u32 %v802, 16
        %v862 = vor.u32 %v860, %v858
        %v864 = vshll.u32 %v803, 16
        %v866 = vrot.slane %v864, 1
        %v867 = vsel %vm815, %v862, %v866
        %v868 = vshrl.u32 %v803, 16
        %v870 = vor.u32 %v868, %v866
        %v872 = vshll.u32 %v804, 16
        %v874 = vrot.slane %v872, 1
        %v875 = vsel %vm815, %v870, %v874
        %v876 = vshrl.u32 %v804, 16
        %v878 = vor.u32 %v876, %v874
        %v880 = vshll.u32 %v805, 16
        %v882 = vrot.slane %v880, 1
        %v883 = vsel %vm815, %v878, %v882
        %v884 = vshrl.u32 %v805, 16
        %v886 = vor.u32 %v884, %v882
        %v888 = vshll.u32 %v806, 16
        %v890 = vrot.slane %v888, 1
        %v891 = vsel %vm815, %v886, %v890
        %v892 = vshrl.u32 %v806, 16
        %v894 = vor.u32 %v892, %v890
        %v896 = vshll.u32 %v807, 16
        %v898 = vrot.slane %v896, 1
        %v899 = vsel %vm815, %v894, %v898
        %v900 = vshrl.u32 %v807, 16
        %v902 = vor.u32 %v900, %v898
        %v904 = vshll.u32 %v808, 16
        %v906 = vrot.slane %v904, 1
        %v907 = vsel %vm815, %v902, %v906
        %v908 = vshrl.u32 %v808, 16
        %v910 = vor.u32 %v908, %v906
        %v912 = vshll.u32 %v809, 16
        %v914 = vrot.slane %v912, 1
        %v915 = vsel %vm815, %v910, %v914
        %v916 = vshrl.u32 %v809, 16
        %v918 = vor.u32 %v916, %v914
        %v920 = vshll.u32 %v810, 16
        %v922 = vrot.slane %v920, 1
        %v923 = vsel %vm815, %v918, %v922
        %v924 = vshrl.u32 %v810, 16
        %v926 = vor.u32 %v924, %v922
        %v928 = vshll.u32 %v811, 16
        %v930 = vrot.slane %v928, 1
        %v931 = vsel %vm815, %v926, %v930
        %v932 = vshrl.u32 %v811, 16
        %v934 = vor.u32 %v932, %v930
        %v936 = vshll.u32 %v812, 16
        %v938 = vrot.slane %v936, 1
        %v939 = vsel %vm815, %v934, %v938
        %v940 = vshrl.u32 %v812, 16
        %v942 = vor.u32 %v940, %v938
        %v944 = vshll.u32 %v813, 16
        %v946 = vrot.slane %v944, 1
        %v947 = vsel %vm815, %v942, %v946
        %v948 = vshrl.u32 %v813, 16
        %v950 = vor.u32 %v948, %v946
        %v952 = vshll.u32 %v814, 16
        %v954 = vrot.slane %v952, 1
        %v955 = vsel %vm815, %v950, %v954
        %v956 = vshrl.u32 %v814, 16
        %v958 = vor.u32 %v956, %v954
        %vm959 = vcmp.ne.s16.totalorder %v819, 0
        %vm960 = vcmp.ne.s16.totalorder %v827, 0
        %vm961 = vcmp.ne.s16.totalorder %v835, 0
        %vm962 = vcmp.ne.s16.totalorder %v843, 0
        %vm963 = vcmp.ne.s16.totalorder %v851, 0
        %vm964 = vcmp.ne.s16.totalorder %v859, 0
        %vm965 = vcmp.ne.s16.totalorder %v867, 0
        %vm966 = vcmp.ne.s16.totalorder %v875, 0
        %vm967 = vcmp.ne.s16.totalorder %v883, 0
        %vm968 = vcmp.ne.s16.totalorder %v891, 0
        %vm969 = vcmp.ne.s16.totalorder %v899, 0
        %vm970 = vcmp.ne.s16.totalorder %v907, 0
        %vm971 = vcmp.ne.s16.totalorder %v915, 0
        %vm972 = vcmp.ne.s16.totalorder %v923, 0
        %vm973 = vcmp.ne.s16.totalorder %v931, 0
        %vm974 = vcmp.ne.s16.totalorder %v939, 0
        %vm975 = vcmp.ne.s16.totalorder %v947, 0
        %vm976 = vcmp.ne.s16.totalorder %v955, 0
        %vm977 = vcmp.ne.s16.totalorder %v958, 0
        %v978 = vsel %vm959, %v579, 0
        %v979 = vsel %vm960, %v580, 0
        %v980 = vsel %vm961, %v581, 0
        %v981 = vsel %vm962, %v582, 0
        %v982 = vsel %vm963, %v583, 0
        %v983 = vsel %vm964, %v584, 0
        %v984 = vsel %vm965, %v585, 0
        %v985 = vsel %vm966, %v586, 0
        %v986 = vsel %vm967, %v587, 0
        %v987 = vsel %vm968, %v588, 0
        %v988 = vsel %vm969, %v589, 0
        %v989 = vsel %vm970, %v590, 0
        %v990 = vsel %vm971, %v591, 0
        %v991 = vsel %vm972, %v592, 0
        %v992 = vsel %vm973, %v593, 0
        %v993 = vsel %vm974, %v594, 0
        %v994 = vsel %vm975, %v595, 0
        %v995 = vsel %vm976, %v596, 0
        %v996 = vsel %vm977, %v597, 0
        %vm997 = vsmask.f32 256
        %v999 = vshrl.u32 %v978, 16
        %v1001 = vrot.slane %v999, 7
        %v1003 = vshrl.u32 %v979, 16
        %v1005 = vrot.slane %v1003, 7
        %v1006 = vshll.u32 %v979, 16
        %v1008 = vor.u32 %v1005, %v1006
        %v1009 = vsel %vm997, %v1001, %v1008
        %v1011 = vshrl.u32 %v980, 16
        %v1013 = vrot.slane %v1011, 7
        %v1014 = vshll.u32 %v980, 16
        %v1016 = vor.u32 %v1013, %v1014
        %v1017 = vsel %vm997, %v1005, %v1016
        %v1019 = vshrl.u32 %v981, 16
        %v1021 = vrot.slane %v1019, 7
        %v1022 = vshll.u32 %v981, 16
        %v1024 = vor.u32 %v1021, %v1022
        %v1025 = vsel %vm997, %v1013, %v1024
        %v1027 = vshrl.u32 %v982, 16
        %v1029 = vrot.slane %v1027, 7
        %v1030 = vshll.u32 %v982, 16
        %v1032 = vor.u32 %v1029, %v1030
        %v1033 = vsel %vm997, %v1021, %v1032
        %v1035 = vshrl.u32 %v983, 16
        %v1037 = vrot.slane %v1035, 7
        %v1038 = vshll.u32 %v983, 16
        %v1040 = vor.u32 %v1037, %v1038
        %v1041 = vsel %vm997, %v1029, %v1040
        %v1043 = vshrl.u32 %v984, 16
        %v1045 = vrot.slane %v1043, 7
        %v1046 = vshll.u32 %v984, 16
        %v1048 = vor.u32 %v1045, %v1046
        %v1049 = vsel %vm997, %v1037, %v1048
        %v1051 = vshrl.u32 %v985, 16
        %v1053 = vrot.slane %v1051, 7
        %v1054 = vshll.u32 %v985, 16
        %v1056 = vor.u32 %v1053, %v1054
        %v1057 = vsel %vm997, %v1045, %v1056
        %v1059 = vshrl.u32 %v986, 16
        %v1061 = vrot.slane %v1059, 7
        %v1062 = vshll.u32 %v986, 16
        %v1064 = vor.u32 %v1061, %v1062
        %v1065 = vsel %vm997, %v1053, %v1064
        %v1067 = vshrl.u32 %v987, 16
        %v1069 = vrot.slane %v1067, 7
        %v1070 = vshll.u32 %v987, 16
        %v1072 = vor.u32 %v1069, %v1070
        %v1073 = vsel %vm997, %v1061, %v1072
        %v1075 = vshrl.u32 %v988, 16
        %v1077 = vrot.slane %v1075, 7
        %v1078 = vshll.u32 %v988, 16
        %v1080 = vor.u32 %v1077, %v1078
        %v1081 = vsel %vm997, %v1069, %v1080
        %v1083 = vshrl.u32 %v989, 16
        %v1085 = vrot.slane %v1083, 7
        %v1086 = vshll.u32 %v989, 16
        %v1088 = vor.u32 %v1085, %v1086
        %v1089 = vsel %vm997, %v1077, %v1088
        %v1091 = vshrl.u32 %v990, 16
        %v1093 = vrot.slane %v1091, 7
        %v1094 = vshll.u32 %v990, 16
        %v1096 = vor.u32 %v1093, %v1094
        %v1097 = vsel %vm997, %v1085, %v1096
        %v1099 = vshrl.u32 %v991, 16
        %v1101 = vrot.slane %v1099, 7
        %v1102 = vshll.u32 %v991, 16
        %v1104 = vor.u32 %v1101, %v1102
        %v1105 = vsel %vm997, %v1093, %v1104
        %v1107 = vshrl.u32 %v992, 16
        %v1109 = vrot.slane %v1107, 7
        %v1110 = vshll.u32 %v992, 16
        %v1112 = vor.u32 %v1109, %v1110
        %v1113 = vsel %vm997, %v1101, %v1112
        %v1115 = vshrl.u32 %v993, 16
        %v1117 = vrot.slane %v1115, 7
        %v1118 = vshll.u32 %v993, 16
        %v1120 = vor.u32 %v1117, %v1118
        %v1121 = vsel %vm997, %v1109, %v1120
        %v1123 = vshrl.u32 %v994, 16
        %v1125 = vrot.slane %v1123, 7
        %v1126 = vshll.u32 %v994, 16
        %v1128 = vor.u32 %v1125, %v1126
        %v1129 = vsel %vm997, %v1117, %v1128
        %v1131 = vshrl.u32 %v995, 16
        %v1133 = vrot.slane %v1131, 7
        %v1134 = vshll.u32 %v995, 16
        %v1136 = vor.u32 %v1133, %v1134
        %v1137 = vsel %vm997, %v1125, %v1136
        %v1139 = vshrl.u32 %v996, 16
        %v1141 = vrot.slane %v1139, 7
        %v1142 = vshll.u32 %v996, 16
        %v1144 = vor.u32 %v1141, %v1142
        %v1145 = vsel %vm997, %v1133, %v1144
        %1164 = vst [vmem:[#allocation3] sm:$0xff] %v1009
        %1165 = vst [vmem:[#allocation3 + $0x18] sm:$0xff] %v1017
        %1166 = vst [vmem:[#allocation3 + $0x30] sm:$0xff] %v1025
        %1167 = vst [vmem:[#allocation3 + $0x48] sm:$0xff] %v1033
        %1168 = vst [vmem:[#allocation3 + $0x60] sm:$0xff] %v1041
        %1169 = vst [vmem:[#allocation3 + $0x78] sm:$0xff] %v1049
        %1170 = vst [vmem:[#allocation3 + $0x90] sm:$0xff] %v1057
        %1171 = vst [vmem:[#allocation3 + $0xa8] sm:$0xff] %v1065
        %1172 = vst [vmem:[#allocation3 + $0xc0] sm:$0xff] %v1073
        %1173 = vst [vmem:[#allocation3 + $0xd8] sm:$0xff] %v1081
        %1174 = vst [vmem:[#allocation3 + $0xf0] sm:$0xff] %v1089
        %1175 = vst [vmem:[#allocation3 + $0x108] sm:$0xff] %v1097
        %1176 = vst [vmem:[#allocation3 + $0x120] sm:$0xff] %v1105
        %1177 = vst [vmem:[#allocation3 + $0x138] sm:$0xff] %v1113
        %1178 = vst [vmem:[#allocation3 + $0x150] sm:$0xff] %v1121
        %1179 = vst [vmem:[#allocation3 + $0x168] sm:$0xff] %v1129
        %1180 = vst [vmem:[#allocation3 + $0x180] sm:$0xff] %v1137
        %1181 = vst [vmem:[#allocation3 + $0x198] sm:$0xff] %v1145
        %1182 = vst [vmem:[#allocation3 + $0x8] sm:$0xff] %v580
        %1183 = vst [vmem:[#allocation3 + $0x20] sm:$0xff] %v581
        %1184 = vst [vmem:[#allocation3 + $0x38] sm:$0xff] %v582
        %1185 = vst [vmem:[#allocation3 + $0x50] sm:$0xff] %v583
        %1186 = vst [vmem:[#allocation3 + $0x68] sm:$0xff] %v584
        %1187 = vst [vmem:[#allocation3 + $0x80] sm:$0xff] %v585
        %1188 = vst [vmem:[#allocation3 + $0x98] sm:$0xff] %v586
        %1189 = vst [vmem:[#allocation3 + $0xb0] sm:$0xff] %v587
        %1190 = vst [vmem:[#allocation3 + $0xc8] sm:$0xff] %v588
        %1191 = vst [vmem:[#allocation3 + $0xe0] sm:$0xff] %v589
        %1192 = vst [vmem:[#allocation3 + $0xf8] sm:$0xff] %v590
        %1193 = vst [vmem:[#allocation3 + $0x110] sm:$0xff] %v591
        %1194 = vst [vmem:[#allocation3 + $0x128] sm:$0xff] %v592
        %1195 = vst [vmem:[#allocation3 + $0x140] sm:$0xff] %v593
        %1196 = vst [vmem:[#allocation3 + $0x158] sm:$0xff] %v594
        %1197 = vst [vmem:[#allocation3 + $0x170] sm:$0xff] %v595
        %1198 = vst [vmem:[#allocation3 + $0x188] sm:$0xff] %v596
        %1199 = vst [vmem:[#allocation3 + $0x1a0] sm:$0xff] %v597
        %v1200 = vsel %vm397, 1, 0
        %v1201 = vsel %vm398, 1, 0
        %v1202 = vsel %vm399, 1, 0
        %v1203 = vsel %vm400, 1, 0
        %v1204 = vsel %vm401, 1, 0
        %v1205 = vsel %vm402, 1, 0
        %v1206 = vsel %vm403, 1, 0
        %v1207 = vsel %vm404, 1, 0
        %v1208 = vsel %vm405, 1, 0
        %v1209 = vsel %vm406, 1, 0
        %v1210 = vsel %vm407, 1, 0
        %v1211 = vsel %vm408, 1, 0
        %v1212 = vsel %vm409, 1, 0
        %v1213 = vsel %vm410, 1, 0
        %v1214 = vsel %vm411, 1, 0
        %v1215 = vsel %vm412, 1, 0
        %v1216 = vsel %vm413, 1, 0
        %v1217 = vsel %vm414, 1, 0
        %v1218 = vsel %vm415, 1, 0
        %v1219 = vsel %vm416, 1, 0
        %v1220 = vsel %vm417, 1, 0
        %v1221 = vsel %vm418, 1, 0
        %v1222 = vsel %vm419, 1, 0
        %v1223 = vsel %vm420, 1, 0
        %v1224 = vsel %vm421, 1, 0
        %v1225 = vsel %vm422, 1, 0
        %v1226 = vsel %vm423, 1, 0
        %v1227 = vsel %vm424, 1, 0
        %v1228 = vsel %vm425, 1, 0
        %v1229 = vsel %vm426, 1, 0
        %v1230 = vsel %vm427, 1, 0
        %v1231 = vsel %vm428, 1, 0
        %v1232 = vsel %vm429, 1, 0
        %v1233 = vsel %vm430, 1, 0
        %v1234 = vsel %vm431, 1, 0
        %v1235 = vsel %vm432, 1, 0
        %vm1236 = vcmp.eq.s32.totalorder %v1200, 1
        %vm1237 = vcmp.eq.s32.totalorder %v1201, 1
        %vm1238 = vcmp.eq.s32.totalorder %v1202, 1
        %vm1239 = vcmp.eq.s32.totalorder %v1203, 1
        %vm1240 = vcmp.eq.s32.totalorder %v1204, 1
        %vm1241 = vcmp.eq.s32.totalorder %v1205, 1
        %vm1242 = vcmp.eq.s32.totalorder %v1206, 1
        %vm1243 = vcmp.eq.s32.totalorder %v1207, 1
        %vm1244 = vcmp.eq.s32.totalorder %v1208, 1
        %vm1245 = vcmp.eq.s32.totalorder %v1209, 1
        %vm1246 = vcmp.eq.s32.totalorder %v1210, 1
        %vm1247 = vcmp.eq.s32.totalorder %v1211, 1
        %vm1248 = vcmp.eq.s32.totalorder %v1212, 1
        %vm1249 = vcmp.eq.s32.totalorder %v1213, 1
        %vm1250 = vcmp.eq.s32.totalorder %v1214, 1
        %vm1251 = vcmp.eq.s32.totalorder %v1215, 1
        %vm1252 = vcmp.eq.s32.totalorder %v1216, 1
        %vm1253 = vcmp.eq.s32.totalorder %v1217, 1
        %vm1254 = vcmp.eq.s32.totalorder %v1218, 1
        %vm1255 = vcmp.eq.s32.totalorder %v1219, 1
        %vm1256 = vcmp.eq.s32.totalorder %v1220, 1
        %vm1257 = vcmp.eq.s32.totalorder %v1221, 1
        %vm1258 = vcmp.eq.s32.totalorder %v1222, 1
        %vm1259 = vcmp.eq.s32.totalorder %v1223, 1
        %vm1260 = vcmp.eq.s32.totalorder %v1224, 1
        %vm1261 = vcmp.eq.s32.totalorder %v1225, 1
        %vm1262 = vcmp.eq.s32.totalorder %v1226, 1
        %vm1263 = vcmp.eq.s32.totalorder %v1227, 1
        %vm1264 = vcmp.eq.s32.totalorder %v1228, 1
        %vm1265 = vcmp.eq.s32.totalorder %v1229, 1
        %vm1266 = vcmp.eq.s32.totalorder %v1230, 1
        %vm1267 = vcmp.eq.s32.totalorder %v1231, 1
        %vm1268 = vcmp.eq.s32.totalorder %v1232, 1
        %vm1269 = vcmp.eq.s32.totalorder %v1233, 1
        %vm1270 = vcmp.eq.s32.totalorder %v1234, 1
        %vm1271 = vcmp.eq.s32.totalorder %v1235, 1
        %vm1272 = vmpackc.low %vm1236, %vm1236
        %vm1273 = vmpackc.low %vm1237, %vm1237
        %vm1274 = vmpackc.low %vm1238, %vm1238
        %vm1275 = vmpackc.low %vm1239, %vm1239
        %vm1276 = vmpackc.low %vm1240, %vm1240
        %vm1277 = vmpackc.low %vm1241, %vm1241
        %vm1278 = vmpackc.low %vm1242, %vm1242
        %vm1279 = vmpackc.low %vm1243, %vm1243
        %vm1280 = vmpackc.low %vm1244, %vm1244
        %vm1281 = vmpackc.low %vm1245, %vm1245
        %vm1282 = vmpackc.low %vm1246, %vm1246
        %vm1283 = vmpackc.low %vm1247, %vm1247
        %vm1284 = vmpackc.low %vm1248, %vm1248
        %vm1285 = vmpackc.low %vm1249, %vm1249
        %vm1286 = vmpackc.low %vm1250, %vm1250
        %vm1287 = vmpackc.low %vm1251, %vm1251
        %vm1288 = vmpackc.low %vm1252, %vm1252
        %vm1289 = vmpackc.low %vm1253, %vm1253
        %vm1290 = vmpackc.low %vm1254, %vm1254
        %vm1291 = vmpackc.low %vm1255, %vm1255
        %vm1292 = vmpackc.low %vm1256, %vm1256
        %vm1293 = vmpackc.low %vm1257, %vm1257
        %vm1294 = vmpackc.low %vm1258, %vm1258
        %vm1295 = vmpackc.low %vm1259, %vm1259
        %vm1296 = vmpackc.low %vm1260, %vm1260
        %vm1297 = vmpackc.low %vm1261, %vm1261
        %vm1298 = vmpackc.low %vm1262, %vm1262
        %vm1299 = vmpackc.low %vm1263, %vm1263
        %vm1300 = vmpackc.low %vm1264, %vm1264
        %vm1301 = vmpackc.low %vm1265, %vm1265
        %vm1302 = vmpackc.low %vm1266, %vm1266
        %vm1303 = vmpackc.low %vm1267, %vm1267
        %vm1304 = vmpackc.low %vm1268, %vm1268
        %vm1305 = vmpackc.low %vm1269, %vm1269
        %vm1306 = vmpackc.low %vm1270, %vm1270
        %vm1307 = vmpackc.low %vm1271, %vm1271
        %v1308 = vsel %vm1272, 65537, 0
        %v1309 = vsel %vm1273, 65537, 0
        %v1310 = vsel %vm1274, 65537, 0
        %v1311 = vsel %vm1275, 65537, 0
        %v1312 = vsel %vm1276, 65537, 0
        %v1313 = vsel %vm1277, 65537, 0
        %v1314 = vsel %vm1278, 65537, 0
        %v1315 = vsel %vm1279, 65537, 0
        %v1316 = vsel %vm1280, 65537, 0
        %v1317 = vsel %vm1281, 65537, 0
        %v1318 = vsel %vm1282, 65537, 0
        %v1319 = vsel %vm1283, 65537, 0
        %v1320 = vsel %vm1284, 65537, 0
        %v1321 = vsel %vm1285, 65537, 0
        %v1322 = vsel %vm1286, 65537, 0
        %v1323 = vsel %vm1287, 65537, 0
        %v1324 = vsel %vm1288, 65537, 0
        %v1325 = vsel %vm1289, 65537, 0
        %v1326 = vsel %vm1290, 65537, 0
        %v1327 = vsel %vm1291, 65537, 0
        %v1328 = vsel %vm1292, 65537, 0
        %v1329 = vsel %vm1293, 65537, 0
        %v1330 = vsel %vm1294, 65537, 0
        %v1331 = vsel %vm1295, 65537, 0
        %v1332 = vsel %vm1296, 65537, 0
        %v1333 = vsel %vm1297, 65537, 0
        %v1334 = vsel %vm1298, 65537, 0
        %v1335 = vsel %vm1299, 65537, 0
        %v1336 = vsel %vm1300, 65537, 0
        %v1337 = vsel %vm1301, 65537, 0
        %v1338 = vsel %vm1302, 65537, 0
        %v1339 = vsel %vm1303, 65537, 0
        %v1340 = vsel %vm1304, 65537, 0
        %v1341 = vsel %vm1305, 65537, 0
        %v1342 = vsel %vm1306, 65537, 0
        %v1343 = vsel %vm1307, 65537, 0
        %v1344 = vunpack.c.l.b16 %v1308
        %v1345 = vunpack.c.l.b16 %v1309
        %v1346 = vunpack.c.l.b16 %v1310
        %v1347 = vunpack.c.l.b16 %v1311
        %v1348 = vunpack.c.l.b16 %v1312
        %v1349 = vunpack.c.l.b16 %v1313
        %v1350 = vunpack.c.l.b16 %v1314
        %v1351 = vunpack.c.l.b16 %v1315
        %v1352 = vunpack.c.l.b16 %v1316
        %v1353 = vunpack.c.l.b16 %v1317
        %v1354 = vunpack.c.l.b16 %v1318
        %v1355 = vunpack.c.l.b16 %v1319
        %v1356 = vunpack.c.l.b16 %v1320
        %v1357 = vunpack.c.l.b16 %v1321
        %v1358 = vunpack.c.l.b16 %v1322
        %v1359 = vunpack.c.l.b16 %v1323
        %v1360 = vunpack.c.l.b16 %v1324
        %v1361 = vunpack.c.l.b16 %v1325
        %v1362 = vunpack.c.l.b16 %v1326
        %v1363 = vunpack.c.l.b16 %v1327
        %v1364 = vunpack.c.l.b16 %v1328
        %v1365 = vunpack.c.l.b16 %v1329
        %v1366 = vunpack.c.l.b16 %v1330
        %v1367 = vunpack.c.l.b16 %v1331
        %v1368 = vunpack.c.l.b16 %v1332
        %v1369 = vunpack.c.l.b16 %v1333
        %v1370 = vunpack.c.l.b16 %v1334
        %v1371 = vunpack.c.l.b16 %v1335
        %v1372 = vunpack.c.l.b16 %v1336
        %v1373 = vunpack.c.l.b16 %v1337
        %v1374 = vunpack.c.l.b16 %v1338
        %v1375 = vunpack.c.l.b16 %v1339
        %v1376 = vunpack.c.l.b16 %v1340
        %v1377 = vunpack.c.l.b16 %v1341
        %v1378 = vunpack.c.l.b16 %v1342
        %v1379 = vunpack.c.l.b16 %v1343
        %v1380 = vpack.c.b16 %v1345, %v1344
        %v1381 = vpack.c.b16 %v1347, %v1346
        %v1382 = vpack.c.b16 %v1349, %v1348
        %v1383 = vpack.c.b16 %v1351, %v1350
        %v1384 = vpack.c.b16 %v1353, %v1352
        %v1385 = vpack.c.b16 %v1355, %v1354
        %v1386 = vpack.c.b16 %v1357, %v1356
        %v1387 = vpack.c.b16 %v1359, %v1358
        %v1388 = vpack.c.b16 %v1361, %v1360
        %v1389 = vpack.c.b16 %v1363, %v1362
        %v1390 = vpack.c.b16 %v1365, %v1364
        %v1391 = vpack.c.b16 %v1367, %v1366
        %v1392 = vpack.c.b16 %v1369, %v1368
        %v1393 = vpack.c.b16 %v1371, %v1370
        %v1394 = vpack.c.b16 %v1373, %v1372
        %v1395 = vpack.c.b16 %v1375, %v1374
        %v1396 = vpack.c.b16 %v1377, %v1376
        %v1397 = vpack.c.b16 %v1379, %v1378
        %v1399 = vshrl.u32 %v1380, 16
        %v1401 = vrot.slane %v1399, 7
        %v1402 = vshll.u32 %v1380, 16
        %v1404 = vor.u32 %v1401, %v1402
        %v1406 = vshrl.u32 %v1381, 16
        %v1408 = vrot.slane %v1406, 7
        %v1409 = vshll.u32 %v1381, 16
        %v1411 = vor.u32 %v1408, %v1409
        %v1412 = vsel %vm997, %v1401, %v1411
        %v1414 = vshrl.u32 %v1382, 16
        %v1416 = vrot.slane %v1414, 7
        %v1417 = vshll.u32 %v1382, 16
        %v1419 = vor.u32 %v1416, %v1417
        %v1420 = vsel %vm997, %v1408, %v1419
        %v1422 = vshrl.u32 %v1383, 16
        %v1424 = vrot.slane %v1422, 7
        %v1425 = vshll.u32 %v1383, 16
        %v1427 = vor.u32 %v1424, %v1425
        %v1428 = vsel %vm997, %v1416, %v1427
        %v1430 = vshrl.u32 %v1384, 16
        %v1432 = vrot.slane %v1430, 7
        %v1433 = vshll.u32 %v1384, 16
        %v1435 = vor.u32 %v1432, %v1433
        %v1436 = vsel %vm997, %v1424, %v1435
        %v1438 = vshrl.u32 %v1385, 16
        %v1440 = vrot.slane %v1438, 7
        %v1441 = vshll.u32 %v1385, 16
        %v1443 = vor.u32 %v1440, %v1441
        %v1444 = vsel %vm997, %v1432, %v1443
        %v1446 = vshrl.u32 %v1386, 16
        %v1448 = vrot.slane %v1446, 7
        %v1449 = vshll.u32 %v1386, 16
        %v1451 = vor.u32 %v1448, %v1449
        %v1452 = vsel %vm997, %v1440, %v1451
        %v1454 = vshrl.u32 %v1387, 16
        %v1456 = vrot.slane %v1454, 7
        %v1457 = vshll.u32 %v1387, 16
        %v1459 = vor.u32 %v1456, %v1457
        %v1460 = vsel %vm997, %v1448, %v1459
        %v1462 = vshrl.u32 %v1388, 16
        %v1464 = vrot.slane %v1462, 7
        %v1465 = vshll.u32 %v1388, 16
        %v1467 = vor.u32 %v1464, %v1465
        %v1468 = vsel %vm997, %v1456, %v1467
        %v1470 = vshrl.u32 %v1389, 16
        %v1472 = vrot.slane %v1470, 7
        %v1473 = vshll.u32 %v1389, 16
        %v1475 = vor.u32 %v1472, %v1473
        %v1476 = vsel %vm997, %v1464, %v1475
        %v1478 = vshrl.u32 %v1390, 16
        %v1480 = vrot.slane %v1478, 7
        %v1481 = vshll.u32 %v1390, 16
        %v1483 = vor.u32 %v1480, %v1481
        %v1484 = vsel %vm997, %v1472, %v1483
        %v1486 = vshrl.u32 %v1391, 16
        %v1488 = vrot.slane %v1486, 7
        %v1489 = vshll.u32 %v1391, 16
        %v1491 = vor.u32 %v1488, %v1489
        %v1492 = vsel %vm997, %v1480, %v1491
        %v1494 = vshrl.u32 %v1392, 16
        %v1496 = vrot.slane %v1494, 7
        %v1497 = vshll.u32 %v1392, 16
        %v1499 = vor.u32 %v1496, %v1497
        %v1500 = vsel %vm997, %v1488, %v1499
        %v1502 = vshrl.u32 %v1393, 16
        %v1504 = vrot.slane %v1502, 7
        %v1505 = vshll.u32 %v1393, 16
        %v1507 = vor.u32 %v1504, %v1505
        %v1508 = vsel %vm997, %v1496, %v1507
        %v1510 = vshrl.u32 %v1394, 16
        %v1512 = vrot.slane %v1510, 7
        %v1513 = vshll.u32 %v1394, 16
        %v1515 = vor.u32 %v1512, %v1513
        %v1516 = vsel %vm997, %v1504, %v1515
        %v1518 = vshrl.u32 %v1395, 16
        %v1520 = vrot.slane %v1518, 7
        %v1521 = vshll.u32 %v1395, 16
        %v1523 = vor.u32 %v1520, %v1521
        %v1524 = vsel %vm997, %v1512, %v1523
        %v1526 = vshrl.u32 %v1396, 16
        %v1528 = vrot.slane %v1526, 7
        %v1529 = vshll.u32 %v1396, 16
        %v1531 = vor.u32 %v1528, %v1529
        %v1532 = vsel %vm997, %v1520, %v1531
        %v1534 = vshrl.u32 %v1397, 16
        %v1536 = vrot.slane %v1534, 7
        %v1537 = vshll.u32 %v1397, 16
        %v1539 = vor.u32 %v1536, %v1537
        %v1540 = vsel %vm997, %v1528, %v1539
        %vm1541 = vcmp.ne.s16.totalorder %v1404, 0
        %vm1542 = vcmp.ne.s16.totalorder %v1412, 0
        %vm1543 = vcmp.ne.s16.totalorder %v1420, 0
        %vm1544 = vcmp.ne.s16.totalorder %v1428, 0
        %vm1545 = vcmp.ne.s16.totalorder %v1436, 0
        %vm1546 = vcmp.ne.s16.totalorder %v1444, 0
        %vm1547 = vcmp.ne.s16.totalorder %v1452, 0
        %vm1548 = vcmp.ne.s16.totalorder %v1460, 0
        %vm1549 = vcmp.ne.s16.totalorder %v1468, 0
        %vm1550 = vcmp.ne.s16.totalorder %v1476, 0
        %vm1551 = vcmp.ne.s16.totalorder %v1484, 0
        %vm1552 = vcmp.ne.s16.totalorder %v1492, 0
        %vm1553 = vcmp.ne.s16.totalorder %v1500, 0
        %vm1554 = vcmp.ne.s16.totalorder %v1508, 0
        %vm1555 = vcmp.ne.s16.totalorder %v1516, 0
        %vm1556 = vcmp.ne.s16.totalorder %v1524, 0
        %vm1557 = vcmp.ne.s16.totalorder %v1532, 0
        %vm1558 = vcmp.ne.s16.totalorder %v1540, 0
        %vm1559 = vcmp.ne.s16.totalorder %v1536, 0
        %v1560 = vsel %vm1541, %v598, 0
        %v1561 = vsel %vm1542, %v599, 0
        %v1562 = vsel %vm1543, %v600, 0
        %v1563 = vsel %vm1544, %v601, 0
        %v1564 = vsel %vm1545, %v602, 0
        %v1565 = vsel %vm1546, %v603, 0
        %v1566 = vsel %vm1547, %v604, 0
        %v1567 = vsel %vm1548, %v605, 0
        %v1568 = vsel %vm1549, %v606, 0
        %v1569 = vsel %vm1550, %v607, 0
        %v1570 = vsel %vm1551, %v608, 0
        %v1571 = vsel %vm1552, %v609, 0
        %v1572 = vsel %vm1553, %v610, 0
        %v1573 = vsel %vm1554, %v611, 0
        %v1574 = vsel %vm1555, %v612, 0
        %v1575 = vsel %vm1556, %v613, 0
        %v1576 = vsel %vm1557, %v614, 0
        %v1577 = vsel %vm1558, %v615, 0
        %v1578 = vsel %vm1559, %v616, 0
        %v1580 = vshrl.u32 %v1560, 16
        %v1582 = vshll.u32 %v1560, 16
        %v1584 = vrot.slane %v1582, 1
        %v1585 = vor.u32 %v1580, %v1584
        %v1587 = vshll.u32 %v1561, 16
        %v1589 = vrot.slane %v1587, 1
        %v1590 = vsel %vm815, %v1585, %v1589
        %v1591 = vshrl.u32 %v1561, 16
        %v1593 = vor.u32 %v1591, %v1589
        %v1595 = vshll.u32 %v1562, 16
        %v1597 = vrot.slane %v1595, 1
        %v1598 = vsel %vm815, %v1593, %v1597
        %v1599 = vshrl.u32 %v1562, 16
        %v1601 = vor.u32 %v1599, %v1597
        %v1603 = vshll.u32 %v1563, 16
        %v1605 = vrot.slane %v1603, 1
        %v1606 = vsel %vm815, %v1601, %v1605
        %v1607 = vshrl.u32 %v1563, 16
        %v1609 = vor.u32 %v1607, %v1605
        %v1611 = vshll.u32 %v1564, 16
        %v1613 = vrot.slane %v1611, 1
        %v1614 = vsel %vm815, %v1609, %v1613
        %v1615 = vshrl.u32 %v1564, 16
        %v1617 = vor.u32 %v1615, %v1613
        %v1619 = vshll.u32 %v1565, 16
        %v1621 = vrot.slane %v1619, 1
        %v1622 = vsel %vm815, %v1617, %v1621
        %v1623 = vshrl.u32 %v1565, 16
        %v1625 = vor.u32 %v1623, %v1621
        %v1627 = vshll.u32 %v1566, 16
        %v1629 = vrot.slane %v1627, 1
        %v1630 = vsel %vm815, %v1625, %v1629
        %v1631 = vshrl.u32 %v1566, 16
        %v1633 = vor.u32 %v1631, %v1629
        %v1635 = vshll.u32 %v1567, 16
        %v1637 = vrot.slane %v1635, 1
        %v1638 = vsel %vm815, %v1633, %v1637
        %v1639 = vshrl.u32 %v1567, 16
        %v1641 = vor.u32 %v1639, %v1637
        %v1643 = vshll.u32 %v1568, 16
        %v1645 = vrot.slane %v1643, 1
        %v1646 = vsel %vm815, %v1641, %v1645
        %v1647 = vshrl.u32 %v1568, 16
        %v1649 = vor.u32 %v1647, %v1645
        %v1651 = vshll.u32 %v1569, 16
        %v1653 = vrot.slane %v1651, 1
        %v1654 = vsel %vm815, %v1649, %v1653
        %v1655 = vshrl.u32 %v1569, 16
        %v1657 = vor.u32 %v1655, %v1653
        %v1659 = vshll.u32 %v1570, 16
        %v1661 = vrot.slane %v1659, 1
        %v1662 = vsel %vm815, %v1657, %v1661
        %v1663 = vshrl.u32 %v1570, 16
        %v1665 = vor.u32 %v1663, %v1661
        %v1667 = vshll.u32 %v1571, 16
        %v1669 = vrot.slane %v1667, 1
        %v1670 = vsel %vm815, %v1665, %v1669
        %v1671 = vshrl.u32 %v1571, 16
        %v1673 = vor.u32 %v1671, %v1669
        %v1675 = vshll.u32 %v1572, 16
        %v1677 = vrot.slane %v1675, 1
        %v1678 = vsel %vm815, %v1673, %v1677
        %v1679 = vshrl.u32 %v1572, 16
        %v1681 = vor.u32 %v1679, %v1677
        %v1683 = vshll.u32 %v1573, 16
        %v1685 = vrot.slane %v1683, 1
        %v1686 = vsel %vm815, %v1681, %v1685
        %v1687 = vshrl.u32 %v1573, 16
        %v1689 = vor.u32 %v1687, %v1685
        %v1691 = vshll.u32 %v1574, 16
        %v1693 = vrot.slane %v1691, 1
        %v1694 = vsel %vm815, %v1689, %v1693
        %v1695 = vshrl.u32 %v1574, 16
        %v1697 = vor.u32 %v1695, %v1693
        %v1699 = vshll.u32 %v1575, 16
        %v1701 = vrot.slane %v1699, 1
        %v1702 = vsel %vm815, %v1697, %v1701
        %v1703 = vshrl.u32 %v1575, 16
        %v1705 = vor.u32 %v1703, %v1701
        %v1707 = vshll.u32 %v1576, 16
        %v1709 = vrot.slane %v1707, 1
        %v1710 = vsel %vm815, %v1705, %v1709
        %v1711 = vshrl.u32 %v1576, 16
        %v1713 = vor.u32 %v1711, %v1709
        %v1715 = vshll.u32 %v1577, 16
        %v1717 = vrot.slane %v1715, 1
        %v1718 = vsel %vm815, %v1713, %v1717
        %v1719 = vshrl.u32 %v1577, 16
        %v1721 = vor.u32 %v1719, %v1717
        %v1723 = vshll.u32 %v1578, 16
        %v1725 = vrot.slane %v1723, 1
        %v1726 = vsel %vm815, %v1721, %v1725
        %1745 = vst [vmem:[#allocation3 + $0x10] sm:$0xff] %v1590
        %1746 = vst [vmem:[#allocation3 + $0x28] sm:$0xff] %v1598
        %1747 = vst [vmem:[#allocation3 + $0x40] sm:$0xff] %v1606
        %1748 = vst [vmem:[#allocation3 + $0x58] sm:$0xff] %v1614
        %1749 = vst [vmem:[#allocation3 + $0x70] sm:$0xff] %v1622
        %1750 = vst [vmem:[#allocation3 + $0x88] sm:$0xff] %v1630
        %1751 = vst [vmem:[#allocation3 + $0xa0] sm:$0xff] %v1638
        %1752 = vst [vmem:[#allocation3 + $0xb8] sm:$0xff] %v1646
        %1753 = vst [vmem:[#allocation3 + $0xd0] sm:$0xff] %v1654
        %1754 = vst [vmem:[#allocation3 + $0xe8] sm:$0xff] %v1662
        %1755 = vst [vmem:[#allocation3 + $0x100] sm:$0xff] %v1670
        %1756 = vst [vmem:[#allocation3 + $0x118] sm:$0xff] %v1678
        %1757 = vst [vmem:[#allocation3 + $0x130] sm:$0xff] %v1686
        %1758 = vst [vmem:[#allocation3 + $0x148] sm:$0xff] %v1694
        %1759 = vst [vmem:[#allocation3 + $0x160] sm:$0xff] %v1702
        %1760 = vst [vmem:[#allocation3 + $0x178] sm:$0xff] %v1710
        %1761 = vst [vmem:[#allocation3 + $0x190] sm:$0xff] %v1718
        %1762 = vst [vmem:[#allocation3 + $0x1a8] sm:$0xff] %v1726
        %v1763 = vld [vmem:[#allocation3] sm:$0xff]
        %v1764 = vld [vmem:[#allocation3 + $0x8] sm:$0xff]
        %v1765 = vld [vmem:[#allocation3 + $0x10] sm:$0xff]
        %v1766 = vld [vmem:[#allocation3 + $0x18] sm:$0xff]
        %v1767 = vld [vmem:[#allocation3 + $0x20] sm:$0xff]
        %v1768 = vld [vmem:[#allocation3 + $0x28] sm:$0xff]
        %v1769 = vld [vmem:[#allocation3 + $0x30] sm:$0xff]
        %v1770 = vld [vmem:[#allocation3 + $0x38] sm:$0xff]
        %v1771 = vld [vmem:[#allocation3 + $0x40] sm:$0xff]
        %v1772 = vld [vmem:[#allocation3 + $0x48] sm:$0xff]
        %v1773 = vld [vmem:[#allocation3 + $0x50] sm:$0xff]
        %v1774 = vld [vmem:[#allocation3 + $0x58] sm:$0xff]
        %v1775 = vld [vmem:[#allocation3 + $0x60] sm:$0xff]
        %v1776 = vld [vmem:[#allocation3 + $0x68] sm:$0xff]
        %v1777 = vld [vmem:[#allocation3 + $0x70] sm:$0xff]
        %v1778 = vld [vmem:[#allocation3 + $0x78] sm:$0xff]
        %v1779 = vld [vmem:[#allocation3 + $0x80] sm:$0xff]
        %v1780 = vld [vmem:[#allocation3 + $0x88] sm:$0xff]
        %v1781 = vld [vmem:[#allocation3 + $0x90] sm:$0xff]
        %v1782 = vld [vmem:[#allocation3 + $0x98] sm:$0xff]
        %v1783 = vld [vmem:[#allocation3 + $0xa0] sm:$0xff]
        %v1784 = vld [vmem:[#allocation3 + $0xa8] sm:$0xff]
        %v1785 = vld [vmem:[#allocation3 + $0xb0] sm:$0xff]
        %v1786 = vld [vmem:[#allocation3 + $0xb8] sm:$0xff]
        %v1787 = vld [vmem:[#allocation3 + $0xc0] sm:$0xff]
        %v1788 = vld [vmem:[#allocation3 + $0xc8] sm:$0xff]
        %v1789 = vld [vmem:[#allocation3 + $0xd0] sm:$0xff]
        %v1790 = vld [vmem:[#allocation3 + $0xd8] sm:$0xff]
        %v1791 = vld [vmem:[#allocation3 + $0xe0] sm:$0xff]
        %v1792 = vld [vmem:[#allocation3 + $0xe8] sm:$0xff]
        %v1793 = vld [vmem:[#allocation3 + $0xf0] sm:$0xff]
        %v1794 = vld [vmem:[#allocation3 + $0xf8] sm:$0xff]
        %v1795 = vld [vmem:[#allocation3 + $0x100] sm:$0xff]
        %v1796 = vld [vmem:[#allocation3 + $0x108] sm:$0xff]
        %v1797 = vld [vmem:[#allocation3 + $0x110] sm:$0xff]
        %v1798 = vld [vmem:[#allocation3 + $0x118] sm:$0xff]
        %v1799 = vld [vmem:[#allocation3 + $0x120] sm:$0xff]
        %v1800 = vld [vmem:[#allocation3 + $0x128] sm:$0xff]
        %v1801 = vld [vmem:[#allocation3 + $0x130] sm:$0xff]
        %v1802 = vld [vmem:[#allocation3 + $0x138] sm:$0xff]
        %v1803 = vld [vmem:[#allocation3 + $0x140] sm:$0xff]
        %v1804 = vld [vmem:[#allocation3 + $0x148] sm:$0xff]
        %v1805 = vld [vmem:[#allocation3 + $0x150] sm:$0xff]
        %v1806 = vld [vmem:[#allocation3 + $0x158] sm:$0xff]
        %v1807 = vld [vmem:[#allocation3 + $0x160] sm:$0xff]
        %v1808 = vld [vmem:[#allocation3 + $0x168] sm:$0xff]
        %v1809 = vld [vmem:[#allocation3 + $0x170] sm:$0xff]
        %v1810 = vld [vmem:[#allocation3 + $0x178] sm:$0xff]
        %v1811 = vld [vmem:[%s1] sm:$0xf]
        %v1812 = vld [vmem:[%s1 + $0x4] sm:$0xf]
        %v1813 = vld [vmem:[%s1 + $0x8] sm:$0xf]
        %v1814 = vld [vmem:[%s1 + $0xc] sm:$0xf]
        %v1815 = vld [vmem:[%s1 + $0x10] sm:$0xf]
        %v1816 = vld [vmem:[%s1 + $0x14] sm:$0xf]
        %v1817 = vld [vmem:[%s1 + $0x18] sm:$0xf]
        %v1818 = vld [vmem:[%s1 + $0x1c] sm:$0xf]
        %v1819 = vld [vmem:[%s1 + $0x20] sm:$0xf]
        %v1820 = vld [vmem:[%s1 + $0x24] sm:$0xf]
        %v1821 = vld [vmem:[%s1 + $0x28] sm:$0xf]
        %v1822 = vld [vmem:[%s1 + $0x2c] sm:$0xf]
        %v1823 = vld [vmem:[%s1 + $0x30] sm:$0xf]
        %v1824 = vld [vmem:[%s1 + $0x34] sm:$0xf]
        %v1825 = vld [vmem:[%s1 + $0x38] sm:$0xf]
        %v1826 = vld [vmem:[%s1 + $0x3c] sm:$0xf]
        %v1827 = vld [vmem:[%s1 + $0x40] sm:$0xf]
        %v1828 = vld [vmem:[%s1 + $0x44] sm:$0xf]
        %v1829 = vld [vmem:[%s1 + $0x48] sm:$0xf]
        %v1830 = vld [vmem:[%s1 + $0x4c] sm:$0xf]
        %v1831 = vld [vmem:[%s1 + $0x50] sm:$0xf]
        %v1832 = vld [vmem:[%s1 + $0x54] sm:$0xf]
        %v1833 = vld [vmem:[%s1 + $0x58] sm:$0xf]
        %v1834 = vld [vmem:[%s1 + $0x5c] sm:$0xf]
        %v1835 = vld [vmem:[%s1 + $0x60] sm:$0xf]
        %v1836 = vld [vmem:[%s1 + $0x64] sm:$0xf]
        %v1837 = vld [vmem:[%s1 + $0x68] sm:$0xf]
        %v1838 = vld [vmem:[%s1 + $0x6c] sm:$0xf]
        %v1839 = vld [vmem:[%s1 + $0x70] sm:$0xf]
        %v1840 = vld [vmem:[%s1 + $0x74] sm:$0xf]
        %v1841 = vld [vmem:[%s1 + $0x78] sm:$0xf]
        %v1842 = vld [vmem:[%s1 + $0x7c] sm:$0xf]
        %v1843 = vld [vmem:[%s1 + $0x80] sm:$0xf]
        %v1844 = vld [vmem:[%s1 + $0x84] sm:$0xf]
        %v1845 = vld [vmem:[%s1 + $0x88] sm:$0xf]
        %v1846 = vld [vmem:[%s1 + $0x8c] sm:$0xf]
        %v1847 = vld [vmem:[%s1 + $0x90] sm:$0xf]
        %v1848 = vld [vmem:[%s1 + $0x94] sm:$0xf]
        %v1849 = vld [vmem:[%s1 + $0x98] sm:$0xf]
        %v1850 = vld [vmem:[%s1 + $0x9c] sm:$0xf]
        %v1851 = vld [vmem:[%s1 + $0xa0] sm:$0xf]
        %v1852 = vld [vmem:[%s1 + $0xa4] sm:$0xf]
        %v1853 = vld [vmem:[%s1 + $0xa8] sm:$0xf]
        %v1854 = vld [vmem:[%s1 + $0xac] sm:$0xf]
        %v1855 = vld [vmem:[%s1 + $0xb0] sm:$0xf]
        %v1856 = vld [vmem:[%s1 + $0xb4] sm:$0xf]
        %v1857 = vld [vmem:[%s1 + $0xb8] sm:$0xf]
        %v1858 = vld [vmem:[%s1 + $0xbc] sm:$0xf]
        %v1859 = vld [vmem:[#allocation3 + $0x180] sm:$0xff]
        %v1860 = vld [vmem:[#allocation3 + $0x188] sm:$0xff]
        %v1861 = vld [vmem:[#allocation3 + $0x190] sm:$0xff]
        %s1862 = scalar_lea.vmem %s1, 192
        %v1863 = vld [vmem:[%s1862] sm:$0xf]
        %v1864 = vld [vmem:[%s1862 + $0x4] sm:$0xf]
        %v1865 = vld [vmem:[%s1862 + $0x8] sm:$0xf]
        %v1866 = vld [vmem:[%s1862 + $0xc] sm:$0xf]
        %v1867 = vld [vmem:[%s1862 + $0x10] sm:$0xf]
        %v1868 = vld [vmem:[%s1862 + $0x14] sm:$0xf]
        %v1869 = vld [vmem:[%s1862 + $0x18] sm:$0xf]
        %v1870 = vld [vmem:[%s1862 + $0x1c] sm:$0xf]
        %v1871 = vld [vmem:[%s1862 + $0x20] sm:$0xf]
        %v1872 = vld [vmem:[%s1862 + $0x24] sm:$0xf]
        %v1873 = vld [vmem:[%s1862 + $0x28] sm:$0xf]
        %v1874 = vld [vmem:[%s1862 + $0x2c] sm:$0xf]
        %v1875 = vld [vmem:[%s1862 + $0x30] sm:$0xf]
        %v1876 = vld [vmem:[%s1862 + $0x34] sm:$0xf]
        %v1877 = vld [vmem:[%s1862 + $0x38] sm:$0xf]
        %v1878 = vld [vmem:[%s1862 + $0x3c] sm:$0xf]
        %v1879 = vld [vmem:[%s1862 + $0x40] sm:$0xf]
        %v1880 = vld [vmem:[%s1862 + $0x44] sm:$0xf]
        %v1881 = vld [vmem:[%s1862 + $0x48] sm:$0xf]
        %v1882 = vld [vmem:[%s1862 + $0x4c] sm:$0xf]
        %v1883 = vld [vmem:[%s1862 + $0x50] sm:$0xf]
        %v1884 = vld [vmem:[%s1862 + $0x54] sm:$0xf]
        %v1885 = vld [vmem:[%s1862 + $0x58] sm:$0xf]
        %v1886 = vld [vmem:[%s1862 + $0x5c] sm:$0xf]
        %v1887 = vld [vmem:[%s1862 + $0x60] sm:$0xf]
        %v1888 = vld [vmem:[%s1862 + $0x64] sm:$0xf]
        %v1889 = vld [vmem:[%s1862 + $0x68] sm:$0xf]
        %v1890 = vld [vmem:[%s1862 + $0x6c] sm:$0xf]
        %v1891 = vld [vmem:[%s1862 + $0x70] sm:$0xf]
        %v1892 = vld [vmem:[%s1862 + $0x74] sm:$0xf]
        %v1893 = vld [vmem:[%s1862 + $0x78] sm:$0xf]
        %v1894 = vld [vmem:[%s1862 + $0x7c] sm:$0xf]
        %v1895 = vld [vmem:[%s1862 + $0x80] sm:$0xf]
        %v1896 = vld [vmem:[%s1862 + $0x84] sm:$0xf]
        %v1897 = vld [vmem:[%s1862 + $0x88] sm:$0xf]
        %v1898 = vld [vmem:[%s1862 + $0x8c] sm:$0xf]
        %v1899 = vld [vmem:[%s1862 + $0x90] sm:$0xf]
        %v1900 = vld [vmem:[%s1862 + $0x94] sm:$0xf]
        %v1901 = vld [vmem:[%s1862 + $0x98] sm:$0xf]
        %v1902 = vld [vmem:[%s1862 + $0x9c] sm:$0xf]
        %v1903 = vld [vmem:[%s1862 + $0xa0] sm:$0xf]
        %v1904 = vld [vmem:[%s1862 + $0xa4] sm:$0xf]
        %v1905 = vld [vmem:[%s1862 + $0xa8] sm:$0xf]
        %v1906 = vld [vmem:[%s1862 + $0xac] sm:$0xf]
        %v1907 = vld [vmem:[%s1862 + $0xb0] sm:$0xf]
        %v1908 = vld [vmem:[%s1862 + $0xb4] sm:$0xf]
        %v1909 = vld [vmem:[%s1862 + $0xb8] sm:$0xf]
        %v1910 = vld [vmem:[%s1862 + $0xbc] sm:$0xf]
        %v1959 = vunpack.c.l.b16 %v1863
        %v1960 = vunpack.c.l.b16 %v1864
        %v1961 = vunpack.c.l.b16 %v1865
        %v1962 = vunpack.c.l.b16 %v1866
        %v1963 = vunpack.c.l.b16 %v1867
        %v1964 = vunpack.c.l.b16 %v1868
        %v1965 = vunpack.c.l.b16 %v1869
        %v1966 = vunpack.c.l.b16 %v1870
        %v1967 = vunpack.c.l.b16 %v1871
        %v1968 = vunpack.c.l.b16 %v1872
        %v1969 = vunpack.c.l.b16 %v1873
        %v1970 = vunpack.c.l.b16 %v1874
        %v1971 = vunpack.c.l.b16 %v1875
        %v1972 = vunpack.c.l.b16 %v1876
        %v1973 = vunpack.c.l.b16 %v1877
        %v1974 = vunpack.c.l.b16 %v1878
        %v1975 = vunpack.c.l.b16 %v1879
        %v1976 = vunpack.c.l.b16 %v1880
        %v1977 = vunpack.c.l.b16 %v1881
        %v1978 = vunpack.c.l.b16 %v1882
        %v1979 = vunpack.c.l.b16 %v1883
        %v1980 = vunpack.c.l.b16 %v1884
        %v1981 = vunpack.c.l.b16 %v1885
        %v1982 = vunpack.c.l.b16 %v1886
        %v1983 = vunpack.c.l.b16 %v1887
        %v1984 = vunpack.c.l.b16 %v1888
        %v1985 = vunpack.c.l.b16 %v1889
        %v1986 = vunpack.c.l.b16 %v1890
        %v1987 = vunpack.c.l.b16 %v1891
        %v1988 = vunpack.c.l.b16 %v1892
        %v1989 = vunpack.c.l.b16 %v1893
        %v1990 = vunpack.c.l.b16 %v1894
        %v1991 = vunpack.c.l.b16 %v1895
        %v1992 = vunpack.c.l.b16 %v1896
        %v1993 = vunpack.c.l.b16 %v1897
        %v1994 = vunpack.c.l.b16 %v1898
        %v1995 = vunpack.c.l.b16 %v1899
        %v1996 = vunpack.c.l.b16 %v1900
        %v1997 = vunpack.c.l.b16 %v1901
        %v1998 = vunpack.c.l.b16 %v1902
        %v1999 = vunpack.c.l.b16 %v1903
        %v2000 = vunpack.c.l.b16 %v1904
        %v2001 = vunpack.c.l.b16 %v1905
        %v2002 = vunpack.c.l.b16 %v1906
        %v2003 = vunpack.c.l.b16 %v1907
        %v2004 = vunpack.c.l.b16 %v1908
        %v2005 = vunpack.c.l.b16 %v1909
        %v2006 = vunpack.c.l.b16 %v1910
        %v2007 = vpack.c.b16 %v1960, %v1959
        %v2008 = vpack.c.b16 %v1962, %v1961
        %v2009 = vpack.c.b16 %v1964, %v1963
        %v2010 = vpack.c.b16 %v1966, %v1965
        %v2011 = vpack.c.b16 %v1968, %v1967
        %v2012 = vpack.c.b16 %v1970, %v1969
        %v2013 = vpack.c.b16 %v1972, %v1971
        %v2014 = vpack.c.b16 %v1974, %v1973
        %v2015 = vpack.c.b16 %v1976, %v1975
        %v2016 = vpack.c.b16 %v1978, %v1977
        %v2017 = vpack.c.b16 %v1980, %v1979
        %v2018 = vpack.c.b16 %v1982, %v1981
        %v2019 = vpack.c.b16 %v1984, %v1983
        %v2020 = vpack.c.b16 %v1986, %v1985
        %v2021 = vpack.c.b16 %v1988, %v1987
        %v2022 = vpack.c.b16 %v1990, %v1989
        %v2023 = vpack.c.b16 %v1992, %v1991
        %v2024 = vpack.c.b16 %v1994, %v1993
        %v2025 = vpack.c.b16 %v1996, %v1995
        %v2026 = vpack.c.b16 %v1998, %v1997
        %v2027 = vpack.c.b16 %v2000, %v1999
        %v2028 = vpack.c.b16 %v2002, %v2001
        %v2029 = vpack.c.b16 %v2004, %v2003
        %v2030 = vpack.c.b16 %v2006, %v2005
        %2055 = vmatprep.subr.bf16.mxu0 0
        %2056 = vmatpush1.bf16.msra.mxu0 %v2007
        %2057 = vmatprep.subr.bf16.mxu0 0
        %2058 = vmatpush1.bf16.msra.mxu0 %v2008
        %2059 = vmatprep.subr.bf16.mxu0 0
        %2060 = vmatpush1.bf16.msra.mxu0 %v2009
        %2061 = vmatprep.subr.bf16.mxu0 0
        %2062 = vmatpush1.bf16.msra.mxu0 %v2010
        %2063 = vmatprep.subr.bf16.mxu0 0
        %2064 = vmatpush1.bf16.msra.mxu0 %v2011
        %2065 = vmatprep.subr.bf16.mxu0 0
        %2066 = vmatpush1.bf16.msra.mxu0 %v2012
        %2067 = vmatprep.subr.bf16.mxu0 0
        %2068 = vmatpush1.bf16.msra.mxu0 %v2013
        %2069 = vmatprep.subr.bf16.mxu0 0
        %2070 = vmatpush1.bf16.msra.mxu0 %v2014
        %2071 = vmatprep.subr.bf16.mxu0 0
        %2072 = vmatpush1.bf16.msra.mxu0 %v2015
        %2073 = vmatprep.subr.bf16.mxu0 0
        %2074 = vmatpush1.bf16.msra.mxu0 %v2016
        %2075 = vmatprep.subr.bf16.mxu0 0
        %2076 = vmatpush1.bf16.msra.mxu0 %v2017
        %2077 = vmatprep.subr.bf16.mxu0 0
        %2078 = vmatpush1.bf16.msra.mxu0 %v2018
        %2079 = vmatprep.subr.bf16.mxu0 0
        %2080 = vmatpush1.bf16.msra.mxu0 %v2019
        %2081 = vmatprep.subr.bf16.mxu0 0
        %2082 = vmatpush1.bf16.msra.mxu0 %v2020
        %2083 = vmatprep.subr.bf16.mxu0 0
        %2084 = vmatpush1.bf16.msra.mxu0 %v2021
        %2085 = vmatprep.subr.bf16.mxu0 0
        %2086 = vmatpush1.bf16.msra.mxu0 %v2022
        %2087 = vmatprep.mubr.bf16.mxu0 %v1767
        %2088 = vmatmul.mubr.bf16.gmra.mrb[0].mxu0 %v1766
        %v2089 = vpop.f32.mrb[0].mxu0
        %v2090 = vadd.f32 0.0, %v2089
        %v2091 = vpop.f32.mrb[0].mxu0
        %v2092 = vpop.f32.mrb[0].mxu0
        %v2093 = vadd.f32 0.0, %v2092
        %v2094 = vpop.f32.mrb[0].mxu0
        %2095 = vmatprep.mubr.bf16.mxu0 %v1770
        %2096 = vmatmul.mubr.bf16.gmra.mrb[0].mxu0 %v1769
        %v2097 = vpop.f32.mrb[0].mxu0
        %v2098 = vadd.f32 0.0, %v2097
        %v2099 = vpop.f32.mrb[0].mxu0
        %v2100 = vpop.f32.mrb[0].mxu0
        %v2101 = vadd.f32 0.0, %v2100
        %v2102 = vpop.f32.mrb[0].mxu0
        %2103 = vmatprep.mubr.bf16.mxu0 %v1773
        %2104 = vmatmul.mubr.bf16.gmra.mrb[0].mxu0 %v1772
        %v2105 = vpop.f32.mrb[0].mxu0
        %v2106 = vadd.f32 0.0, %v2105
        %v2107 = vpop.f32.mrb[0].mxu0
        %v2108 = vpop.f32.mrb[0].mxu0
        %v2109 = vadd.f32 0.0, %v2108
        %v2110 = vpop.f32.mrb[0].mxu0
        %2111 = vmatprep.mubr.bf16.mxu0 %v1776
        %2112 = vmatmul.mubr.bf16.gmra.mrb[0].mxu0 %v1775
        %v2113 = vpop.f32.mrb[0].mxu0
        %v2114 = vadd.f32 0.0, %v2113
        %v2115 = vpop.f32.mrb[0].mxu0
        %v2116 = vpop.f32.mrb[0].mxu0
        %v2117 = vadd.f32 0.0, %v2116
        %v2118 = vpop.f32.mrb[0].mxu0
        %2119 = vmatprep.mubr.bf16.mxu0 %v1779
        %2120 = vmatmul.mubr.bf16.gmra.mrb[0].mxu0 %v1778
        %v2121 = vpop.f32.mrb[0].mxu0
        %v2122 = vadd.f32 0.0, %v2121
        %v2123 = vpop.f32.mrb[0].mxu0
        %v2124 = vpop.f32.mrb[0].mxu0
        %v2125 = vadd.f32 0.0, %v2124
        %v2126 = vpop.f32.mrb[0].mxu0
        %2127 = vmatprep.mubr.bf16.mxu0 %v1782
        %2128 = vmatmul.mubr.bf16.gmra.mrb[0].mxu0 %v1781
        %v2129 = vpop.f32.mrb[0].mxu0
        %v2130 = vadd.f32 0.0, %v2129
        %v2131 = vpop.f32.mrb[0].mxu0
        %v2132 = vpop.f32.mrb[0].mxu0
        %v2133 = vadd.f32 0.0, %v2132
        %v2134 = vpop.f32.mrb[0].mxu0
        %2135 = vmatprep.mubr.bf16.mxu0 %v1785
        %2136 = vmatmul.mubr.bf16.gmra.mrb[0].mxu0 %v1784
        %v2137 = vpop.f32.mrb[0].mxu0
        %v2138 = vadd.f32 0.0, %v2137
        %v2139 = vpop.f32.mrb[0].mxu0
        %v2140 = vpop.f32.mrb[0].mxu0
        %v2141 = vadd.f32 0.0, %v2140
        %v2142 = vpop.f32.mrb[0].mxu0
        %2143 = vmatprep.mubr.bf16.mxu0 %v1788
        %2144 = vmatmul.mubr.bf16.gmra.mrb[0].mxu0 %v1787
        %v2145 = vpop.f32.mrb[0].mxu0
        %v2146 = vadd.f32 0.0, %v2145
        %v2147 = vpop.f32.mrb[0].mxu0
        %v2148 = vpop.f32.mrb[0].mxu0
        %v2149 = vadd.f32 0.0, %v2148
        %v2150 = vpop.f32.mrb[0].mxu0
        %2151 = vmatprep.mubr.bf16.mxu0 %v1791
        %2152 = vmatmul.mubr.bf16.gmra.mrb[0].mxu0 %v1790
        %v2153 = vpop.f32.mrb[0].mxu0
        %v2154 = vadd.f32 0.0, %v2153
        %v2155 = vpop.f32.mrb[0].mxu0
        %v2156 = vpop.f32.mrb[0].mxu0
        %v2157 = vadd.f32 0.0, %v2156
        %v2158 = vpop.f32.mrb[0].mxu0
        %2159 = vmatprep.mubr.bf16.mxu0 %v1794
        %2160 = vmatmul.mubr.bf16.gmra.mrb[0].mxu0 %v1793
        %v2161 = vpop.f32.mrb[0].mxu0
        %v2162 = vadd.f32 0.0, %v2161
        %v2163 = vpop.f32.mrb[0].mxu0
        %v2164 = vpop.f32.mrb[0].mxu0
        %v2165 = vadd.f32 0.0, %v2164
        %v2166 = vpop.f32.mrb[0].mxu0
        %2167 = vmatprep.mubr.bf16.mxu0 %v1797
        %2168 = vmatmul.mubr.bf16.gmra.mrb[0].mxu0 %v1796
        %v2169 = vpop.f32.mrb[0].mxu0
        %v2170 = vadd.f32 0.0, %v2169
        %v2171 = vpop.f32.mrb[0].mxu0
        %v2172 = vpop.f32.mrb[0].mxu0
        %v2173 = vadd.f32 0.0, %v2172
        %v2174 = vpop.f32.mrb[0].mxu0
        %2175 = vmatprep.mubr.bf16.mxu0 %v1800
        %2176 = vmatmul.mubr.bf16.gmra.mrb[0].mxu0 %v1799
        %v2177 = vpop.f32.mrb[0].mxu0
        %v2178 = vadd.f32 0.0, %v2177
        %v2179 = vpop.f32.mrb[0].mxu0
        %v2180 = vpop.f32.mrb[0].mxu0
        %v2181 = vadd.f32 0.0, %v2180
        %v2182 = vpop.f32.mrb[0].mxu0
        %2183 = vmatprep.mubr.bf16.mxu0 %v1803
        %2184 = vmatmul.mubr.bf16.gmra.mrb[0].mxu0 %v1802
        %v2185 = vpop.f32.mrb[0].mxu0
        %v2186 = vadd.f32 0.0, %v2185
        %v2187 = vpop.f32.mrb[0].mxu0
        %v2188 = vpop.f32.mrb[0].mxu0
        %v2189 = vadd.f32 0.0, %v2188
        %v2190 = vpop.f32.mrb[0].mxu0
        %2191 = vmatprep.mubr.bf16.mxu0 %v1806
        %2192 = vmatmul.mubr.bf16.gmra.mrb[0].mxu0 %v1805
        %v2193 = vpop.f32.mrb[0].mxu0
        %v2194 = vadd.f32 0.0, %v2193
        %v2195 = vpop.f32.mrb[0].mxu0
        %v2196 = vpop.f32.mrb[0].mxu0
        %v2197 = vadd.f32 0.0, %v2196
        %v2198 = vpop.f32.mrb[0].mxu0
        %2199 = vmatprep.mubr.bf16.mxu0 %v1809
        %2200 = vmatmul.mubr.bf16.gmra.mrb[0].mxu0 %v1808
        %v2201 = vpop.f32.mrb[0].mxu0
        %v2202 = vadd.f32 0.0, %v2201
        %v2203 = vpop.f32.mrb[0].mxu0
        %v2204 = vpop.f32.mrb[0].mxu0
        %v2205 = vadd.f32 0.0, %v2204
        %v2206 = vpop.f32.mrb[0].mxu0
        %2207 = vmatprep.mubr.bf16.mxu0 %v1860
        %2208 = vmatmul.mubr.bf16.gmra.mrb[0].mxu0 %v1859
        %v2209 = vpop.f32.mrb[0].mxu0
        %v2210 = vadd.f32 0.0, %v2209
        %v2211 = vpop.f32.mrb[0].mxu0
        %v2212 = vpop.f32.mrb[0].mxu0
        %v2213 = vadd.f32 0.0, %v2212
        %v2214 = vpop.f32.mrb[0].mxu0
        %2215 = vdwg.mxu0
        %2216 = vmatprep.subr.bf16.mxu0 0
        %2217 = vmatpush1.bf16.msra.mxu0 %v2023
        %2218 = vmatprep.subr.bf16.mxu0 0
        %2219 = vmatpush1.bf16.msra.mxu0 %v2024
        %2220 = vmatprep.subr.bf16.mxu0 0
        %2221 = vmatpush1.bf16.msra.mxu0 %v2025
        %2222 = vmatprep.subr.bf16.mxu0 0
        %2223 = vmatpush1.bf16.msra.mxu0 %v2026
        %2224 = vmatprep.subr.bf16.mxu0 0
        %2225 = vmatpush1.bf16.msra.mxu0 %v2027
        %2226 = vmatprep.subr.bf16.mxu0 0
        %2227 = vmatpush1.bf16.msra.mxu0 %v2028
        %2228 = vmatprep.subr.bf16.mxu0 0
        %2229 = vmatpush1.bf16.msra.mxu0 %v2029
        %2230 = vmatprep.subr.bf16.mxu0 0
        %2231 = vmatpush1.bf16.msra.mxu0 %v2030
        %2232 = vmatprep.subr.bf16.mxu0 0
        %2233 = vmatpush1.bf16.msra.mxu0 0
        %2234 = vmatprep.subr.bf16.mxu0 0
        %2235 = vmatpush1.bf16.msra.mxu0 0
        %2236 = vmatprep.subr.bf16.mxu0 0
        %2237 = vmatpush1.bf16.msra.mxu0 0
        %2238 = vmatprep.subr.bf16.mxu0 0
        %2239 = vmatpush1.bf16.msra.mxu0 0
        %2240 = vmatprep.subr.bf16.mxu0 0
        %2241 = vmatpush1.bf16.msra.mxu0 0
        %2242 = vmatprep.subr.bf16.mxu0 0
        %2243 = vmatpush1.bf16.msra.mxu0 0
        %2244 = vmatprep.subr.bf16.mxu0 0
        %2245 = vmatpush1.bf16.msra.mxu0 0
        %2246 = vmatprep.subr.bf16.mxu0 0
        %2247 = vmatpush1.bf16.msra.mxu0 0
        %2248 = vmatprep.mubr.bf16.mxu0 0
        %2249 = vmatmul.mubr.bf16.gmra.mrb[0].mxu0 %v1768
        %v2250 = vpop.f32.mrb[0].mxu0
        %v2251 = vadd.f32 %v2090, %v2250
        %v2252 = vpop.f32.mrb[0].mxu0
        %v2253 = vpop.f32.mrb[0].mxu0
        %v2254 = vadd.f32 %v2093, %v2253
        %v2255 = vpop.f32.mrb[0].mxu0
        %2256 = vmatprep.mubr.bf16.mxu0 0
        %2257 = vmatmul.mubr.bf16.gmra.mrb[0].mxu0 %v1771
        %v2258 = vpop.f32.mrb[0].mxu0
        %v2259 = vadd.f32 %v2098, %v2258
        %v2260 = vpop.f32.mrb[0].mxu0
        %v2261 = vpop.f32.mrb[0].mxu0
        %v2262 = vadd.f32 %v2101, %v2261
        %v2263 = vpop.f32.mrb[0].mxu0
        %2264 = vmatprep.mubr.bf16.mxu0 0
        %2265 = vmatmul.mubr.bf16.gmra.mrb[0].mxu0 %v1774
        %v2266 = vpop.f32.mrb[0].mxu0
        %v2267 = vadd.f32 %v2106, %v2266
        %v2268 = vpop.f32.mrb[0].mxu0
        %v2269 = vpop.f32.mrb[0].mxu0
        %v2270 = vadd.f32 %v2109, %v2269
        %v2271 = vpop.f32.mrb[0].mxu0
        %2272 = vmatprep.mubr.bf16.mxu0 0
        %2273 = vmatmul.mubr.bf16.gmra.mrb[0].mxu0 %v1777
        %v2274 = vpop.f32.mrb[0].mxu0
        %v2275 = vadd.f32 %v2114, %v2274
        %v2276 = vpop.f32.mrb[0].mxu0
        %v2277 = vpop.f32.mrb[0].mxu0
        %v2278 = vadd.f32 %v2117, %v2277
        %v2279 = vpop.f32.mrb[0].mxu0
        %2280 = vmatprep.mubr.bf16.mxu0 0
        %2281 = vmatmul.mubr.bf16.gmra.mrb[0].mxu0 %v1780
        %v2282 = vpop.f32.mrb[0].mxu0
        %v2283 = vadd.f32 %v2122, %v2282
        %v2284 = vpop.f32.mrb[0].mxu0
        %v2285 = vpop.f32.mrb[0].mxu0
        %v2286 = vadd.f32 %v2125, %v2285
        %v2287 = vpop.f32.mrb[0].mxu0
        %2288 = vmatprep.mubr.bf16.mxu0 0
        %2289 = vmatmul.mubr.bf16.gmra.mrb[0].mxu0 %v1783
        %v2290 = vpop.f32.mrb[0].mxu0
        %v2291 = vadd.f32 %v2130, %v2290
        %v2292 = vpop.f32.mrb[0].mxu0
        %v2293 = vpop.f32.mrb[0].mxu0
        %v2294 = vadd.f32 %v2133, %v2293
        %v2295 = vpop.f32.mrb[0].mxu0
        %2296 = vmatprep.mubr.bf16.mxu0 0
        %2297 = vmatmul.mubr.bf16.gmra.mrb[0].mxu0 %v1786
        %v2298 = vpop.f32.mrb[0].mxu0
        %v2299 = vadd.f32 %v2138, %v2298
        %v2300 = vpop.f32.mrb[0].mxu0
        %v2301 = vpop.f32.mrb[0].mxu0
        %v2302 = vadd.f32 %v2141, %v2301
        %v2303 = vpop.f32.mrb[0].mxu0
        %2304 = vmatprep.mubr.bf16.mxu0 0
        %2305 = vmatmul.mubr.bf16.gmra.mrb[0].mxu0 %v1789
        %v2306 = vpop.f32.mrb[0].mxu0
        %v2307 = vadd.f32 %v2146, %v2306
        %v2308 = vpop.f32.mrb[0].mxu0
        %v2309 = vpop.f32.mrb[0].mxu0
        %v2310 = vadd.f32 %v2149, %v2309
        %v2311 = vpop.f32.mrb[0].mxu0
        %2312 = vmatprep.mubr.bf16.mxu0 0
        %2313 = vmatmul.mubr.bf16.gmra.mrb[0].mxu0 %v1792
        %v2314 = vpop.f32.mrb[0].mxu0
        %v2315 = vadd.f32 %v2154, %v2314
        %v2316 = vpop.f32.mrb[0].mxu0
        %v2317 = vpop.f32.mrb[0].mxu0
        %v2318 = vadd.f32 %v2157, %v2317
        %v2319 = vpop.f32.mrb[0].mxu0
        %2320 = vmatprep.mubr.bf16.mxu0 0
        %2321 = vmatmul.mubr.bf16.gmra.mrb[0].mxu0 %v1795
        %v2322 = vpop.f32.mrb[0].mxu0
        %v2323 = vadd.f32 %v2162, %v2322
        %v2324 = vpop.f32.mrb[0].mxu0
        %v2325 = vpop.f32.mrb[0].mxu0
        %v2326 = vadd.f32 %v2165, %v2325
        %v2327 = vpop.f32.mrb[0].mxu0
        %2328 = vmatprep.mubr.bf16.mxu0 0
        %2329 = vmatmul.mubr.bf16.gmra.mrb[0].mxu0 %v1798
        %v2330 = vpop.f32.mrb[0].mxu0
        %v2331 = vadd.f32 %v2170, %v2330
        %v2332 = vpop.f32.mrb[0].mxu0
        %v2333 = vpop.f32.mrb[0].mxu0
        %v2334 = vadd.f32 %v2173, %v2333
        %v2335 = vpop.f32.mrb[0].mxu0
        %2336 = vmatprep.mubr.bf16.mxu0 0
        %2337 = vmatmul.mubr.bf16.gmra.mrb[0].mxu0 %v1801
        %v2338 = vpop.f32.mrb[0].mxu0
        %v2339 = vadd.f32 %v2178, %v2338
        %v2340 = vpop.f32.mrb[0].mxu0
        %v2341 = vpop.f32.mrb[0].mxu0
        %v2342 = vadd.f32 %v2181, %v2341
        %v2343 = vpop.f32.mrb[0].mxu0
        %2344 = vmatprep.mubr.bf16.mxu0 0
        %2345 = vmatmul.mubr.bf16.gmra.mrb[0].mxu0 %v1804
        %v2346 = vpop.f32.mrb[0].mxu0
        %v2347 = vadd.f32 %v2186, %v2346
        %v2348 = vpop.f32.mrb[0].mxu0
        %v2349 = vpop.f32.mrb[0].mxu0
        %v2350 = vadd.f32 %v2189, %v2349
        %v2351 = vpop.f32.mrb[0].mxu0
        %2352 = vmatprep.mubr.bf16.mxu0 0
        %2353 = vmatmul.mubr.bf16.gmra.mrb[0].mxu0 %v1807
        %v2354 = vpop.f32.mrb[0].mxu0
        %v2355 = vadd.f32 %v2194, %v2354
        %v2356 = vpop.f32.mrb[0].mxu0
        %v2357 = vpop.f32.mrb[0].mxu0
        %v2358 = vadd.f32 %v2197, %v2357
        %v2359 = vpop.f32.mrb[0].mxu0
        %2360 = vmatprep.mubr.bf16.mxu0 0
        %2361 = vmatmul.mubr.bf16.gmra.mrb[0].mxu0 %v1810
        %v2362 = vpop.f32.mrb[0].mxu0
        %v2363 = vadd.f32 %v2202, %v2362
        %v2364 = vpop.f32.mrb[0].mxu0
        %v2365 = vpop.f32.mrb[0].mxu0
        %v2366 = vadd.f32 %v2205, %v2365
        %v2367 = vpop.f32.mrb[0].mxu0
        %2368 = vmatprep.mubr.bf16.mxu0 0
        %2369 = vmatmul.mubr.bf16.gmra.mrb[0].mxu0 %v1861
        %v2370 = vpop.f32.mrb[0].mxu0
        %v2371 = vadd.f32 %v2210, %v2370
        %v2372 = vpop.f32.mrb[0].mxu0
        %v2373 = vpop.f32.mrb[0].mxu0
        %v2374 = vadd.f32 %v2213, %v2373
        %v2375 = vpop.f32.mrb[0].mxu0
        %2376 = vdwg.mxu0
        %v2425 = vunpack.c.l.b16 %v1811
        %v2426 = vunpack.c.l.b16 %v1812
        %v2427 = vunpack.c.l.b16 %v1813
        %v2428 = vunpack.c.l.b16 %v1814
        %v2429 = vunpack.c.l.b16 %v1815
        %v2430 = vunpack.c.l.b16 %v1816
        %v2431 = vunpack.c.l.b16 %v1817
        %v2432 = vunpack.c.l.b16 %v1818
        %v2433 = vunpack.c.l.b16 %v1819
        %v2434 = vunpack.c.l.b16 %v1820
        %v2435 = vunpack.c.l.b16 %v1821
        %v2436 = vunpack.c.l.b16 %v1822
        %v2437 = vunpack.c.l.b16 %v1823
        %v2438 = vunpack.c.l.b16 %v1824
        %v2439 = vunpack.c.l.b16 %v1825
        %v2440 = vunpack.c.l.b16 %v1826
        %v2441 = vunpack.c.l.b16 %v1827
        %v2442 = vunpack.c.l.b16 %v1828
        %v2443 = vunpack.c.l.b16 %v1829
        %v2444 = vunpack.c.l.b16 %v1830
        %v2445 = vunpack.c.l.b16 %v1831
        %v2446 = vunpack.c.l.b16 %v1832
        %v2447 = vunpack.c.l.b16 %v1833
        %v2448 = vunpack.c.l.b16 %v1834
        %v2449 = vunpack.c.l.b16 %v1835
        %v2450 = vunpack.c.l.b16 %v1836
        %v2451 = vunpack.c.l.b16 %v1837
        %v2452 = vunpack.c.l.b16 %v1838
        %v2453 = vunpack.c.l.b16 %v1839
        %v2454 = vunpack.c.l.b16 %v1840
        %v2455 = vunpack.c.l.b16 %v1841
        %v2456 = vunpack.c.l.b16 %v1842
        %v2457 = vunpack.c.l.b16 %v1843
        %v2458 = vunpack.c.l.b16 %v1844
        %v2459 = vunpack.c.l.b16 %v1845
        %v2460 = vunpack.c.l.b16 %v1846
        %v2461 = vunpack.c.l.b16 %v1847
        %v2462 = vunpack.c.l.b16 %v1848
        %v2463 = vunpack.c.l.b16 %v1849
        %v2464 = vunpack.c.l.b16 %v1850
        %v2465 = vunpack.c.l.b16 %v1851
        %v2466 = vunpack.c.l.b16 %v1852
        %v2467 = vunpack.c.l.b16 %v1853
        %v2468 = vunpack.c.l.b16 %v1854
        %v2469 = vunpack.c.l.b16 %v1855
        %v2470 = vunpack.c.l.b16 %v1856
        %v2471 = vunpack.c.l.b16 %v1857
        %v2472 = vunpack.c.l.b16 %v1858
        %v2473 = vpack.c.b16 %v2426, %v2425
        %v2474 = vpack.c.b16 %v2428, %v2427
        %v2475 = vpack.c.b16 %v2430, %v2429
        %v2476 = vpack.c.b16 %v2432, %v2431
        %v2477 = vpack.c.b16 %v2434, %v2433
        %v2478 = vpack.c.b16 %v2436, %v2435
        %v2479 = vpack.c.b16 %v2438, %v2437
        %v2480 = vpack.c.b16 %v2440, %v2439
        %v2481 = vpack.c.b16 %v2442, %v2441
        %v2482 = vpack.c.b16 %v2444, %v2443
        %v2483 = vpack.c.b16 %v2446, %v2445
        %v2484 = vpack.c.b16 %v2448, %v2447
        %v2485 = vpack.c.b16 %v2450, %v2449
        %v2486 = vpack.c.b16 %v2452, %v2451
        %v2487 = vpack.c.b16 %v2454, %v2453
        %v2488 = vpack.c.b16 %v2456, %v2455
        %v2489 = vpack.c.b16 %v2458, %v2457
        %v2490 = vpack.c.b16 %v2460, %v2459
        %v2491 = vpack.c.b16 %v2462, %v2461
        %v2492 = vpack.c.b16 %v2464, %v2463
        %v2493 = vpack.c.b16 %v2466, %v2465
        %v2494 = vpack.c.b16 %v2468, %v2467
        %v2495 = vpack.c.b16 %v2470, %v2469
        %v2496 = vpack.c.b16 %v2472, %v2471
        %2521 = vmatprep.subr.bf16.mxu0 0
        %2522 = vmatpush1.bf16.msra.mxu0 %v2473
        %2523 = vmatprep.subr.bf16.mxu0 0
        %2524 = vmatpush1.bf16.msra.mxu0 %v2474
        %2525 = vmatprep.subr.bf16.mxu0 0
        %2526 = vmatpush1.bf16.msra.mxu0 %v2475
        %2527 = vmatprep.subr.bf16.mxu0 0
        %2528 = vmatpush1.bf16.msra.mxu0 %v2476
        %2529 = vmatprep.subr.bf16.mxu0 0
        %2530 = vmatpush1.bf16.msra.mxu0 %v2477
        %2531 = vmatprep.subr.bf16.mxu0 0
        %2532 = vmatpush1.bf16.msra.mxu0 %v2478
        %2533 = vmatprep.subr.bf16.mxu0 0
        %2534 = vmatpush1.bf16.msra.mxu0 %v2479
        %2535 = vmatprep.subr.bf16.mxu0 0
        %2536 = vmatpush1.bf16.msra.mxu0 %v2480
        %2537 = vmatprep.subr.bf16.mxu0 0
        %2538 = vmatpush1.bf16.msra.mxu0 %v2481
        %2539 = vmatprep.subr.bf16.mxu0 0
        %2540 = vmatpush1.bf16.msra.mxu0 %v2482
        %2541 = vmatprep.subr.bf16.mxu0 0
        %2542 = vmatpush1.bf16.msra.mxu0 %v2483
        %2543 = vmatprep.subr.bf16.mxu0 0
        %2544 = vmatpush1.bf16.msra.mxu0 %v2484
        %2545 = vmatprep.subr.bf16.mxu0 0
        %2546 = vmatpush1.bf16.msra.mxu0 %v2485
        %2547 = vmatprep.subr.bf16.mxu0 0
        %2548 = vmatpush1.bf16.msra.mxu0 %v2486
        %2549 = vmatprep.subr.bf16.mxu0 0
        %2550 = vmatpush1.bf16.msra.mxu0 %v2487
        %2551 = vmatprep.subr.bf16.mxu0 0
        %2552 = vmatpush1.bf16.msra.mxu0 %v2488
        %2553 = vmatprep.mubr.bf16.mxu0 %v1764
        %2554 = vmatmul.mubr.bf16.gmra.mrb[0].mxu0 %v1763
        %v2555 = vpop.f32.mrb[0].mxu0
        %v2556 = vadd.f32 %v2251, %v2555
        %v2557 = vpop.f32.mrb[0].mxu0
        %v2558 = vpop.f32.mrb[0].mxu0
        %v2559 = vadd.f32 %v2254, %v2558
        %v2560 = vpop.f32.mrb[0].mxu0
        %2561 = vmatprep.mubr.bf16.mxu0 %v1767
        %2562 = vmatmul.mubr.bf16.gmra.mrb[0].mxu0 %v1766
        %v2563 = vpop.f32.mrb[0].mxu0
        %v2564 = vadd.f32 %v2259, %v2563
        %v2565 = vpop.f32.mrb[0].mxu0
        %v2566 = vpop.f32.mrb[0].mxu0
        %v2567 = vadd.f32 %v2262, %v2566
        %v2568 = vpop.f32.mrb[0].mxu0
        %2569 = vmatprep.mubr.bf16.mxu0 %v1770
        %2570 = vmatmul.mubr.bf16.gmra.mrb[0].mxu0 %v1769
        %v2571 = vpop.f32.mrb[0].mxu0
        %v2572 = vadd.f32 %v2267, %v2571
        %v2573 = vpop.f32.mrb[0].mxu0
        %v2574 = vpop.f32.mrb[0].mxu0
        %v2575 = vadd.f32 %v2270, %v2574
        %v2576 = vpop.f32.mrb[0].mxu0
        %2577 = vmatprep.mubr.bf16.mxu0 %v1773
        %2578 = vmatmul.mubr.bf16.gmra.mrb[0].mxu0 %v1772
        %v2579 = vpop.f32.mrb[0].mxu0
        %v2580 = vadd.f32 %v2275, %v2579
        %v2581 = vpop.f32.mrb[0].mxu0
        %v2582 = vpop.f32.mrb[0].mxu0
        %v2583 = vadd.f32 %v2278, %v2582
        %v2584 = vpop.f32.mrb[0].mxu0
        %2585 = vmatprep.mubr.bf16.mxu0 %v1776
        %2586 = vmatmul.mubr.bf16.gmra.mrb[0].mxu0 %v1775
        %v2587 = vpop.f32.mrb[0].mxu0
        %v2588 = vadd.f32 %v2283, %v2587
        %v2589 = vpop.f32.mrb[0].mxu0
        %v2590 = vpop.f32.mrb[0].mxu0
        %v2591 = vadd.f32 %v2286, %v2590
        %v2592 = vpop.f32.mrb[0].mxu0
        %2593 = vmatprep.mubr.bf16.mxu0 %v1779
        %2594 = vmatmul.mubr.bf16.gmra.mrb[0].mxu0 %v1778
        %v2595 = vpop.f32.mrb[0].mxu0
        %v2596 = vadd.f32 %v2291, %v2595
        %v2597 = vpop.f32.mrb[0].mxu0
        %v2598 = vpop.f32.mrb[0].mxu0
        %v2599 = vadd.f32 %v2294, %v2598
        %v2600 = vpop.f32.mrb[0].mxu0
        %2601 = vmatprep.mubr.bf16.mxu0 %v1782
        %2602 = vmatmul.mubr.bf16.gmra.mrb[0].mxu0 %v1781
        %v2603 = vpop.f32.mrb[0].mxu0
        %v2604 = vadd.f32 %v2299, %v2603
        %v2605 = vpop.f32.mrb[0].mxu0
        %v2606 = vpop.f32.mrb[0].mxu0
        %v2607 = vadd.f32 %v2302, %v2606
        %v2608 = vpop.f32.mrb[0].mxu0
        %2609 = vmatprep.mubr.bf16.mxu0 %v1785
        %2610 = vmatmul.mubr.bf16.gmra.mrb[0].mxu0 %v1784
        %v2611 = vpop.f32.mrb[0].mxu0
        %v2612 = vadd.f32 %v2307, %v2611
        %v2613 = vpop.f32.mrb[0].mxu0
        %v2614 = vpop.f32.mrb[0].mxu0
        %v2615 = vadd.f32 %v2310, %v2614
        %v2616 = vpop.f32.mrb[0].mxu0
        %2617 = vmatprep.mubr.bf16.mxu0 %v1788
        %2618 = vmatmul.mubr.bf16.gmra.mrb[0].mxu0 %v1787
        %v2619 = vpop.f32.mrb[0].mxu0
        %v2620 = vadd.f32 %v2315, %v2619
        %v2621 = vpop.f32.mrb[0].mxu0
        %v2622 = vpop.f32.mrb[0].mxu0
        %v2623 = vadd.f32 %v2318, %v2622
        %v2624 = vpop.f32.mrb[0].mxu0
        %2625 = vmatprep.mubr.bf16.mxu0 %v1791
        %2626 = vmatmul.mubr.bf16.gmra.mrb[0].mxu0 %v1790
        %v2627 = vpop.f32.mrb[0].mxu0
        %v2628 = vadd.f32 %v2323, %v2627
        %v2629 = vpop.f32.mrb[0].mxu0
        %v2630 = vpop.f32.mrb[0].mxu0
        %v2631 = vadd.f32 %v2326, %v2630
        %v2632 = vpop.f32.mrb[0].mxu0
        %2633 = vmatprep.mubr.bf16.mxu0 %v1794
        %2634 = vmatmul.mubr.bf16.gmra.mrb[0].mxu0 %v1793
        %v2635 = vpop.f32.mrb[0].mxu0
        %v2636 = vadd.f32 %v2331, %v2635
        %v2637 = vpop.f32.mrb[0].mxu0
        %v2638 = vpop.f32.mrb[0].mxu0
        %v2639 = vadd.f32 %v2334, %v2638
        %v2640 = vpop.f32.mrb[0].mxu0
        %2641 = vmatprep.mubr.bf16.mxu0 %v1797
        %2642 = vmatmul.mubr.bf16.gmra.mrb[0].mxu0 %v1796
        %v2643 = vpop.f32.mrb[0].mxu0
        %v2644 = vadd.f32 %v2339, %v2643
        %v2645 = vpop.f32.mrb[0].mxu0
        %v2646 = vpop.f32.mrb[0].mxu0
        %v2647 = vadd.f32 %v2342, %v2646
        %v2648 = vpop.f32.mrb[0].mxu0
        %2649 = vmatprep.mubr.bf16.mxu0 %v1800
        %2650 = vmatmul.mubr.bf16.gmra.mrb[0].mxu0 %v1799
        %v2651 = vpop.f32.mrb[0].mxu0
        %v2652 = vadd.f32 %v2347, %v2651
        %v2653 = vpop.f32.mrb[0].mxu0
        %v2654 = vpop.f32.mrb[0].mxu0
        %v2655 = vadd.f32 %v2350, %v2654
        %v2656 = vpop.f32.mrb[0].mxu0
        %2657 = vmatprep.mubr.bf16.mxu0 %v1803
        %2658 = vmatmul.mubr.bf16.gmra.mrb[0].mxu0 %v1802
        %v2659 = vpop.f32.mrb[0].mxu0
        %v2660 = vadd.f32 %v2355, %v2659
        %v2661 = vpop.f32.mrb[0].mxu0
        %v2662 = vpop.f32.mrb[0].mxu0
        %v2663 = vadd.f32 %v2358, %v2662
        %v2664 = vpop.f32.mrb[0].mxu0
        %2665 = vmatprep.mubr.bf16.mxu0 %v1806
        %2666 = vmatmul.mubr.bf16.gmra.mrb[0].mxu0 %v1805
        %v2667 = vpop.f32.mrb[0].mxu0
        %v2668 = vadd.f32 %v2363, %v2667
        %v2669 = vpop.f32.mrb[0].mxu0
        %v2670 = vpop.f32.mrb[0].mxu0
        %v2671 = vadd.f32 %v2366, %v2670
        %v2672 = vpop.f32.mrb[0].mxu0
        %2673 = vmatprep.mubr.bf16.mxu0 %v1809
        %2674 = vmatmul.mubr.bf16.gmra.mrb[0].mxu0 %v1808
        %v2675 = vpop.f32.mrb[0].mxu0
        %v2676 = vadd.f32 %v2371, %v2675
        %v2677 = vpop.f32.mrb[0].mxu0
        %v2678 = vpop.f32.mrb[0].mxu0
        %v2679 = vadd.f32 %v2374, %v2678
        %v2680 = vpop.f32.mrb[0].mxu0
        %2681 = vdwg.mxu0
        %2682 = vmatprep.subr.bf16.mxu0 0
        %2683 = vmatpush1.bf16.msra.mxu0 %v2489
        %2684 = vmatprep.subr.bf16.mxu0 0
        %2685 = vmatpush1.bf16.msra.mxu0 %v2490
        %2686 = vmatprep.subr.bf16.mxu0 0
        %2687 = vmatpush1.bf16.msra.mxu0 %v2491
        %2688 = vmatprep.subr.bf16.mxu0 0
        %2689 = vmatpush1.bf16.msra.mxu0 %v2492
        %2690 = vmatprep.subr.bf16.mxu0 0
        %2691 = vmatpush1.bf16.msra.mxu0 %v2493
        %2692 = vmatprep.subr.bf16.mxu0 0
        %2693 = vmatpush1.bf16.msra.mxu0 %v2494
        %2694 = vmatprep.subr.bf16.mxu0 0
        %2695 = vmatpush1.bf16.msra.mxu0 %v2495
        %2696 = vmatprep.subr.bf16.mxu0 0
        %2697 = vmatpush1.bf16.msra.mxu0 %v2496
        %2698 = vmatprep.subr.bf16.mxu0 0
        %2699 = vmatpush1.bf16.msra.mxu0 0
        %2700 = vmatprep.subr.bf16.mxu0 0
        %2701 = vmatpush1.bf16.msra.mxu0 0
        %2702 = vmatprep.subr.bf16.mxu0 0
        %2703 = vmatpush1.bf16.msra.mxu0 0
        %2704 = vmatprep.subr.bf16.mxu0 0
        %2705 = vmatpush1.bf16.msra.mxu0 0
        %2706 = vmatprep.subr.bf16.mxu0 0
        %2707 = vmatpush1.bf16.msra.mxu0 0
        %2708 = vmatprep.subr.bf16.mxu0 0
        %2709 = vmatpush1.bf16.msra.mxu0 0
        %2710 = vmatprep.subr.bf16.mxu0 0
        %2711 = vmatpush1.bf16.msra.mxu0 0
        %2712 = vmatprep.subr.bf16.mxu0 0
        %2713 = vmatpush1.bf16.msra.mxu0 0
        %2714 = vmatprep.mubr.bf16.mxu0 0
        %2715 = vmatmul.mubr.bf16.gmra.mrb[0].mxu0 %v1765
        %v2716 = vpop.f32.mrb[0].mxu0
        %v2717 = vadd.f32 %v2556, %v2716
        %v2718 = vpop.f32.mrb[0].mxu0
        %v2719 = vpop.f32.mrb[0].mxu0
        %v2720 = vadd.f32 %v2559, %v2719
        %v2721 = vpop.f32.mrb[0].mxu0
        %2722 = vmatprep.mubr.bf16.mxu0 0
        %2723 = vmatmul.mubr.bf16.gmra.mrb[0].mxu0 %v1768
        %v2724 = vpop.f32.mrb[0].mxu0
        %v2725 = vadd.f32 %v2564, %v2724
        %v2726 = vpop.f32.mrb[0].mxu0
        %v2727 = vpop.f32.mrb[0].mxu0
        %v2728 = vadd.f32 %v2567, %v2727
        %v2729 = vpop.f32.mrb[0].mxu0
        %2730 = vmatprep.mubr.bf16.mxu0 0
        %2731 = vmatmul.mubr.bf16.gmra.mrb[0].mxu0 %v1771
        %v2732 = vpop.f32.mrb[0].mxu0
        %v2733 = vadd.f32 %v2572, %v2732
        %v2734 = vpop.f32.mrb[0].mxu0
        %v2735 = vpop.f32.mrb[0].mxu0
        %v2736 = vadd.f32 %v2575, %v2735
        %v2737 = vpop.f32.mrb[0].mxu0
        %2738 = vmatprep.mubr.bf16.mxu0 0
        %2739 = vmatmul.mubr.bf16.gmra.mrb[0].mxu0 %v1774
        %v2740 = vpop.f32.mrb[0].mxu0
        %v2741 = vadd.f32 %v2580, %v2740
        %v2742 = vpop.f32.mrb[0].mxu0
        %v2743 = vpop.f32.mrb[0].mxu0
        %v2744 = vadd.f32 %v2583, %v2743
        %v2745 = vpop.f32.mrb[0].mxu0
        %2746 = vmatprep.mubr.bf16.mxu0 0
        %2747 = vmatmul.mubr.bf16.gmra.mrb[0].mxu0 %v1777
        %v2748 = vpop.f32.mrb[0].mxu0
        %v2749 = vadd.f32 %v2588, %v2748
        %v2750 = vpop.f32.mrb[0].mxu0
        %v2751 = vpop.f32.mrb[0].mxu0
        %v2752 = vadd.f32 %v2591, %v2751
        %v2753 = vpop.f32.mrb[0].mxu0
        %2754 = vmatprep.mubr.bf16.mxu0 0
        %2755 = vmatmul.mubr.bf16.gmra.mrb[0].mxu0 %v1780
        %v2756 = vpop.f32.mrb[0].mxu0
        %v2757 = vadd.f32 %v2596, %v2756
        %v2758 = vpop.f32.mrb[0].mxu0
        %v2759 = vpop.f32.mrb[0].mxu0
        %v2760 = vadd.f32 %v2599, %v2759
        %v2761 = vpop.f32.mrb[0].mxu0
        %2762 = vmatprep.mubr.bf16.mxu0 0
        %2763 = vmatmul.mubr.bf16.gmra.mrb[0].mxu0 %v1783
        %v2764 = vpop.f32.mrb[0].mxu0
        %v2765 = vadd.f32 %v2604, %v2764
        %v2766 = vpop.f32.mrb[0].mxu0
        %v2767 = vpop.f32.mrb[0].mxu0
        %v2768 = vadd.f32 %v2607, %v2767
        %v2769 = vpop.f32.mrb[0].mxu0
        %2770 = vmatprep.mubr.bf16.mxu0 0
        %2771 = vmatmul.mubr.bf16.gmra.mrb[0].mxu0 %v1786
        %v2772 = vpop.f32.mrb[0].mxu0
        %v2773 = vadd.f32 %v2612, %v2772
        %v2774 = vpop.f32.mrb[0].mxu0
        %v2775 = vpop.f32.mrb[0].mxu0
        %v2776 = vadd.f32 %v2615, %v2775
        %v2777 = vpop.f32.mrb[0].mxu0
        %2778 = vmatprep.mubr.bf16.mxu0 0
        %2779 = vmatmul.mubr.bf16.gmra.mrb[0].mxu0 %v1789
        %v2780 = vpop.f32.mrb[0].mxu0
        %v2781 = vadd.f32 %v2620, %v2780
        %v2782 = vpop.f32.mrb[0].mxu0
        %v2783 = vpop.f32.mrb[0].mxu0
        %v2784 = vadd.f32 %v2623, %v2783
        %v2785 = vpop.f32.mrb[0].mxu0
        %2786 = vmatprep.mubr.bf16.mxu0 0
        %2787 = vmatmul.mubr.bf16.gmra.mrb[0].mxu0 %v1792
        %v2788 = vpop.f32.mrb[0].mxu0
        %v2789 = vadd.f32 %v2628, %v2788
        %v2790 = vpop.f32.mrb[0].mxu0
        %v2791 = vpop.f32.mrb[0].mxu0
        %v2792 = vadd.f32 %v2631, %v2791
        %v2793 = vpop.f32.mrb[0].mxu0
        %2794 = vmatprep.mubr.bf16.mxu0 0
        %2795 = vmatmul.mubr.bf16.gmra.mrb[0].mxu0 %v1795
        %v2796 = vpop.f32.mrb[0].mxu0
        %v2797 = vadd.f32 %v2636, %v2796
        %v2798 = vpop.f32.mrb[0].mxu0
        %v2799 = vpop.f32.mrb[0].mxu0
        %v2800 = vadd.f32 %v2639, %v2799
        %v2801 = vpop.f32.mrb[0].mxu0
        %2802 = vmatprep.mubr.bf16.mxu0 0
        %2803 = vmatmul.mubr.bf16.gmra.mrb[0].mxu0 %v1798
        %v2804 = vpop.f32.mrb[0].mxu0
        %v2805 = vadd.f32 %v2644, %v2804
        %v2806 = vpop.f32.mrb[0].mxu0
        %v2807 = vpop.f32.mrb[0].mxu0
        %v2808 = vadd.f32 %v2647, %v2807
        %v2809 = vpop.f32.mrb[0].mxu0
        %2810 = vmatprep.mubr.bf16.mxu0 0
        %2811 = vmatmul.mubr.bf16.gmra.mrb[0].mxu0 %v1801
        %v2812 = vpop.f32.mrb[0].mxu0
        %v2813 = vadd.f32 %v2652, %v2812
        %v2814 = vpop.f32.mrb[0].mxu0
        %v2815 = vpop.f32.mrb[0].mxu0
        %v2816 = vadd.f32 %v2655, %v2815
        %v2817 = vpop.f32.mrb[0].mxu0
        %2818 = vmatprep.mubr.bf16.mxu0 0
        %2819 = vmatmul.mubr.bf16.gmra.mrb[0].mxu0 %v1804
        %v2820 = vpop.f32.mrb[0].mxu0
        %v2821 = vadd.f32 %v2660, %v2820
        %v2822 = vpop.f32.mrb[0].mxu0
        %v2823 = vpop.f32.mrb[0].mxu0
        %v2824 = vadd.f32 %v2663, %v2823
        %v2825 = vpop.f32.mrb[0].mxu0
        %2826 = vmatprep.mubr.bf16.mxu0 0
        %2827 = vmatmul.mubr.bf16.gmra.mrb[0].mxu0 %v1807
        %v2828 = vpop.f32.mrb[0].mxu0
        %v2829 = vadd.f32 %v2668, %v2828
        %v2830 = vpop.f32.mrb[0].mxu0
        %v2831 = vpop.f32.mrb[0].mxu0
        %v2832 = vadd.f32 %v2671, %v2831
        %v2833 = vpop.f32.mrb[0].mxu0
        %2834 = vmatprep.mubr.bf16.mxu0 0
        %2835 = vmatmul.mubr.bf16.gmra.mrb[0].mxu0 %v1810
        %v2836 = vpop.f32.mrb[0].mxu0
        %v2837 = vadd.f32 %v2676, %v2836
        %v2838 = vpop.f32.mrb[0].mxu0
        %v2839 = vpop.f32.mrb[0].mxu0
        %v2840 = vadd.f32 %v2679, %v2839
        %v2841 = vpop.f32.mrb[0].mxu0
        %2842 = vdwg.mxu0
        %v2843 = vld [vmem:[#allocation3 + $0x30] sm:$0xff]
        %v2844 = vld [vmem:[#allocation3 + $0x38] sm:$0xff]
        %v2845 = vld [vmem:[#allocation3 + $0x40] sm:$0xff]
        %v2846 = vld [vmem:[#allocation3 + $0x48] sm:$0xff]
        %v2847 = vld [vmem:[#allocation3 + $0x50] sm:$0xff]
        %v2848 = vld [vmem:[#allocation3 + $0x58] sm:$0xff]
        %v2849 = vld [vmem:[#allocation3 + $0x60] sm:$0xff]
        %v2850 = vld [vmem:[#allocation3 + $0x68] sm:$0xff]
        %v2851 = vld [vmem:[#allocation3 + $0x70] sm:$0xff]
        %v2852 = vld [vmem:[#allocation3 + $0x78] sm:$0xff]
        %v2853 = vld [vmem:[#allocation3 + $0x80] sm:$0xff]
        %v2854 = vld [vmem:[#allocation3 + $0x88] sm:$0xff]
        %v2855 = vld [vmem:[#allocation3 + $0x90] sm:$0xff]
        %v2856 = vld [vmem:[#allocation3 + $0x98] sm:$0xff]
        %v2857 = vld [vmem:[#allocation3 + $0xa0] sm:$0xff]
        %v2858 = vld [vmem:[#allocation3 + $0xa8] sm:$0xff]
        %v2859 = vld [vmem:[#allocation3 + $0xb0] sm:$0xff]
        %v2860 = vld [vmem:[#allocation3 + $0xb8] sm:$0xff]
        %v2861 = vld [vmem:[#allocation3 + $0xc0] sm:$0xff]
        %v2862 = vld [vmem:[#allocation3 + $0xc8] sm:$0xff]
        %v2863 = vld [vmem:[#allocation3 + $0xd0] sm:$0xff]
        %v2864 = vld [vmem:[#allocation3 + $0xd8] sm:$0xff]
        %v2865 = vld [vmem:[#allocation3 + $0xe0] sm:$0xff]
        %v2866 = vld [vmem:[#allocation3 + $0xe8] sm:$0xff]
        %v2867 = vld [vmem:[#allocation3 + $0xf0] sm:$0xff]
        %v2868 = vld [vmem:[#allocation3 + $0xf8] sm:$0xff]
        %v2869 = vld [vmem:[#allocation3 + $0x100] sm:$0xff]
        %v2870 = vld [vmem:[#allocation3 + $0x108] sm:$0xff]
        %v2871 = vld [vmem:[#allocation3 + $0x110] sm:$0xff]
        %v2872 = vld [vmem:[#allocation3 + $0x118] sm:$0xff]
        %v2873 = vld [vmem:[#allocation3 + $0x120] sm:$0xff]
        %v2874 = vld [vmem:[#allocation3 + $0x128] sm:$0xff]
        %v2875 = vld [vmem:[#allocation3 + $0x130] sm:$0xff]
        %v2876 = vld [vmem:[#allocation3 + $0x138] sm:$0xff]
        %v2877 = vld [vmem:[#allocation3 + $0x140] sm:$0xff]
        %v2878 = vld [vmem:[#allocation3 + $0x148] sm:$0xff]
        %v2879 = vld [vmem:[#allocation3 + $0x150] sm:$0xff]
        %v2880 = vld [vmem:[#allocation3 + $0x158] sm:$0xff]
        %v2881 = vld [vmem:[#allocation3 + $0x160] sm:$0xff]
        %v2882 = vld [vmem:[#allocation3 + $0x168] sm:$0xff]
        %v2883 = vld [vmem:[#allocation3 + $0x170] sm:$0xff]
        %v2884 = vld [vmem:[#allocation3 + $0x178] sm:$0xff]
        %v2885 = vld [vmem:[#allocation3 + $0x180] sm:$0xff]
        %v2886 = vld [vmem:[#allocation3 + $0x188] sm:$0xff]
        %v2887 = vld [vmem:[#allocation3 + $0x190] sm:$0xff]
        %v2888 = vld [vmem:[#allocation3 + $0x198] sm:$0xff]
        %v2889 = vld [vmem:[#allocation3 + $0x1a0] sm:$0xff]
        %v2890 = vld [vmem:[#allocation3 + $0x1a8] sm:$0xff]
        %s2891 = scalar_lea.vmem %s1, 384
        %v2892 = vld [vmem:[%s2891] sm:$0xf]
        %v2893 = vld [vmem:[%s2891 + $0x4] sm:$0xf]
        %v2894 = vld [vmem:[%s2891 + $0x8] sm:$0xf]
        %v2895 = vld [vmem:[%s2891 + $0xc] sm:$0xf]
        %v2896 = vld [vmem:[%s2891 + $0x10] sm:$0xf]
        %v2897 = vld [vmem:[%s2891 + $0x14] sm:$0xf]
        %v2898 = vld [vmem:[%s2891 + $0x18] sm:$0xf]
        %v2899 = vld [vmem:[%s2891 + $0x1c] sm:$0xf]
        %v2900 = vld [vmem:[%s2891 + $0x20] sm:$0xf]
        %v2901 = vld [vmem:[%s2891 + $0x24] sm:$0xf]
        %v2902 = vld [vmem:[%s2891 + $0x28] sm:$0xf]
        %v2903 = vld [vmem:[%s2891 + $0x2c] sm:$0xf]
        %v2904 = vld [vmem:[%s2891 + $0x30] sm:$0xf]
        %v2905 = vld [vmem:[%s2891 + $0x34] sm:$0xf]
        %v2906 = vld [vmem:[%s2891 + $0x38] sm:$0xf]
        %v2907 = vld [vmem:[%s2891 + $0x3c] sm:$0xf]
        %v2908 = vld [vmem:[%s2891 + $0x40] sm:$0xf]
        %v2909 = vld [vmem:[%s2891 + $0x44] sm:$0xf]
        %v2910 = vld [vmem:[%s2891 + $0x48] sm:$0xf]
        %v2911 = vld [vmem:[%s2891 + $0x4c] sm:$0xf]
        %v2912 = vld [vmem:[%s2891 + $0x50] sm:$0xf]
        %v2913 = vld [vmem:[%s2891 + $0x54] sm:$0xf]
        %v2914 = vld [vmem:[%s2891 + $0x58] sm:$0xf]
        %v2915 = vld [vmem:[%s2891 + $0x5c] sm:$0xf]
        %v2916 = vld [vmem:[%s2891 + $0x60] sm:$0xf]
        %v2917 = vld [vmem:[%s2891 + $0x64] sm:$0xf]
        %v2918 = vld [vmem:[%s2891 + $0x68] sm:$0xf]
        %v2919 = vld [vmem:[%s2891 + $0x6c] sm:$0xf]
        %v2920 = vld [vmem:[%s2891 + $0x70] sm:$0xf]
        %v2921 = vld [vmem:[%s2891 + $0x74] sm:$0xf]
        %v2922 = vld [vmem:[%s2891 + $0x78] sm:$0xf]
        %v2923 = vld [vmem:[%s2891 + $0x7c] sm:$0xf]
        %v2924 = vld [vmem:[%s2891 + $0x80] sm:$0xf]
        %v2925 = vld [vmem:[%s2891 + $0x84] sm:$0xf]
        %v2926 = vld [vmem:[%s2891 + $0x88] sm:$0xf]
        %v2927 = vld [vmem:[%s2891 + $0x8c] sm:$0xf]
        %v2928 = vld [vmem:[%s2891 + $0x90] sm:$0xf]
        %v2929 = vld [vmem:[%s2891 + $0x94] sm:$0xf]
        %v2930 = vld [vmem:[%s2891 + $0x98] sm:$0xf]
        %v2931 = vld [vmem:[%s2891 + $0x9c] sm:$0xf]
        %v2932 = vld [vmem:[%s2891 + $0xa0] sm:$0xf]
        %v2933 = vld [vmem:[%s2891 + $0xa4] sm:$0xf]
        %v2934 = vld [vmem:[%s2891 + $0xa8] sm:$0xf]
        %v2935 = vld [vmem:[%s2891 + $0xac] sm:$0xf]
        %v2936 = vld [vmem:[%s2891 + $0xb0] sm:$0xf]
        %v2937 = vld [vmem:[%s2891 + $0xb4] sm:$0xf]
        %v2938 = vld [vmem:[%s2891 + $0xb8] sm:$0xf]
        %v2939 = vld [vmem:[%s2891 + $0xbc] sm:$0xf]
        %v2988 = vunpack.c.l.b16 %v2892
        %v2989 = vunpack.c.l.b16 %v2893
        %v2990 = vunpack.c.l.b16 %v2894
        %v2991 = vunpack.c.l.b16 %v2895
        %v2992 = vunpack.c.l.b16 %v2896
        %v2993 = vunpack.c.l.b16 %v2897
        %v2994 = vunpack.c.l.b16 %v2898
        %v2995 = vunpack.c.l.b16 %v2899
        %v2996 = vunpack.c.l.b16 %v2900
        %v2997 = vunpack.c.l.b16 %v2901
        %v2998 = vunpack.c.l.b16 %v2902
        %v2999 = vunpack.c.l.b16 %v2903
        %v3000 = vunpack.c.l.b16 %v2904
        %v3001 = vunpack.c.l.b16 %v2905
        %v3002 = vunpack.c.l.b16 %v2906
        %v3003 = vunpack.c.l.b16 %v2907
        %v3004 = vunpack.c.l.b16 %v2908
        %v3005 = vunpack.c.l.b16 %v2909
        %v3006 = vunpack.c.l.b16 %v2910
        %v3007 = vunpack.c.l.b16 %v2911
        %v3008 = vunpack.c.l.b16 %v2912
        %v3009 = vunpack.c.l.b16 %v2913
        %v3010 = vunpack.c.l.b16 %v2914
        %v3011 = vunpack.c.l.b16 %v2915
        %v3012 = vunpack.c.l.b16 %v2916
        %v3013 = vunpack.c.l.b16 %v2917
        %v3014 = vunpack.c.l.b16 %v2918
        %v3015 = vunpack.c.l.b16 %v2919
        %v3016 = vunpack.c.l.b16 %v2920
        %v3017 = vunpack.c.l.b16 %v2921
        %v3018 = vunpack.c.l.b16 %v2922
        %v3019 = vunpack.c.l.b16 %v2923
        %v3020 = vunpack.c.l.b16 %v2924
        %v3021 = vunpack.c.l.b16 %v2925
        %v3022 = vunpack.c.l.b16 %v2926
        %v3023 = vunpack.c.l.b16 %v2927
        %v3024 = vunpack.c.l.b16 %v2928
        %v3025 = vunpack.c.l.b16 %v2929
        %v3026 = vunpack.c.l.b16 %v2930
        %v3027 = vunpack.c.l.b16 %v2931
        %v3028 = vunpack.c.l.b16 %v2932
        %v3029 = vunpack.c.l.b16 %v2933
        %v3030 = vunpack.c.l.b16 %v2934
        %v3031 = vunpack.c.l.b16 %v2935
        %v3032 = vunpack.c.l.b16 %v2936
        %v3033 = vunpack.c.l.b16 %v2937
        %v3034 = vunpack.c.l.b16 %v2938
        %v3035 = vunpack.c.l.b16 %v2939
        %v3036 = vpack.c.b16 %v2989, %v2988
        %v3037 = vpack.c.b16 %v2991, %v2990
        %v3038 = vpack.c.b16 %v2993, %v2992
        %v3039 = vpack.c.b16 %v2995, %v2994
        %v3040 = vpack.c.b16 %v2997, %v2996
        %v3041 = vpack.c.b16 %v2999, %v2998
        %v3042 = vpack.c.b16 %v3001, %v3000
        %v3043 = vpack.c.b16 %v3003, %v3002
        %v3044 = vpack.c.b16 %v3005, %v3004
        %v3045 = vpack.c.b16 %v3007, %v3006
        %v3046 = vpack.c.b16 %v3009, %v3008
        %v3047 = vpack.c.b16 %v3011, %v3010
        %v3048 = vpack.c.b16 %v3013, %v3012
        %v3049 = vpack.c.b16 %v3015, %v3014
        %v3050 = vpack.c.b16 %v3017, %v3016
        %v3051 = vpack.c.b16 %v3019, %v3018
        %v3052 = vpack.c.b16 %v3021, %v3020
        %v3053 = vpack.c.b16 %v3023, %v3022
        %v3054 = vpack.c.b16 %v3025, %v3024
        %v3055 = vpack.c.b16 %v3027, %v3026
        %v3056 = vpack.c.b16 %v3029, %v3028
        %v3057 = vpack.c.b16 %v3031, %v3030
        %v3058 = vpack.c.b16 %v3033, %v3032
        %v3059 = vpack.c.b16 %v3035, %v3034
        %3084 = vmatprep.subr.bf16.mxu0 0
        %3085 = vmatpush1.bf16.msra.mxu0 %v3036
        %3086 = vmatprep.subr.bf16.mxu0 0
        %3087 = vmatpush1.bf16.msra.mxu0 %v3037
        %3088 = vmatprep.subr.bf16.mxu0 0
        %3089 = vmatpush1.bf16.msra.mxu0 %v3038
        %3090 = vmatprep.subr.bf16.mxu0 0
        %3091 = vmatpush1.bf16.msra.mxu0 %v3039
        %3092 = vmatprep.subr.bf16.mxu0 0
        %3093 = vmatpush1.bf16.msra.mxu0 %v3040
        %3094 = vmatprep.subr.bf16.mxu0 0
        %3095 = vmatpush1.bf16.msra.mxu0 %v3041
        %3096 = vmatprep.subr.bf16.mxu0 0
        %3097 = vmatpush1.bf16.msra.mxu0 %v3042
        %3098 = vmatprep.subr.bf16.mxu0 0
        %3099 = vmatpush1.bf16.msra.mxu0 %v3043
        %3100 = vmatprep.subr.bf16.mxu0 0
        %3101 = vmatpush1.bf16.msra.mxu0 %v3044
        %3102 = vmatprep.subr.bf16.mxu0 0
        %3103 = vmatpush1.bf16.msra.mxu0 %v3045
        %3104 = vmatprep.subr.bf16.mxu0 0
        %3105 = vmatpush1.bf16.msra.mxu0 %v3046
        %3106 = vmatprep.subr.bf16.mxu0 0
        %3107 = vmatpush1.bf16.msra.mxu0 %v3047
        %3108 = vmatprep.subr.bf16.mxu0 0
        %3109 = vmatpush1.bf16.msra.mxu0 %v3048
        %3110 = vmatprep.subr.bf16.mxu0 0
        %3111 = vmatpush1.bf16.msra.mxu0 %v3049
        %3112 = vmatprep.subr.bf16.mxu0 0
        %3113 = vmatpush1.bf16.msra.mxu0 %v3050
        %3114 = vmatprep.subr.bf16.mxu0 0
        %3115 = vmatpush1.bf16.msra.mxu0 %v3051
        %3116 = vmatprep.mubr.bf16.mxu0 %v2844
        %3117 = vmatmul.mubr.bf16.gmra.mrb[0].mxu0 %v2843
        %v3118 = vpop.f32.mrb[0].mxu0
        %v3119 = vadd.f32 0.0, %v3118
        %v3120 = vpop.f32.mrb[0].mxu0
        %v3121 = vpop.f32.mrb[0].mxu0
        %v3122 = vadd.f32 0.0, %v3121
        %v3123 = vpop.f32.mrb[0].mxu0
        %3124 = vmatprep.mubr.bf16.mxu0 %v2847
        %3125 = vmatmul.mubr.bf16.gmra.mrb[0].mxu0 %v2846
        %v3126 = vpop.f32.mrb[0].mxu0
        %v3127 = vadd.f32 0.0, %v3126
        %v3128 = vpop.f32.mrb[0].mxu0
        %v3129 = vpop.f32.mrb[0].mxu0
        %v3130 = vadd.f32 0.0, %v3129
        %v3131 = vpop.f32.mrb[0].mxu0
        %3132 = vmatprep.mubr.bf16.mxu0 %v2850
        %3133 = vmatmul.mubr.bf16.gmra.mrb[0].mxu0 %v2849
        %v3134 = vpop.f32.mrb[0].mxu0
        %v3135 = vadd.f32 0.0, %v3134
        %v3136 = vpop.f32.mrb[0].mxu0
        %v3137 = vpop.f32.mrb[0].mxu0
        %v3138 = vadd.f32 0.0, %v3137
        %v3139 = vpop.f32.mrb[0].mxu0
        %3140 = vmatprep.mubr.bf16.mxu0 %v2853
        %3141 = vmatmul.mubr.bf16.gmra.mrb[0].mxu0 %v2852
        %v3142 = vpop.f32.mrb[0].mxu0
        %v3143 = vadd.f32 0.0, %v3142
        %v3144 = vpop.f32.mrb[0].mxu0
        %v3145 = vpop.f32.mrb[0].mxu0
        %v3146 = vadd.f32 0.0, %v3145
        %v3147 = vpop.f32.mrb[0].mxu0
        %3148 = vmatprep.mubr.bf16.mxu0 %v2856
        %3149 = vmatmul.mubr.bf16.gmra.mrb[0].mxu0 %v2855
        %v3150 = vpop.f32.mrb[0].mxu0
        %v3151 = vadd.f32 0.0, %v3150
        %v3152 = vpop.f32.mrb[0].mxu0
        %v3153 = vpop.f32.mrb[0].mxu0
        %v3154 = vadd.f32 0.0, %v3153
        %v3155 = vpop.f32.mrb[0].mxu0
        %3156 = vmatprep.mubr.bf16.mxu0 %v2859
        %3157 = vmatmul.mubr.bf16.gmra.mrb[0].mxu0 %v2858
        %v3158 = vpop.f32.mrb[0].mxu0
        %v3159 = vadd.f32 0.0, %v3158
        %v3160 = vpop.f32.mrb[0].mxu0
        %v3161 = vpop.f32.mrb[0].mxu0
        %v3162 = vadd.f32 0.0, %v3161
        %v3163 = vpop.f32.mrb[0].mxu0
        %3164 = vmatprep.mubr.bf16.mxu0 %v2862
        %3165 = vmatmul.mubr.bf16.gmra.mrb[0].mxu0 %v2861
        %v3166 = vpop.f32.mrb[0].mxu0
        %v3167 = vadd.f32 0.0, %v3166
        %v3168 = vpop.f32.mrb[0].mxu0
        %v3169 = vpop.f32.mrb[0].mxu0
        %v3170 = vadd.f32 0.0, %v3169
        %v3171 = vpop.f32.mrb[0].mxu0
        %3172 = vmatprep.mubr.bf16.mxu0 %v2865
        %3173 = vmatmul.mubr.bf16.gmra.mrb[0].mxu0 %v2864
        %v3174 = vpop.f32.mrb[0].mxu0
        %v3175 = vadd.f32 0.0, %v3174
        %v3176 = vpop.f32.mrb[0].mxu0
        %v3177 = vpop.f32.mrb[0].mxu0
        %v3178 = vadd.f32 0.0, %v3177
        %v3179 = vpop.f32.mrb[0].mxu0
        %3180 = vmatprep.mubr.bf16.mxu0 %v2868
        %3181 = vmatmul.mubr.bf16.gmra.mrb[0].mxu0 %v2867
        %v3182 = vpop.f32.mrb[0].mxu0
        %v3183 = vadd.f32 0.0, %v3182
        %v3184 = vpop.f32.mrb[0].mxu0
        %v3185 = vpop.f32.mrb[0].mxu0
        %v3186 = vadd.f32 0.0, %v3185
        %v3187 = vpop.f32.mrb[0].mxu0
        %3188 = vmatprep.mubr.bf16.mxu0 %v2871
        %3189 = vmatmul.mubr.bf16.gmra.mrb[0].mxu0 %v2870
        %v3190 = vpop.f32.mrb[0].mxu0
        %v3191 = vadd.f32 0.0, %v3190
        %v3192 = vpop.f32.mrb[0].mxu0
        %v3193 = vpop.f32.mrb[0].mxu0
        %v3194 = vadd.f32 0.0, %v3193
        %v3195 = vpop.f32.mrb[0].mxu0
        %3196 = vmatprep.mubr.bf16.mxu0 %v2874
        %3197 = vmatmul.mubr.bf16.gmra.mrb[0].mxu0 %v2873
        %v3198 = vpop.f32.mrb[0].mxu0
        %v3199 = vadd.f32 0.0, %v3198
        %v3200 = vpop.f32.mrb[0].mxu0
        %v3201 = vpop.f32.mrb[0].mxu0
        %v3202 = vadd.f32 0.0, %v3201
        %v3203 = vpop.f32.mrb[0].mxu0
        %3204 = vmatprep.mubr.bf16.mxu0 %v2877
        %3205 = vmatmul.mubr.bf16.gmra.mrb[0].mxu0 %v2876
        %v3206 = vpop.f32.mrb[0].mxu0
        %v3207 = vadd.f32 0.0, %v3206
        %v3208 = vpop.f32.mrb[0].mxu0
        %v3209 = vpop.f32.mrb[0].mxu0
        %v3210 = vadd.f32 0.0, %v3209
        %v3211 = vpop.f32.mrb[0].mxu0
        %3212 = vmatprep.mubr.bf16.mxu0 %v2880
        %3213 = vmatmul.mubr.bf16.gmra.mrb[0].mxu0 %v2879
        %v3214 = vpop.f32.mrb[0].mxu0
        %v3215 = vadd.f32 0.0, %v3214
        %v3216 = vpop.f32.mrb[0].mxu0
        %v3217 = vpop.f32.mrb[0].mxu0
        %v3218 = vadd.f32 0.0, %v3217
        %v3219 = vpop.f32.mrb[0].mxu0
        %3220 = vmatprep.mubr.bf16.mxu0 %v2883
        %3221 = vmatmul.mubr.bf16.gmra.mrb[0].mxu0 %v2882
        %v3222 = vpop.f32.mrb[0].mxu0
        %v3223 = vadd.f32 0.0, %v3222
        %v3224 = vpop.f32.mrb[0].mxu0
        %v3225 = vpop.f32.mrb[0].mxu0
        %v3226 = vadd.f32 0.0, %v3225
        %v3227 = vpop.f32.mrb[0].mxu0
        %3228 = vmatprep.mubr.bf16.mxu0 %v2886
        %3229 = vmatmul.mubr.bf16.gmra.mrb[0].mxu0 %v2885
        %v3230 = vpop.f32.mrb[0].mxu0
        %v3231 = vadd.f32 0.0, %v3230
        %v3232 = vpop.f32.mrb[0].mxu0
        %v3233 = vpop.f32.mrb[0].mxu0
        %v3234 = vadd.f32 0.0, %v3233
        %v3235 = vpop.f32.mrb[0].mxu0
        %3236 = vmatprep.mubr.bf16.mxu0 %v2889
        %3237 = vmatmul.mubr.bf16.gmra.mrb[0].mxu0 %v2888
        %v3238 = vpop.f32.mrb[0].mxu0
        %v3239 = vadd.f32 0.0, %v3238
        %v3240 = vpop.f32.mrb[0].mxu0
        %v3241 = vpop.f32.mrb[0].mxu0
        %v3242 = vadd.f32 0.0, %v3241
        %v3243 = vpop.f32.mrb[0].mxu0
        %3244 = vdwg.mxu0
        %3245 = vmatprep.subr.bf16.mxu0 0
        %3246 = vmatpush1.bf16.msra.mxu0 %v3052
        %3247 = vmatprep.subr.bf16.mxu0 0
        %3248 = vmatpush1.bf16.msra.mxu0 %v3053
        %3249 = vmatprep.subr.bf16.mxu0 0
        %3250 = vmatpush1.bf16.msra.mxu0 %v3054
        %3251 = vmatprep.subr.bf16.mxu0 0
        %3252 = vmatpush1.bf16.msra.mxu0 %v3055
        %3253 = vmatprep.subr.bf16.mxu0 0
        %3254 = vmatpush1.bf16.msra.mxu0 %v3056
        %3255 = vmatprep.subr.bf16.mxu0 0
        %3256 = vmatpush1.bf16.msra.mxu0 %v3057
        %3257 = vmatprep.subr.bf16.mxu0 0
        %3258 = vmatpush1.bf16.msra.mxu0 %v3058
        %3259 = vmatprep.subr.bf16.mxu0 0
        %3260 = vmatpush1.bf16.msra.mxu0 %v3059
        %3261 = vmatprep.subr.bf16.mxu0 0
        %3262 = vmatpush1.bf16.msra.mxu0 0
        %3263 = vmatprep.subr.bf16.mxu0 0
        %3264 = vmatpush1.bf16.msra.mxu0 0
        %3265 = vmatprep.subr.bf16.mxu0 0
        %3266 = vmatpush1.bf16.msra.mxu0 0
        %3267 = vmatprep.subr.bf16.mxu0 0
        %3268 = vmatpush1.bf16.msra.mxu0 0
        %3269 = vmatprep.subr.bf16.mxu0 0
        %3270 = vmatpush1.bf16.msra.mxu0 0
        %3271 = vmatprep.subr.bf16.mxu0 0
        %3272 = vmatpush1.bf16.msra.mxu0 0
        %3273 = vmatprep.subr.bf16.mxu0 0
        %3274 = vmatpush1.bf16.msra.mxu0 0
        %3275 = vmatprep.subr.bf16.mxu0 0
        %3276 = vmatpush1.bf16.msra.mxu0 0
        %3277 = vmatprep.mubr.bf16.mxu0 0
        %3278 = vmatmul.mubr.bf16.gmra.mrb[0].mxu0 %v2845
        %v3279 = vpop.f32.mrb[0].mxu0
        %v3280 = vadd.f32 %v3119, %v3279
        %v3281 = vpop.f32.mrb[0].mxu0
        %v3282 = vpop.f32.mrb[0].mxu0
        %v3283 = vadd.f32 %v3122, %v3282
        %v3284 = vpop.f32.mrb[0].mxu0
        %3285 = vmatprep.mubr.bf16.mxu0 0
        %3286 = vmatmul.mubr.bf16.gmra.mrb[0].mxu0 %v2848
        %v3287 = vpop.f32.mrb[0].mxu0
        %v3288 = vadd.f32 %v3127, %v3287
        %v3289 = vpop.f32.mrb[0].mxu0
        %v3290 = vpop.f32.mrb[0].mxu0
        %v3291 = vadd.f32 %v3130, %v3290
        %v3292 = vpop.f32.mrb[0].mxu0
        %3293 = vmatprep.mubr.bf16.mxu0 0
        %3294 = vmatmul.mubr.bf16.gmra.mrb[0].mxu0 %v2851
        %v3295 = vpop.f32.mrb[0].mxu0
        %v3296 = vadd.f32 %v3135, %v3295
        %v3297 = vpop.f32.mrb[0].mxu0
        %v3298 = vpop.f32.mrb[0].mxu0
        %v3299 = vadd.f32 %v3138, %v3298
        %v3300 = vpop.f32.mrb[0].mxu0
        %3301 = vmatprep.mubr.bf16.mxu0 0
        %3302 = vmatmul.mubr.bf16.gmra.mrb[0].mxu0 %v2854
        %v3303 = vpop.f32.mrb[0].mxu0
        %v3304 = vadd.f32 %v3143, %v3303
        %v3305 = vpop.f32.mrb[0].mxu0
        %v3306 = vpop.f32.mrb[0].mxu0
        %v3307 = vadd.f32 %v3146, %v3306
        %v3308 = vpop.f32.mrb[0].mxu0
        %3309 = vmatprep.mubr.bf16.mxu0 0
        %3310 = vmatmul.mubr.bf16.gmra.mrb[0].mxu0 %v2857
        %v3311 = vpop.f32.mrb[0].mxu0
        %v3312 = vadd.f32 %v3151, %v3311
        %v3313 = vpop.f32.mrb[0].mxu0
        %v3314 = vpop.f32.mrb[0].mxu0
        %v3315 = vadd.f32 %v3154, %v3314
        %v3316 = vpop.f32.mrb[0].mxu0
        %3317 = vmatprep.mubr.bf16.mxu0 0
        %3318 = vmatmul.mubr.bf16.gmra.mrb[0].mxu0 %v2860
        %v3319 = vpop.f32.mrb[0].mxu0
        %v3320 = vadd.f32 %v3159, %v3319
        %v3321 = vpop.f32.mrb[0].mxu0
        %v3322 = vpop.f32.mrb[0].mxu0
        %v3323 = vadd.f32 %v3162, %v3322
        %v3324 = vpop.f32.mrb[0].mxu0
        %3325 = vmatprep.mubr.bf16.mxu0 0
        %3326 = vmatmul.mubr.bf16.gmra.mrb[0].mxu0 %v2863
        %v3327 = vpop.f32.mrb[0].mxu0
        %v3328 = vadd.f32 %v3167, %v3327
        %v3329 = vpop.f32.mrb[0].mxu0
        %v3330 = vpop.f32.mrb[0].mxu0
        %v3331 = vadd.f32 %v3170, %v3330
        %v3332 = vpop.f32.mrb[0].mxu0
        %3333 = vmatprep.mubr.bf16.mxu0 0
        %3334 = vmatmul.mubr.bf16.gmra.mrb[0].mxu0 %v2866
        %v3335 = vpop.f32.mrb[0].mxu0
        %v3336 = vadd.f32 %v3175, %v3335
        %v3337 = vpop.f32.mrb[0].mxu0
        %v3338 = vpop.f32.mrb[0].mxu0
        %v3339 = vadd.f32 %v3178, %v3338
        %v3340 = vpop.f32.mrb[0].mxu0
        %3341 = vmatprep.mubr.bf16.mxu0 0
        %3342 = vmatmul.mubr.bf16.gmra.mrb[0].mxu0 %v2869
        %v3343 = vpop.f32.mrb[0].mxu0
        %v3344 = vadd.f32 %v3183, %v3343
        %v3345 = vpop.f32.mrb[0].mxu0
        %v3346 = vpop.f32.mrb[0].mxu0
        %v3347 = vadd.f32 %v3186, %v3346
        %v3348 = vpop.f32.mrb[0].mxu0
        %3349 = vmatprep.mubr.bf16.mxu0 0
        %3350 = vmatmul.mubr.bf16.gmra.mrb[0].mxu0 %v2872
        %v3351 = vpop.f32.mrb[0].mxu0
        %v3352 = vadd.f32 %v3191, %v3351
        %v3353 = vpop.f32.mrb[0].mxu0
        %v3354 = vpop.f32.mrb[0].mxu0
        %v3355 = vadd.f32 %v3194, %v3354
        %v3356 = vpop.f32.mrb[0].mxu0
        %3357 = vmatprep.mubr.bf16.mxu0 0
        %3358 = vmatmul.mubr.bf16.gmra.mrb[0].mxu0 %v2875
        %v3359 = vpop.f32.mrb[0].mxu0
        %v3360 = vadd.f32 %v3199, %v3359
        %v3361 = vpop.f32.mrb[0].mxu0
        %v3362 = vpop.f32.mrb[0].mxu0
        %v3363 = vadd.f32 %v3202, %v3362
        %v3364 = vpop.f32.mrb[0].mxu0
        %3365 = vmatprep.mubr.bf16.mxu0 0
        %3366 = vmatmul.mubr.bf16.gmra.mrb[0].mxu0 %v2878
        %v3367 = vpop.f32.mrb[0].mxu0
        %v3368 = vadd.f32 %v3207, %v3367
        %v3369 = vpop.f32.mrb[0].mxu0
        %v3370 = vpop.f32.mrb[0].mxu0
        %v3371 = vadd.f32 %v3210, %v3370
        %v3372 = vpop.f32.mrb[0].mxu0
        %3373 = vmatprep.mubr.bf16.mxu0 0
        %3374 = vmatmul.mubr.bf16.gmra.mrb[0].mxu0 %v2881
        %v3375 = vpop.f32.mrb[0].mxu0
        %v3376 = vadd.f32 %v3215, %v3375
        %v3377 = vpop.f32.mrb[0].mxu0
        %v3378 = vpop.f32.mrb[0].mxu0
        %v3379 = vadd.f32 %v3218, %v3378
        %v3380 = vpop.f32.mrb[0].mxu0
        %3381 = vmatprep.mubr.bf16.mxu0 0
        %3382 = vmatmul.mubr.bf16.gmra.mrb[0].mxu0 %v2884
        %v3383 = vpop.f32.mrb[0].mxu0
        %v3384 = vadd.f32 %v3223, %v3383
        %v3385 = vpop.f32.mrb[0].mxu0
        %v3386 = vpop.f32.mrb[0].mxu0
        %v3387 = vadd.f32 %v3226, %v3386
        %v3388 = vpop.f32.mrb[0].mxu0
        %3389 = vmatprep.mubr.bf16.mxu0 0
        %3390 = vmatmul.mubr.bf16.gmra.mrb[0].mxu0 %v2887
        %v3391 = vpop.f32.mrb[0].mxu0
        %v3392 = vadd.f32 %v3231, %v3391
        %v3393 = vpop.f32.mrb[0].mxu0
        %v3394 = vpop.f32.mrb[0].mxu0
        %v3395 = vadd.f32 %v3234, %v3394
        %v3396 = vpop.f32.mrb[0].mxu0
        %3397 = vmatprep.mubr.bf16.mxu0 0
        %3398 = vmatmul.mubr.bf16.gmra.mrb[0].mxu0 %v2890
        %v3399 = vpop.f32.mrb[0].mxu0
        %v3400 = vadd.f32 %v3239, %v3399
        %v3401 = vpop.f32.mrb[0].mxu0
        %v3402 = vpop.f32.mrb[0].mxu0
        %v3403 = vadd.f32 %v3242, %v3402
        %v3404 = vpop.f32.mrb[0].mxu0
        %3405 = vdwg.mxu0
        %v3406 = vadd.f32 %v2717, %v3280
        %v3407 = vadd.f32 %v2720, %v3283
        %v3408 = vadd.f32 %v2725, %v3288
        %v3409 = vadd.f32 %v2728, %v3291
        %v3410 = vadd.f32 %v2733, %v3296
        %v3411 = vadd.f32 %v2736, %v3299
        %v3412 = vadd.f32 %v2741, %v3304
        %v3413 = vadd.f32 %v2744, %v3307
        %v3414 = vadd.f32 %v2749, %v3312
        %v3415 = vadd.f32 %v2752, %v3315
        %v3416 = vadd.f32 %v2757, %v3320
        %v3417 = vadd.f32 %v2760, %v3323
        %v3418 = vadd.f32 %v2765, %v3328
        %v3419 = vadd.f32 %v2768, %v3331
        %v3420 = vadd.f32 %v2773, %v3336
        %v3421 = vadd.f32 %v2776, %v3339
        %v3422 = vadd.f32 %v2781, %v3344
        %v3423 = vadd.f32 %v2784, %v3347
        %v3424 = vadd.f32 %v2789, %v3352
        %v3425 = vadd.f32 %v2792, %v3355
        %v3426 = vadd.f32 %v2797, %v3360
        %v3427 = vadd.f32 %v2800, %v3363
        %v3428 = vadd.f32 %v2805, %v3368
        %v3429 = vadd.f32 %v2808, %v3371
        %v3430 = vadd.f32 %v2813, %v3376
        %v3431 = vadd.f32 %v2816, %v3379
        %v3432 = vadd.f32 %v2821, %v3384
        %v3433 = vadd.f32 %v2824, %v3387
        %v3434 = vadd.f32 %v2829, %v3392
        %v3435 = vadd.f32 %v2832, %v3395
        %v3436 = vadd.f32 %v2837, %v3400
        %v3437 = vadd.f32 %v2840, %v3403
        %v3439 = vlaneseq
        %v3440 = vshrl.u32 %v3439, 7
        %v3441 = vsub.s32 0, %v3440
        %v3442 = vrot.slane %v577, %v3441
        %v3444 = vmul.f32 %v3406, %v3442
        %v3445 = vmul.f32 %v3407, %v3442
        %v3446 = vmul.f32 %v3408, %v3442
        %v3447 = vmul.f32 %v3409, %v3442
        %v3448 = vmul.f32 %v3410, %v3442
        %v3449 = vmul.f32 %v3411, %v3442
        %v3450 = vmul.f32 %v3412, %v3442
        %v3451 = vmul.f32 %v3413, %v3442
        %v3452 = vmul.f32 %v3414, %v3442
        %v3453 = vmul.f32 %v3415, %v3442
        %v3454 = vmul.f32 %v3416, %v3442
        %v3455 = vmul.f32 %v3417, %v3442
        %v3456 = vmul.f32 %v3418, %v3442
        %v3457 = vmul.f32 %v3419, %v3442
        %v3458 = vmul.f32 %v3420, %v3442
        %v3459 = vmul.f32 %v3421, %v3442
        %v3460 = vmul.f32 %v3422, %v3442
        %v3461 = vmul.f32 %v3423, %v3442
        %v3462 = vmul.f32 %v3424, %v3442
        %v3463 = vmul.f32 %v3425, %v3442
        %v3464 = vmul.f32 %v3426, %v3442
        %v3465 = vmul.f32 %v3427, %v3442
        %v3466 = vmul.f32 %v3428, %v3442
        %v3467 = vmul.f32 %v3429, %v3442
        %v3468 = vmul.f32 %v3430, %v3442
        %v3469 = vmul.f32 %v3431, %v3442
        %v3470 = vmul.f32 %v3432, %v3442
        %v3471 = vmul.f32 %v3433, %v3442
        %v3472 = vmul.f32 %v3434, %v3442
        %v3473 = vmul.f32 %v3435, %v3442
        %v3474 = vmul.f32 %v3436, %v3442
        %v3475 = vmul.f32 %v3437, %v3442
        %v3477 = vlaneseq
        %v3478 = vshrl.u32 %v3477, 7
        %v3479 = vsub.s32 0, %v3478
        %v3480 = vrot.slane %v578, %v3479
        %v3482 = vadd.f32 %v3444, %v3480
        %v3483 = vadd.f32 %v3445, %v3480
        %v3484 = vadd.f32 %v3446, %v3480
        %v3485 = vadd.f32 %v3447, %v3480
        %v3486 = vadd.f32 %v3448, %v3480
        %v3487 = vadd.f32 %v3449, %v3480
        %v3488 = vadd.f32 %v3450, %v3480
        %v3489 = vadd.f32 %v3451, %v3480
        %v3490 = vadd.f32 %v3452, %v3480
        %v3491 = vadd.f32 %v3453, %v3480
        %v3492 = vadd.f32 %v3454, %v3480
        %v3493 = vadd.f32 %v3455, %v3480
        %v3494 = vadd.f32 %v3456, %v3480
        %v3495 = vadd.f32 %v3457, %v3480
        %v3496 = vadd.f32 %v3458, %v3480
        %v3497 = vadd.f32 %v3459, %v3480
        %v3498 = vadd.f32 %v3460, %v3480
        %v3499 = vadd.f32 %v3461, %v3480
        %v3500 = vadd.f32 %v3462, %v3480
        %v3501 = vadd.f32 %v3463, %v3480
        %v3502 = vadd.f32 %v3464, %v3480
        %v3503 = vadd.f32 %v3465, %v3480
        %v3504 = vadd.f32 %v3466, %v3480
        %v3505 = vadd.f32 %v3467, %v3480
        %v3506 = vadd.f32 %v3468, %v3480
        %v3507 = vadd.f32 %v3469, %v3480
        %v3508 = vadd.f32 %v3470, %v3480
        %v3509 = vadd.f32 %v3471, %v3480
        %v3510 = vadd.f32 %v3472, %v3480
        %v3511 = vadd.f32 %v3473, %v3480
        %v3512 = vadd.f32 %v3474, %v3480
        %v3513 = vadd.f32 %v3475, %v3480
        %v3514 = vmax.f32 %v3482, 0.0
        %v3515 = vmax.f32 %v3483, 0.0
        %v3516 = vmax.f32 %v3484, 0.0
        %v3517 = vmax.f32 %v3485, 0.0
        %v3518 = vmax.f32 %v3486, 0.0
        %v3519 = vmax.f32 %v3487, 0.0
        %v3520 = vmax.f32 %v3488, 0.0
        %v3521 = vmax.f32 %v3489, 0.0
        %v3522 = vmax.f32 %v3490, 0.0
        %v3523 = vmax.f32 %v3491, 0.0
        %v3524 = vmax.f32 %v3492, 0.0
        %v3525 = vmax.f32 %v3493, 0.0
        %v3526 = vmax.f32 %v3494, 0.0
        %v3527 = vmax.f32 %v3495, 0.0
        %v3528 = vmax.f32 %v3496, 0.0
        %v3529 = vmax.f32 %v3497, 0.0
        %v3530 = vmax.f32 %v3498, 0.0
        %v3531 = vmax.f32 %v3499, 0.0
        %v3532 = vmax.f32 %v3500, 0.0
        %v3533 = vmax.f32 %v3501, 0.0
        %v3534 = vmax.f32 %v3502, 0.0
        %v3535 = vmax.f32 %v3503, 0.0
        %v3536 = vmax.f32 %v3504, 0.0
        %v3537 = vmax.f32 %v3505, 0.0
        %v3538 = vmax.f32 %v3506, 0.0
        %v3539 = vmax.f32 %v3507, 0.0
        %v3540 = vmax.f32 %v3508, 0.0
        %v3541 = vmax.f32 %v3509, 0.0
        %v3542 = vmax.f32 %v3510, 0.0
        %v3543 = vmax.f32 %v3511, 0.0
        %v3544 = vmax.f32 %v3512, 0.0
        %v3545 = vmax.f32 %v3513, 0.0
        %v3546 = vpack.c.bf16 %v3515, %v3514
        %v3547 = vpack.c.bf16 %v3517, %v3516
        %v3548 = vpack.c.bf16 %v3519, %v3518
        %v3549 = vpack.c.bf16 %v3521, %v3520
        %v3550 = vpack.c.bf16 %v3523, %v3522
        %v3551 = vpack.c.bf16 %v3525, %v3524
        %v3552 = vpack.c.bf16 %v3527, %v3526
        %v3553 = vpack.c.bf16 %v3529, %v3528
        %v3554 = vpack.c.bf16 %v3531, %v3530
        %v3555 = vpack.c.bf16 %v3533, %v3532
        %v3556 = vpack.c.bf16 %v3535, %v3534
        %v3557 = vpack.c.bf16 %v3537, %v3536
        %v3558 = vpack.c.bf16 %v3539, %v3538
        %v3559 = vpack.c.bf16 %v3541, %v3540
        %v3560 = vpack.c.bf16 %v3543, %v3542
        %v3561 = vpack.c.bf16 %v3545, %v3544
        %3562 = vst [vmem:[#allocation4 + $0x10] sm:$0xff] %v3546
        %3563 = vst [vmem:[#allocation4 + $0x18] sm:$0xff] %v3547
        %3564 = vst [vmem:[#allocation4 + $0x20] sm:$0xff] %v3548
        %3565 = vst [vmem:[#allocation4 + $0x28] sm:$0xff] %v3549
        %3566 = vst [vmem:[#allocation4 + $0x30] sm:$0xff] %v3550
        %3567 = vst [vmem:[#allocation4 + $0x38] sm:$0xff] %v3551
        %3568 = vst [vmem:[#allocation4 + $0x40] sm:$0xff] %v3552
        %3569 = vst [vmem:[#allocation4 + $0x48] sm:$0xff] %v3553
        %3570 = vst [vmem:[#allocation4 + $0x50] sm:$0xff] %v3554
        %3571 = vst [vmem:[#allocation4 + $0x58] sm:$0xff] %v3555
        %3572 = vst [vmem:[#allocation4 + $0x60] sm:$0xff] %v3556
        %3573 = vst [vmem:[#allocation4 + $0x68] sm:$0xff] %v3557
        %3574 = vst [vmem:[#allocation4 + $0x70] sm:$0xff] %v3558
        %3575 = vst [vmem:[#allocation4 + $0x78] sm:$0xff] %v3559
        %3576 = vst [vmem:[#allocation4 + $0x80] sm:$0xff] %v3560
        %3577 = vst [vmem:[#allocation4 + $0x88] sm:$0xff] %v3561
        %v3578 = vld [vmem:[%s5] sm:$0x1]
        %v3579 = vld [vmem:[%s6] sm:$0x1]
        %v3580 = vld [vmem:[#allocation4] sm:$0x80]
        %v3581 = vld [vmem:[#allocation4 + $0x8] sm:$0xff]
        %v3582 = vld [vmem:[#allocation4 + $0x10] sm:$0xff]
        %v3583 = vld [vmem:[#allocation4 + $0x18] sm:$0xff]
        %v3584 = vld [vmem:[#allocation4 + $0x20] sm:$0xff]
        %v3585 = vld [vmem:[#allocation4 + $0x28] sm:$0xff]
        %v3586 = vld [vmem:[#allocation4 + $0x30] sm:$0xff]
        %v3587 = vld [vmem:[#allocation4 + $0x38] sm:$0xff]
        %v3588 = vld [vmem:[#allocation4 + $0x40] sm:$0xff]
        %v3589 = vld [vmem:[#allocation4 + $0x48] sm:$0xff]
        %v3590 = vld [vmem:[#allocation4 + $0x50] sm:$0xff]
        %v3591 = vld [vmem:[#allocation4 + $0x58] sm:$0xff]
        %v3592 = vld [vmem:[#allocation4 + $0x60] sm:$0xff]
        %v3593 = vld [vmem:[#allocation4 + $0x68] sm:$0xff]
        %v3594 = vld [vmem:[#allocation4 + $0x70] sm:$0xff]
        %v3595 = vld [vmem:[#allocation4 + $0x78] sm:$0xff]
        %v3596 = vld [vmem:[#allocation4 + $0x80] sm:$0xff]
        %v3597 = vld [vmem:[#allocation4 + $0x88] sm:$0xff]
        %v3598 = vld [vmem:[#allocation4 + $0x90] sm:$0xff]
        %v3599 = vld [vmem:[#allocation4 + $0x8] sm:$0xff]
        %v3600 = vld [vmem:[#allocation4 + $0x10] sm:$0xff]
        %v3601 = vld [vmem:[#allocation4 + $0x18] sm:$0xff]
        %v3602 = vld [vmem:[#allocation4 + $0x20] sm:$0xff]
        %v3603 = vld [vmem:[#allocation4 + $0x28] sm:$0xff]
        %v3604 = vld [vmem:[#allocation4 + $0x30] sm:$0xff]
        %v3605 = vld [vmem:[#allocation4 + $0x38] sm:$0xff]
        %v3606 = vld [vmem:[#allocation4 + $0x40] sm:$0xff]
        %v3607 = vld [vmem:[#allocation4 + $0x48] sm:$0xff]
        %v3608 = vld [vmem:[#allocation4 + $0x50] sm:$0xff]
        %v3609 = vld [vmem:[#allocation4 + $0x58] sm:$0xff]
        %v3610 = vld [vmem:[#allocation4 + $0x60] sm:$0xff]
        %v3611 = vld [vmem:[#allocation4 + $0x68] sm:$0xff]
        %v3612 = vld [vmem:[#allocation4 + $0x70] sm:$0xff]
        %v3613 = vld [vmem:[#allocation4 + $0x78] sm:$0xff]
        %v3614 = vld [vmem:[#allocation4 + $0x80] sm:$0xff]
        %v3615 = vld [vmem:[#allocation4 + $0x88] sm:$0xff]
        %v3616 = vld [vmem:[#allocation4 + $0x90] sm:$0xff]
        %v3617 = vld [vmem:[#allocation4 + $0x98] sm:$0x1]
        %v3618 = vsel %vm959, %v3580, 0
        %v3619 = vsel %vm960, %v3581, 0
        %v3620 = vsel %vm961, %v3582, 0
        %v3621 = vsel %vm962, %v3583, 0
        %v3622 = vsel %vm963, %v3584, 0
        %v3623 = vsel %vm964, %v3585, 0
        %v3624 = vsel %vm965, %v3586, 0
        %v3625 = vsel %vm966, %v3587, 0
        %v3626 = vsel %vm967, %v3588, 0
        %v3627 = vsel %vm968, %v3589, 0
        %v3628 = vsel %vm969, %v3590, 0
        %v3629 = vsel %vm970, %v3591, 0
        %v3630 = vsel %vm971, %v3592, 0
        %v3631 = vsel %vm972, %v3593, 0
        %v3632 = vsel %vm973, %v3594, 0
        %v3633 = vsel %vm974, %v3595, 0
        %v3634 = vsel %vm975, %v3596, 0
        %v3635 = vsel %vm976, %v3597, 0
        %v3636 = vsel %vm977, %v3598, 0
        %v3638 = vshrl.u32 %v3618, 16
        %v3640 = vrot.slane %v3638, 7
        %v3642 = vshrl.u32 %v3619, 16
        %v3644 = vrot.slane %v3642, 7
        %v3645 = vshll.u32 %v3619, 16
        %v3647 = vor.u32 %v3644, %v3645
        %v3648 = vsel %vm997, %v3640, %v3647
        %v3650 = vshrl.u32 %v3620, 16
        %v3652 = vrot.slane %v3650, 7
        %v3653 = vshll.u32 %v3620, 16
        %v3655 = vor.u32 %v3652, %v3653
        %v3656 = vsel %vm997, %v3644, %v3655
        %v3658 = vshrl.u32 %v3621, 16
        %v3660 = vrot.slane %v3658, 7
        %v3661 = vshll.u32 %v3621, 16
        %v3663 = vor.u32 %v3660, %v3661
        %v3664 = vsel %vm997, %v3652, %v3663
        %v3666 = vshrl.u32 %v3622, 16
        %v3668 = vrot.slane %v3666, 7
        %v3669 = vshll.u32 %v3622, 16
        %v3671 = vor.u32 %v3668, %v3669
        %v3672 = vsel %vm997, %v3660, %v3671
        %v3674 = vshrl.u32 %v3623, 16
        %v3676 = vrot.slane %v3674, 7
        %v3677 = vshll.u32 %v3623, 16
        %v3679 = vor.u32 %v3676, %v3677
        %v3680 = vsel %vm997, %v3668, %v3679
        %v3682 = vshrl.u32 %v3624, 16
        %v3684 = vrot.slane %v3682, 7
        %v3685 = vshll.u32 %v3624, 16
        %v3687 = vor.u32 %v3684, %v3685
        %v3688 = vsel %vm997, %v3676, %v3687
        %v3690 = vshrl.u32 %v3625, 16
        %v3692 = vrot.slane %v3690, 7
        %v3693 = vshll.u32 %v3625, 16
        %v3695 = vor.u32 %v3692, %v3693
        %v3696 = vsel %vm997, %v3684, %v3695
        %v3698 = vshrl.u32 %v3626, 16
        %v3700 = vrot.slane %v3698, 7
        %v3701 = vshll.u32 %v3626, 16
        %v3703 = vor.u32 %v3700, %v3701
        %v3704 = vsel %vm997, %v3692, %v3703
        %v3706 = vshrl.u32 %v3627, 16
        %v3708 = vrot.slane %v3706, 7
        %v3709 = vshll.u32 %v3627, 16
        %v3711 = vor.u32 %v3708, %v3709
        %v3712 = vsel %vm997, %v3700, %v3711
        %v3714 = vshrl.u32 %v3628, 16
        %v3716 = vrot.slane %v3714, 7
        %v3717 = vshll.u32 %v3628, 16
        %v3719 = vor.u32 %v3716, %v3717
        %v3720 = vsel %vm997, %v3708, %v3719
        %v3722 = vshrl.u32 %v3629, 16
        %v3724 = vrot.slane %v3722, 7
        %v3725 = vshll.u32 %v3629, 16
        %v3727 = vor.u32 %v3724, %v3725
        %v3728 = vsel %vm997, %v3716, %v3727
        %v3730 = vshrl.u32 %v3630, 16
        %v3732 = vrot.slane %v3730, 7
        %v3733 = vshll.u32 %v3630, 16
        %v3735 = vor.u32 %v3732, %v3733
        %v3736 = vsel %vm997, %v3724, %v3735
        %v3738 = vshrl.u32 %v3631, 16
        %v3740 = vrot.slane %v3738, 7
        %v3741 = vshll.u32 %v3631, 16
        %v3743 = vor.u32 %v3740, %v3741
        %v3744 = vsel %vm997, %v3732, %v3743
        %v3746 = vshrl.u32 %v3632, 16
        %v3748 = vrot.slane %v3746, 7
        %v3749 = vshll.u32 %v3632, 16
        %v3751 = vor.u32 %v3748, %v3749
        %v3752 = vsel %vm997, %v3740, %v3751
        %v3754 = vshrl.u32 %v3633, 16
        %v3756 = vrot.slane %v3754, 7
        %v3757 = vshll.u32 %v3633, 16
        %v3759 = vor.u32 %v3756, %v3757
        %v3760 = vsel %vm997, %v3748, %v3759
        %v3762 = vshrl.u32 %v3634, 16
        %v3764 = vrot.slane %v3762, 7
        %v3765 = vshll.u32 %v3634, 16
        %v3767 = vor.u32 %v3764, %v3765
        %v3768 = vsel %vm997, %v3756, %v3767
        %v3770 = vshrl.u32 %v3635, 16
        %v3772 = vrot.slane %v3770, 7
        %v3773 = vshll.u32 %v3635, 16
        %v3775 = vor.u32 %v3772, %v3773
        %v3776 = vsel %vm997, %v3764, %v3775
        %v3778 = vshrl.u32 %v3636, 16
        %v3780 = vrot.slane %v3778, 7
        %v3781 = vshll.u32 %v3636, 16
        %v3783 = vor.u32 %v3780, %v3781
        %v3784 = vsel %vm997, %v3772, %v3783
        %3803 = vst [vmem:[#allocation5] sm:$0xff] %v3648
        %3804 = vst [vmem:[#allocation5 + $0x18] sm:$0xff] %v3656
        %3805 = vst [vmem:[#allocation5 + $0x30] sm:$0xff] %v3664
        %3806 = vst [vmem:[#allocation5 + $0x48] sm:$0xff] %v3672
        %3807 = vst [vmem:[#allocation5 + $0x60] sm:$0xff] %v3680
        %3808 = vst [vmem:[#allocation5 + $0x78] sm:$0xff] %v3688
        %3809 = vst [vmem:[#allocation5 + $0x90] sm:$0xff] %v3696
        %3810 = vst [vmem:[#allocation5 + $0xa8] sm:$0xff] %v3704
        %3811 = vst [vmem:[#allocation5 + $0xc0] sm:$0xff] %v3712
        %3812 = vst [vmem:[#allocation5 + $0xd8] sm:$0xff] %v3720
        %3813 = vst [vmem:[#allocation5 + $0xf0] sm:$0xff] %v3728
        %3814 = vst [vmem:[#allocation5 + $0x108] sm:$0xff] %v3736
        %3815 = vst [vmem:[#allocation5 + $0x120] sm:$0xff] %v3744
        %3816 = vst [vmem:[#allocation5 + $0x138] sm:$0xff] %v3752
        %3817 = vst [vmem:[#allocation5 + $0x150] sm:$0xff] %v3760
        %3818 = vst [vmem:[#allocation5 + $0x168] sm:$0xff] %v3768
        %3819 = vst [vmem:[#allocation5 + $0x180] sm:$0xff] %v3776
        %3820 = vst [vmem:[#allocation5 + $0x198] sm:$0xff] %v3784
        %3821 = vst [vmem:[#allocation5 + $0x8] sm:$0xff] %v3581
        %3822 = vst [vmem:[#allocation5 + $0x20] sm:$0xff] %v3582
        %3823 = vst [vmem:[#allocation5 + $0x38] sm:$0xff] %v3583
        %3824 = vst [vmem:[#allocation5 + $0x50] sm:$0xff] %v3584
        %3825 = vst [vmem:[#allocation5 + $0x68] sm:$0xff] %v3585
        %3826 = vst [vmem:[#allocation5 + $0x80] sm:$0xff] %v3586
        %3827 = vst [vmem:[#allocation5 + $0x98] sm:$0xff] %v3587
        %3828 = vst [vmem:[#allocation5 + $0xb0] sm:$0xff] %v3588
        %3829 = vst [vmem:[#allocation5 + $0xc8] sm:$0xff] %v3589
        %3830 = vst [vmem:[#allocation5 + $0xe0] sm:$0xff] %v3590
        %3831 = vst [vmem:[#allocation5 + $0xf8] sm:$0xff] %v3591
        %3832 = vst [vmem:[#allocation5 + $0x110] sm:$0xff] %v3592
        %3833 = vst [vmem:[#allocation5 + $0x128] sm:$0xff] %v3593
        %3834 = vst [vmem:[#allocation5 + $0x140] sm:$0xff] %v3594
        %3835 = vst [vmem:[#allocation5 + $0x158] sm:$0xff] %v3595
        %3836 = vst [vmem:[#allocation5 + $0x170] sm:$0xff] %v3596
        %3837 = vst [vmem:[#allocation5 + $0x188] sm:$0xff] %v3597
        %3838 = vst [vmem:[#allocation5 + $0x1a0] sm:$0xff] %v3598
        %v3839 = vsel %vm1541, %v3599, 0
        %v3840 = vsel %vm1542, %v3600, 0
        %v3841 = vsel %vm1543, %v3601, 0
        %v3842 = vsel %vm1544, %v3602, 0
        %v3843 = vsel %vm1545, %v3603, 0
        %v3844 = vsel %vm1546, %v3604, 0
        %v3845 = vsel %vm1547, %v3605, 0
        %v3846 = vsel %vm1548, %v3606, 0
        %v3847 = vsel %vm1549, %v3607, 0
        %v3848 = vsel %vm1550, %v3608, 0
        %v3849 = vsel %vm1551, %v3609, 0
        %v3850 = vsel %vm1552, %v3610, 0
        %v3851 = vsel %vm1553, %v3611, 0
        %v3852 = vsel %vm1554, %v3612, 0
        %v3853 = vsel %vm1555, %v3613, 0
        %v3854 = vsel %vm1556, %v3614, 0
        %v3855 = vsel %vm1557, %v3615, 0
        %v3856 = vsel %vm1558, %v3616, 0
        %v3857 = vsel %vm1559, %v3617, 0
        %v3859 = vshrl.u32 %v3839, 16
        %v3861 = vshll.u32 %v3839, 16
        %v3863 = vrot.slane %v3861, 1
        %v3864 = vor.u32 %v3859, %v3863
        %v3866 = vshll.u32 %v3840, 16
        %v3868 = vrot.slane %v3866, 1
        %v3869 = vsel %vm815, %v3864, %v3868
        %v3870 = vshrl.u32 %v3840, 16
        %v3872 = vor.u32 %v3870, %v3868
        %v3874 = vshll.u32 %v3841, 16
        %v3876 = vrot.slane %v3874, 1
        %v3877 = vsel %vm815, %v3872, %v3876
        %v3878 = vshrl.u32 %v3841, 16
        %v3880 = vor.u32 %v3878, %v3876
        %v3882 = vshll.u32 %v3842, 16
        %v3884 = vrot.slane %v3882, 1
        %v3885 = vsel %vm815, %v3880, %v3884
        %v3886 = vshrl.u32 %v3842, 16
        %v3888 = vor.u32 %v3886, %v3884
        %v3890 = vshll.u32 %v3843, 16
        %v3892 = vrot.slane %v3890, 1
        %v3893 = vsel %vm815, %v3888, %v3892
        %v3894 = vshrl.u32 %v3843, 16
        %v3896 = vor.u32 %v3894, %v3892
        %v3898 = vshll.u32 %v3844, 16
        %v3900 = vrot.slane %v3898, 1
        %v3901 = vsel %vm815, %v3896, %v3900
        %v3902 = vshrl.u32 %v3844, 16
        %v3904 = vor.u32 %v3902, %v3900
        %v3906 = vshll.u32 %v3845, 16
        %v3908 = vrot.slane %v3906, 1
        %v3909 = vsel %vm815, %v3904, %v3908
        %v3910 = vshrl.u32 %v3845, 16
        %v3912 = vor.u32 %v3910, %v3908
        %v3914 = vshll.u32 %v3846, 16
        %v3916 = vrot.slane %v3914, 1
        %v3917 = vsel %vm815, %v3912, %v3916
        %v3918 = vshrl.u32 %v3846, 16
        %v3920 = vor.u32 %v3918, %v3916
        %v3922 = vshll.u32 %v3847, 16
        %v3924 = vrot.slane %v3922, 1
        %v3925 = vsel %vm815, %v3920, %v3924
        %v3926 = vshrl.u32 %v3847, 16
        %v3928 = vor.u32 %v3926, %v3924
        %v3930 = vshll.u32 %v3848, 16
        %v3932 = vrot.slane %v3930, 1
        %v3933 = vsel %vm815, %v3928, %v3932
        %v3934 = vshrl.u32 %v3848, 16
        %v3936 = vor.u32 %v3934, %v3932
        %v3938 = vshll.u32 %v3849, 16
        %v3940 = vrot.slane %v3938, 1
        %v3941 = vsel %vm815, %v3936, %v3940
        %v3942 = vshrl.u32 %v3849, 16
        %v3944 = vor.u32 %v3942, %v3940
        %v3946 = vshll.u32 %v3850, 16
        %v3948 = vrot.slane %v3946, 1
        %v3949 = vsel %vm815, %v3944, %v3948
        %v3950 = vshrl.u32 %v3850, 16
        %v3952 = vor.u32 %v3950, %v3948
        %v3954 = vshll.u32 %v3851, 16
        %v3956 = vrot.slane %v3954, 1
        %v3957 = vsel %vm815, %v3952, %v3956
        %v3958 = vshrl.u32 %v3851, 16
        %v3960 = vor.u32 %v3958, %v3956
        %v3962 = vshll.u32 %v3852, 16
        %v3964 = vrot.slane %v3962, 1
        %v3965 = vsel %vm815, %v3960, %v3964
        %v3966 = vshrl.u32 %v3852, 16
        %v3968 = vor.u32 %v3966, %v3964
        %v3970 = vshll.u32 %v3853, 16
        %v3972 = vrot.slane %v3970, 1
        %v3973 = vsel %vm815, %v3968, %v3972
        %v3974 = vshrl.u32 %v3853, 16
        %v3976 = vor.u32 %v3974, %v3972
        %v3978 = vshll.u32 %v3854, 16
        %v3980 = vrot.slane %v3978, 1
        %v3981 = vsel %vm815, %v3976, %v3980
        %v3982 = vshrl.u32 %v3854, 16
        %v3984 = vor.u32 %v3982, %v3980
        %v3986 = vshll.u32 %v3855, 16
        %v3988 = vrot.slane %v3986, 1
        %v3989 = vsel %vm815, %v3984, %v3988
        %v3990 = vshrl.u32 %v3855, 16
        %v3992 = vor.u32 %v3990, %v3988
        %v3994 = vshll.u32 %v3856, 16
        %v3996 = vrot.slane %v3994, 1
        %v3997 = vsel %vm815, %v3992, %v3996
        %v3998 = vshrl.u32 %v3856, 16
        %v4000 = vor.u32 %v3998, %v3996
        %v4002 = vshll.u32 %v3857, 16
        %v4004 = vrot.slane %v4002, 1
        %v4005 = vsel %vm815, %v4000, %v4004
        %4024 = vst [vmem:[#allocation5 + $0x10] sm:$0xff] %v3869
        %4025 = vst [vmem:[#allocation5 + $0x28] sm:$0xff] %v3877
        %4026 = vst [vmem:[#allocation5 + $0x40] sm:$0xff] %v3885
        %4027 = vst [vmem:[#allocation5 + $0x58] sm:$0xff] %v3893
        %4028 = vst [vmem:[#allocation5 + $0x70] sm:$0xff] %v3901
        %4029 = vst [vmem:[#allocation5 + $0x88] sm:$0xff] %v3909
        %4030 = vst [vmem:[#allocation5 + $0xa0] sm:$0xff] %v3917
        %4031 = vst [vmem:[#allocation5 + $0xb8] sm:$0xff] %v3925
        %4032 = vst [vmem:[#allocation5 + $0xd0] sm:$0xff] %v3933
        %4033 = vst [vmem:[#allocation5 + $0xe8] sm:$0xff] %v3941
        %4034 = vst [vmem:[#allocation5 + $0x100] sm:$0xff] %v3949
        %4035 = vst [vmem:[#allocation5 + $0x118] sm:$0xff] %v3957
        %4036 = vst [vmem:[#allocation5 + $0x130] sm:$0xff] %v3965
        %4037 = vst [vmem:[#allocation5 + $0x148] sm:$0xff] %v3973
        %4038 = vst [vmem:[#allocation5 + $0x160] sm:$0xff] %v3981
        %4039 = vst [vmem:[#allocation5 + $0x178] sm:$0xff] %v3989
        %4040 = vst [vmem:[#allocation5 + $0x190] sm:$0xff] %v3997
        %4041 = vst [vmem:[#allocation5 + $0x1a8] sm:$0xff] %v4005
        %v4042 = vld [vmem:[#allocation5] sm:$0xff]
        %v4043 = vld [vmem:[#allocation5 + $0x8] sm:$0xff]
        %v4044 = vld [vmem:[#allocation5 + $0x10] sm:$0xff]
        %v4045 = vld [vmem:[#allocation5 + $0x18] sm:$0xff]
        %v4046 = vld [vmem:[#allocation5 + $0x20] sm:$0xff]
        %v4047 = vld [vmem:[#allocation5 + $0x28] sm:$0xff]
        %v4048 = vld [vmem:[#allocation5 + $0x30] sm:$0xff]
        %v4049 = vld [vmem:[#allocation5 + $0x38] sm:$0xff]
        %v4050 = vld [vmem:[#allocation5 + $0x40] sm:$0xff]
        %v4051 = vld [vmem:[#allocation5 + $0x48] sm:$0xff]
        %v4052 = vld [vmem:[#allocation5 + $0x50] sm:$0xff]
        %v4053 = vld [vmem:[#allocation5 + $0x58] sm:$0xff]
        %v4054 = vld [vmem:[#allocation5 + $0x60] sm:$0xff]
        %v4055 = vld [vmem:[#allocation5 + $0x68] sm:$0xff]
        %v4056 = vld [vmem:[#allocation5 + $0x70] sm:$0xff]
        %v4057 = vld [vmem:[#allocation5 + $0x78] sm:$0xff]
        %v4058 = vld [vmem:[#allocation5 + $0x80] sm:$0xff]
        %v4059 = vld [vmem:[#allocation5 + $0x88] sm:$0xff]
        %v4060 = vld [vmem:[#allocation5 + $0x90] sm:$0xff]
        %v4061 = vld [vmem:[#allocation5 + $0x98] sm:$0xff]
        %v4062 = vld [vmem:[#allocation5 + $0xa0] sm:$0xff]
        %v4063 = vld [vmem:[#allocation5 + $0xa8] sm:$0xff]
        %v4064 = vld [vmem:[#allocation5 + $0xb0] sm:$0xff]
        %v4065 = vld [vmem:[#allocation5 + $0xb8] sm:$0xff]
        %v4066 = vld [vmem:[#allocation5 + $0xc0] sm:$0xff]
        %v4067 = vld [vmem:[#allocation5 + $0xc8] sm:$0xff]
        %v4068 = vld [vmem:[#allocation5 + $0xd0] sm:$0xff]
        %v4069 = vld [vmem:[#allocation5 + $0xd8] sm:$0xff]
        %v4070 = vld [vmem:[#allocation5 + $0xe0] sm:$0xff]
        %v4071 = vld [vmem:[#allocation5 + $0xe8] sm:$0xff]
        %v4072 = vld [vmem:[#allocation5 + $0xf0] sm:$0xff]
        %v4073 = vld [vmem:[#allocation5 + $0xf8] sm:$0xff]
        %v4074 = vld [vmem:[#allocation5 + $0x100] sm:$0xff]
        %v4075 = vld [vmem:[#allocation5 + $0x108] sm:$0xff]
        %v4076 = vld [vmem:[#allocation5 + $0x110] sm:$0xff]
        %v4077 = vld [vmem:[#allocation5 + $0x118] sm:$0xff]
        %v4078 = vld [vmem:[#allocation5 + $0x120] sm:$0xff]
        %v4079 = vld [vmem:[#allocation5 + $0x128] sm:$0xff]
        %v4080 = vld [vmem:[#allocation5 + $0x130] sm:$0xff]
        %v4081 = vld [vmem:[#allocation5 + $0x138] sm:$0xff]
        %v4082 = vld [vmem:[#allocation5 + $0x140] sm:$0xff]
        %v4083 = vld [vmem:[#allocation5 + $0x148] sm:$0xff]
        %v4084 = vld [vmem:[#allocation5 + $0x150] sm:$0xff]
        %v4085 = vld [vmem:[#allocation5 + $0x158] sm:$0xff]
        %v4086 = vld [vmem:[#allocation5 + $0x160] sm:$0xff]
        %v4087 = vld [vmem:[#allocation5 + $0x168] sm:$0xff]
        %v4088 = vld [vmem:[#allocation5 + $0x170] sm:$0xff]
        %v4089 = vld [vmem:[#allocation5 + $0x178] sm:$0xff]
        %v4090 = vld [vmem:[%s4] sm:$0xf]
        %v4091 = vld [vmem:[%s4 + $0x4] sm:$0xf]
        %v4092 = vld [vmem:[%s4 + $0x8] sm:$0xf]
        %v4093 = vld [vmem:[%s4 + $0xc] sm:$0xf]
        %v4094 = vld [vmem:[%s4 + $0x10] sm:$0xf]
        %v4095 = vld [vmem:[%s4 + $0x14] sm:$0xf]
        %v4096 = vld [vmem:[%s4 + $0x18] sm:$0xf]
        %v4097 = vld [vmem:[%s4 + $0x1c] sm:$0xf]
        %v4098 = vld [vmem:[%s4 + $0x20] sm:$0xf]
        %v4099 = vld [vmem:[%s4 + $0x24] sm:$0xf]
        %v4100 = vld [vmem:[%s4 + $0x28] sm:$0xf]
        %v4101 = vld [vmem:[%s4 + $0x2c] sm:$0xf]
        %v4102 = vld [vmem:[%s4 + $0x30] sm:$0xf]
        %v4103 = vld [vmem:[%s4 + $0x34] sm:$0xf]
        %v4104 = vld [vmem:[%s4 + $0x38] sm:$0xf]
        %v4105 = vld [vmem:[%s4 + $0x3c] sm:$0xf]
        %v4106 = vld [vmem:[%s4 + $0x40] sm:$0xf]
        %v4107 = vld [vmem:[%s4 + $0x44] sm:$0xf]
        %v4108 = vld [vmem:[%s4 + $0x48] sm:$0xf]
        %v4109 = vld [vmem:[%s4 + $0x4c] sm:$0xf]
        %v4110 = vld [vmem:[%s4 + $0x50] sm:$0xf]
        %v4111 = vld [vmem:[%s4 + $0x54] sm:$0xf]
        %v4112 = vld [vmem:[%s4 + $0x58] sm:$0xf]
        %v4113 = vld [vmem:[%s4 + $0x5c] sm:$0xf]
        %v4114 = vld [vmem:[%s4 + $0x60] sm:$0xf]
        %v4115 = vld [vmem:[%s4 + $0x64] sm:$0xf]
        %v4116 = vld [vmem:[%s4 + $0x68] sm:$0xf]
        %v4117 = vld [vmem:[%s4 + $0x6c] sm:$0xf]
        %v4118 = vld [vmem:[%s4 + $0x70] sm:$0xf]
        %v4119 = vld [vmem:[%s4 + $0x74] sm:$0xf]
        %v4120 = vld [vmem:[%s4 + $0x78] sm:$0xf]
        %v4121 = vld [vmem:[%s4 + $0x7c] sm:$0xf]
        %v4122 = vld [vmem:[%s4 + $0x80] sm:$0xf]
        %v4123 = vld [vmem:[%s4 + $0x84] sm:$0xf]
        %v4124 = vld [vmem:[%s4 + $0x88] sm:$0xf]
        %v4125 = vld [vmem:[%s4 + $0x8c] sm:$0xf]
        %v4126 = vld [vmem:[%s4 + $0x90] sm:$0xf]
        %v4127 = vld [vmem:[%s4 + $0x94] sm:$0xf]
        %v4128 = vld [vmem:[%s4 + $0x98] sm:$0xf]
        %v4129 = vld [vmem:[%s4 + $0x9c] sm:$0xf]
        %v4130 = vld [vmem:[%s4 + $0xa0] sm:$0xf]
        %v4131 = vld [vmem:[%s4 + $0xa4] sm:$0xf]
        %v4132 = vld [vmem:[%s4 + $0xa8] sm:$0xf]
        %v4133 = vld [vmem:[%s4 + $0xac] sm:$0xf]
        %v4134 = vld [vmem:[%s4 + $0xb0] sm:$0xf]
        %v4135 = vld [vmem:[%s4 + $0xb4] sm:$0xf]
        %v4136 = vld [vmem:[%s4 + $0xb8] sm:$0xf]
        %v4137 = vld [vmem:[%s4 + $0xbc] sm:$0xf]
        %v4138 = vld [vmem:[#allocation5 + $0x180] sm:$0xff]
        %v4139 = vld [vmem:[#allocation5 + $0x188] sm:$0xff]
        %v4140 = vld [vmem:[#allocation5 + $0x190] sm:$0xff]
        %s4141 = scalar_lea.vmem %s4, 192
        %v4142 = vld [vmem:[%s4141] sm:$0xf]
        %v4143 = vld [vmem:[%s4141 + $0x4] sm:$0xf]
        %v4144 = vld [vmem:[%s4141 + $0x8] sm:$0xf]
        %v4145 = vld [vmem:[%s4141 + $0xc] sm:$0xf]
        %v4146 = vld [vmem:[%s4141 + $0x10] sm:$0xf]
        %v4147 = vld [vmem:[%s4141 + $0x14] sm:$0xf]
        %v4148 = vld [vmem:[%s4141 + $0x18] sm:$0xf]
        %v4149 = vld [vmem:[%s4141 + $0x1c] sm:$0xf]
        %v4150 = vld [vmem:[%s4141 + $0x20] sm:$0xf]
        %v4151 = vld [vmem:[%s4141 + $0x24] sm:$0xf]
        %v4152 = vld [vmem:[%s4141 + $0x28] sm:$0xf]
        %v4153 = vld [vmem:[%s4141 + $0x2c] sm:$0xf]
        %v4154 = vld [vmem:[%s4141 + $0x30] sm:$0xf]
        %v4155 = vld [vmem:[%s4141 + $0x34] sm:$0xf]
        %v4156 = vld [vmem:[%s4141 + $0x38] sm:$0xf]
        %v4157 = vld [vmem:[%s4141 + $0x3c] sm:$0xf]
        %v4158 = vld [vmem:[%s4141 + $0x40] sm:$0xf]
        %v4159 = vld [vmem:[%s4141 + $0x44] sm:$0xf]
        %v4160 = vld [vmem:[%s4141 + $0x48] sm:$0xf]
        %v4161 = vld [vmem:[%s4141 + $0x4c] sm:$0xf]
        %v4162 = vld [vmem:[%s4141 + $0x50] sm:$0xf]
        %v4163 = vld [vmem:[%s4141 + $0x54] sm:$0xf]
        %v4164 = vld [vmem:[%s4141 + $0x58] sm:$0xf]
        %v4165 = vld [vmem:[%s4141 + $0x5c] sm:$0xf]
        %v4166 = vld [vmem:[%s4141 + $0x60] sm:$0xf]
        %v4167 = vld [vmem:[%s4141 + $0x64] sm:$0xf]
        %v4168 = vld [vmem:[%s4141 + $0x68] sm:$0xf]
        %v4169 = vld [vmem:[%s4141 + $0x6c] sm:$0xf]
        %v4170 = vld [vmem:[%s4141 + $0x70] sm:$0xf]
        %v4171 = vld [vmem:[%s4141 + $0x74] sm:$0xf]
        %v4172 = vld [vmem:[%s4141 + $0x78] sm:$0xf]
        %v4173 = vld [vmem:[%s4141 + $0x7c] sm:$0xf]
        %v4174 = vld [vmem:[%s4141 + $0x80] sm:$0xf]
        %v4175 = vld [vmem:[%s4141 + $0x84] sm:$0xf]
        %v4176 = vld [vmem:[%s4141 + $0x88] sm:$0xf]
        %v4177 = vld [vmem:[%s4141 + $0x8c] sm:$0xf]
        %v4178 = vld [vmem:[%s4141 + $0x90] sm:$0xf]
        %v4179 = vld [vmem:[%s4141 + $0x94] sm:$0xf]
        %v4180 = vld [vmem:[%s4141 + $0x98] sm:$0xf]
        %v4181 = vld [vmem:[%s4141 + $0x9c] sm:$0xf]
        %v4182 = vld [vmem:[%s4141 + $0xa0] sm:$0xf]
        %v4183 = vld [vmem:[%s4141 + $0xa4] sm:$0xf]
        %v4184 = vld [vmem:[%s4141 + $0xa8] sm:$0xf]
        %v4185 = vld [vmem:[%s4141 + $0xac] sm:$0xf]
        %v4186 = vld [vmem:[%s4141 + $0xb0] sm:$0xf]
        %v4187 = vld [vmem:[%s4141 + $0xb4] sm:$0xf]
        %v4188 = vld [vmem:[%s4141 + $0xb8] sm:$0xf]
        %v4189 = vld [vmem:[%s4141 + $0xbc] sm:$0xf]
        %v4238 = vunpack.c.l.b16 %v4142
        %v4239 = vunpack.c.l.b16 %v4143
        %v4240 = vunpack.c.l.b16 %v4144
        %v4241 = vunpack.c.l.b16 %v4145
        %v4242 = vunpack.c.l.b16 %v4146
        %v4243 = vunpack.c.l.b16 %v4147
        %v4244 = vunpack.c.l.b16 %v4148
        %v4245 = vunpack.c.l.b16 %v4149
        %v4246 = vunpack.c.l.b16 %v4150
        %v4247 = vunpack.c.l.b16 %v4151
        %v4248 = vunpack.c.l.b16 %v4152
        %v4249 = vunpack.c.l.b16 %v4153
        %v4250 = vunpack.c.l.b16 %v4154
        %v4251 = vunpack.c.l.b16 %v4155
        %v4252 = vunpack.c.l.b16 %v4156
        %v4253 = vunpack.c.l.b16 %v4157
        %v4254 = vunpack.c.l.b16 %v4158
        %v4255 = vunpack.c.l.b16 %v4159
        %v4256 = vunpack.c.l.b16 %v4160
        %v4257 = vunpack.c.l.b16 %v4161
        %v4258 = vunpack.c.l.b16 %v4162
        %v4259 = vunpack.c.l.b16 %v4163
        %v4260 = vunpack.c.l.b16 %v4164
        %v4261 = vunpack.c.l.b16 %v4165
        %v4262 = vunpack.c.l.b16 %v4166
        %v4263 = vunpack.c.l.b16 %v4167
        %v4264 = vunpack.c.l.b16 %v4168
        %v4265 = vunpack.c.l.b16 %v4169
        %v4266 = vunpack.c.l.b16 %v4170
        %v4267 = vunpack.c.l.b16 %v4171
        %v4268 = vunpack.c.l.b16 %v4172
        %v4269 = vunpack.c.l.b16 %v4173
        %v4270 = vunpack.c.l.b16 %v4174
        %v4271 = vunpack.c.l.b16 %v4175
        %v4272 = vunpack.c.l.b16 %v4176
        %v4273 = vunpack.c.l.b16 %v4177
        %v4274 = vunpack.c.l.b16 %v4178
        %v4275 = vunpack.c.l.b16 %v4179
        %v4276 = vunpack.c.l.b16 %v4180
        %v4277 = vunpack.c.l.b16 %v4181
        %v4278 = vunpack.c.l.b16 %v4182
        %v4279 = vunpack.c.l.b16 %v4183
        %v4280 = vunpack.c.l.b16 %v4184
        %v4281 = vunpack.c.l.b16 %v4185
        %v4282 = vunpack.c.l.b16 %v4186
        %v4283 = vunpack.c.l.b16 %v4187
        %v4284 = vunpack.c.l.b16 %v4188
        %v4285 = vunpack.c.l.b16 %v4189
        %v4286 = vpack.c.b16 %v4239, %v4238
        %v4287 = vpack.c.b16 %v4241, %v4240
        %v4288 = vpack.c.b16 %v4243, %v4242
        %v4289 = vpack.c.b16 %v4245, %v4244
        %v4290 = vpack.c.b16 %v4247, %v4246
        %v4291 = vpack.c.b16 %v4249, %v4248
        %v4292 = vpack.c.b16 %v4251, %v4250
        %v4293 = vpack.c.b16 %v4253, %v4252
        %v4294 = vpack.c.b16 %v4255, %v4254
        %v4295 = vpack.c.b16 %v4257, %v4256
        %v4296 = vpack.c.b16 %v4259, %v4258
        %v4297 = vpack.c.b16 %v4261, %v4260
        %v4298 = vpack.c.b16 %v4263, %v4262
        %v4299 = vpack.c.b16 %v4265, %v4264
        %v4300 = vpack.c.b16 %v4267, %v4266
        %v4301 = vpack.c.b16 %v4269, %v4268
        %v4302 = vpack.c.b16 %v4271, %v4270
        %v4303 = vpack.c.b16 %v4273, %v4272
        %v4304 = vpack.c.b16 %v4275, %v4274
        %v4305 = vpack.c.b16 %v4277, %v4276
        %v4306 = vpack.c.b16 %v4279, %v4278
        %v4307 = vpack.c.b16 %v4281, %v4280
        %v4308 = vpack.c.b16 %v4283, %v4282
        %v4309 = vpack.c.b16 %v4285, %v4284
        %4334 = vmatprep.subr.bf16.mxu0 0
        %4335 = vmatpush1.bf16.msra.mxu0 %v4286
        %4336 = vmatprep.subr.bf16.mxu0 0
        %4337 = vmatpush1.bf16.msra.mxu0 %v4287
        %4338 = vmatprep.subr.bf16.mxu0 0
        %4339 = vmatpush1.bf16.msra.mxu0 %v4288
        %4340 = vmatprep.subr.bf16.mxu0 0
        %4341 = vmatpush1.bf16.msra.mxu0 %v4289
        %4342 = vmatprep.subr.bf16.mxu0 0
        %4343 = vmatpush1.bf16.msra.mxu0 %v4290
        %4344 = vmatprep.subr.bf16.mxu0 0
        %4345 = vmatpush1.bf16.msra.mxu0 %v4291
        %4346 = vmatprep.subr.bf16.mxu0 0
        %4347 = vmatpush1.bf16.msra.mxu0 %v4292
        %4348 = vmatprep.subr.bf16.mxu0 0
        %4349 = vmatpush1.bf16.msra.mxu0 %v4293
        %4350 = vmatprep.subr.bf16.mxu0 0
        %4351 = vmatpush1.bf16.msra.mxu0 %v4294
        %4352 = vmatprep.subr.bf16.mxu0 0
        %4353 = vmatpush1.bf16.msra.mxu0 %v4295
        %4354 = vmatprep.subr.bf16.mxu0 0
        %4355 = vmatpush1.bf16.msra.mxu0 %v4296
        %4356 = vmatprep.subr.bf16.mxu0 0
        %4357 = vmatpush1.bf16.msra.mxu0 %v4297
        %4358 = vmatprep.subr.bf16.mxu0 0
        %4359 = vmatpush1.bf16.msra.mxu0 %v4298
        %4360 = vmatprep.subr.bf16.mxu0 0
        %4361 = vmatpush1.bf16.msra.mxu0 %v4299
        %4362 = vmatprep.subr.bf16.mxu0 0
        %4363 = vmatpush1.bf16.msra.mxu0 %v4300
        %4364 = vmatprep.subr.bf16.mxu0 0
        %4365 = vmatpush1.bf16.msra.mxu0 %v4301
        %4366 = vmatprep.mubr.bf16.mxu0 %v4046
        %4367 = vmatmul.mubr.bf16.gmra.mrb[0].mxu0 %v4045
        %v4368 = vpop.f32.mrb[0].mxu0
        %v4369 = vadd.f32 0.0, %v4368
        %v4370 = vpop.f32.mrb[0].mxu0
        %v4371 = vpop.f32.mrb[0].mxu0
        %v4372 = vadd.f32 0.0, %v4371
        %v4373 = vpop.f32.mrb[0].mxu0
        %4374 = vmatprep.mubr.bf16.mxu0 %v4049
        %4375 = vmatmul.mubr.bf16.gmra.mrb[0].mxu0 %v4048
        %v4376 = vpop.f32.mrb[0].mxu0
        %v4377 = vadd.f32 0.0, %v4376
        %v4378 = vpop.f32.mrb[0].mxu0
        %v4379 = vpop.f32.mrb[0].mxu0
        %v4380 = vadd.f32 0.0, %v4379
        %v4381 = vpop.f32.mrb[0].mxu0
        %4382 = vmatprep.mubr.bf16.mxu0 %v4052
        %4383 = vmatmul.mubr.bf16.gmra.mrb[0].mxu0 %v4051
        %v4384 = vpop.f32.mrb[0].mxu0
        %v4385 = vadd.f32 0.0, %v4384
        %v4386 = vpop.f32.mrb[0].mxu0
        %v4387 = vpop.f32.mrb[0].mxu0
        %v4388 = vadd.f32 0.0, %v4387
        %v4389 = vpop.f32.mrb[0].mxu0
        %4390 = vmatprep.mubr.bf16.mxu0 %v4055
        %4391 = vmatmul.mubr.bf16.gmra.mrb[0].mxu0 %v4054
        %v4392 = vpop.f32.mrb[0].mxu0
        %v4393 = vadd.f32 0.0, %v4392
        %v4394 = vpop.f32.mrb[0].mxu0
        %v4395 = vpop.f32.mrb[0].mxu0
        %v4396 = vadd.f32 0.0, %v4395
        %v4397 = vpop.f32.mrb[0].mxu0
        %4398 = vmatprep.mubr.bf16.mxu0 %v4058
        %4399 = vmatmul.mubr.bf16.gmra.mrb[0].mxu0 %v4057
        %v4400 = vpop.f32.mrb[0].mxu0
        %v4401 = vadd.f32 0.0, %v4400
        %v4402 = vpop.f32.mrb[0].mxu0
        %v4403 = vpop.f32.mrb[0].mxu0
        %v4404 = vadd.f32 0.0, %v4403
        %v4405 = vpop.f32.mrb[0].mxu0
        %4406 = vmatprep.mubr.bf16.mxu0 %v4061
        %4407 = vmatmul.mubr.bf16.gmra.mrb[0].mxu0 %v4060
        %v4408 = vpop.f32.mrb[0].mxu0
        %v4409 = vadd.f32 0.0, %v4408
        %v4410 = vpop.f32.mrb[0].mxu0
        %v4411 = vpop.f32.mrb[0].mxu0
        %v4412 = vadd.f32 0.0, %v4411
        %v4413 = vpop.f32.mrb[0].mxu0
        %4414 = vmatprep.mubr.bf16.mxu0 %v4064
        %4415 = vmatmul.mubr.bf16.gmra.mrb[0].mxu0 %v4063
        %v4416 = vpop.f32.mrb[0].mxu0
        %v4417 = vadd.f32 0.0, %v4416
        %v4418 = vpop.f32.mrb[0].mxu0
        %v4419 = vpop.f32.mrb[0].mxu0
        %v4420 = vadd.f32 0.0, %v4419
        %v4421 = vpop.f32.mrb[0].mxu0
        %4422 = vmatprep.mubr.bf16.mxu0 %v4067
        %4423 = vmatmul.mubr.bf16.gmra.mrb[0].mxu0 %v4066
        %v4424 = vpop.f32.mrb[0].mxu0
        %v4425 = vadd.f32 0.0, %v4424
        %v4426 = vpop.f32.mrb[0].mxu0
        %v4427 = vpop.f32.mrb[0].mxu0
        %v4428 = vadd.f32 0.0, %v4427
        %v4429 = vpop.f32.mrb[0].mxu0
        %4430 = vmatprep.mubr.bf16.mxu0 %v4070
        %4431 = vmatmul.mubr.bf16.gmra.mrb[0].mxu0 %v4069
        %v4432 = vpop.f32.mrb[0].mxu0
        %v4433 = vadd.f32 0.0, %v4432
        %v4434 = vpop.f32.mrb[0].mxu0
        %v4435 = vpop.f32.mrb[0].mxu0
        %v4436 = vadd.f32 0.0, %v4435
        %v4437 = vpop.f32.mrb[0].mxu0
        %4438 = vmatprep.mubr.bf16.mxu0 %v4073
        %4439 = vmatmul.mubr.bf16.gmra.mrb[0].mxu0 %v4072
        %v4440 = vpop.f32.mrb[0].mxu0
        %v4441 = vadd.f32 0.0, %v4440
        %v4442 = vpop.f32.mrb[0].mxu0
        %v4443 = vpop.f32.mrb[0].mxu0
        %v4444 = vadd.f32 0.0, %v4443
        %v4445 = vpop.f32.mrb[0].mxu0
        %4446 = vmatprep.mubr.bf16.mxu0 %v4076
        %4447 = vmatmul.mubr.bf16.gmra.mrb[0].mxu0 %v4075
        %v4448 = vpop.f32.mrb[0].mxu0
        %v4449 = vadd.f32 0.0, %v4448
        %v4450 = vpop.f32.mrb[0].mxu0
        %v4451 = vpop.f32.mrb[0].mxu0
        %v4452 = vadd.f32 0.0, %v4451
        %v4453 = vpop.f32.mrb[0].mxu0
        %4454 = vmatprep.mubr.bf16.mxu0 %v4079
        %4455 = vmatmul.mubr.bf16.gmra.mrb[0].mxu0 %v4078
        %v4456 = vpop.f32.mrb[0].mxu0
        %v4457 = vadd.f32 0.0, %v4456
        %v4458 = vpop.f32.mrb[0].mxu0
        %v4459 = vpop.f32.mrb[0].mxu0
        %v4460 = vadd.f32 0.0, %v4459
        %v4461 = vpop.f32.mrb[0].mxu0
        %4462 = vmatprep.mubr.bf16.mxu0 %v4082
        %4463 = vmatmul.mubr.bf16.gmra.mrb[0].mxu0 %v4081
        %v4464 = vpop.f32.mrb[0].mxu0
        %v4465 = vadd.f32 0.0, %v4464
        %v4466 = vpop.f32.mrb[0].mxu0
        %v4467 = vpop.f32.mrb[0].mxu0
        %v4468 = vadd.f32 0.0, %v4467
        %v4469 = vpop.f32.mrb[0].mxu0
        %4470 = vmatprep.mubr.bf16.mxu0 %v4085
        %4471 = vmatmul.mubr.bf16.gmra.mrb[0].mxu0 %v4084
        %v4472 = vpop.f32.mrb[0].mxu0
        %v4473 = vadd.f32 0.0, %v4472
        %v4474 = vpop.f32.mrb[0].mxu0
        %v4475 = vpop.f32.mrb[0].mxu0
        %v4476 = vadd.f32 0.0, %v4475
        %v4477 = vpop.f32.mrb[0].mxu0
        %4478 = vmatprep.mubr.bf16.mxu0 %v4088
        %4479 = vmatmul.mubr.bf16.gmra.mrb[0].mxu0 %v4087
        %v4480 = vpop.f32.mrb[0].mxu0
        %v4481 = vadd.f32 0.0, %v4480
        %v4482 = vpop.f32.mrb[0].mxu0
        %v4483 = vpop.f32.mrb[0].mxu0
        %v4484 = vadd.f32 0.0, %v4483
        %v4485 = vpop.f32.mrb[0].mxu0
        %4486 = vmatprep.mubr.bf16.mxu0 %v4139
        %4487 = vmatmul.mubr.bf16.gmra.mrb[0].mxu0 %v4138
        %v4488 = vpop.f32.mrb[0].mxu0
        %v4489 = vadd.f32 0.0, %v4488
        %v4490 = vpop.f32.mrb[0].mxu0
        %v4491 = vpop.f32.mrb[0].mxu0
        %v4492 = vadd.f32 0.0, %v4491
        %v4493 = vpop.f32.mrb[0].mxu0
        %4494 = vdwg.mxu0
        %4495 = vmatprep.subr.bf16.mxu0 0
        %4496 = vmatpush1.bf16.msra.mxu0 %v4302
        %4497 = vmatprep.subr.bf16.mxu0 0
        %4498 = vmatpush1.bf16.msra.mxu0 %v4303
        %4499 = vmatprep.subr.bf16.mxu0 0
        %4500 = vmatpush1.bf16.msra.mxu0 %v4304
        %4501 = vmatprep.subr.bf16.mxu0 0
        %4502 = vmatpush1.bf16.msra.mxu0 %v4305
        %4503 = vmatprep.subr.bf16.mxu0 0
        %4504 = vmatpush1.bf16.msra.mxu0 %v4306
        %4505 = vmatprep.subr.bf16.mxu0 0
        %4506 = vmatpush1.bf16.msra.mxu0 %v4307
        %4507 = vmatprep.subr.bf16.mxu0 0
        %4508 = vmatpush1.bf16.msra.mxu0 %v4308
        %4509 = vmatprep.subr.bf16.mxu0 0
        %4510 = vmatpush1.bf16.msra.mxu0 %v4309
        %4511 = vmatprep.subr.bf16.mxu0 0
        %4512 = vmatpush1.bf16.msra.mxu0 0
        %4513 = vmatprep.subr.bf16.mxu0 0
        %4514 = vmatpush1.bf16.msra.mxu0 0
        %4515 = vmatprep.subr.bf16.mxu0 0
        %4516 = vmatpush1.bf16.msra.mxu0 0
        %4517 = vmatprep.subr.bf16.mxu0 0
        %4518 = vmatpush1.bf16.msra.mxu0 0
        %4519 = vmatprep.subr.bf16.mxu0 0
        %4520 = vmatpush1.bf16.msra.mxu0 0
        %4521 = vmatprep.subr.bf16.mxu0 0
        %4522 = vmatpush1.bf16.msra.mxu0 0
        %4523 = vmatprep.subr.bf16.mxu0 0
        %4524 = vmatpush1.bf16.msra.mxu0 0
        %4525 = vmatprep.subr.bf16.mxu0 0
        %4526 = vmatpush1.bf16.msra.mxu0 0
        %4527 = vmatprep.mubr.bf16.mxu0 0
        %4528 = vmatmul.mubr.bf16.gmra.mrb[0].mxu0 %v4047
        %v4529 = vpop.f32.mrb[0].mxu0
        %v4530 = vadd.f32 %v4369, %v4529
        %v4531 = vpop.f32.mrb[0].mxu0
        %v4532 = vpop.f32.mrb[0].mxu0
        %v4533 = vadd.f32 %v4372, %v4532
        %v4534 = vpop.f32.mrb[0].mxu0
        %4535 = vmatprep.mubr.bf16.mxu0 0
        %4536 = vmatmul.mubr.bf16.gmra.mrb[0].mxu0 %v4050
        %v4537 = vpop.f32.mrb[0].mxu0
        %v4538 = vadd.f32 %v4377, %v4537
        %v4539 = vpop.f32.mrb[0].mxu0
        %v4540 = vpop.f32.mrb[0].mxu0
        %v4541 = vadd.f32 %v4380, %v4540
        %v4542 = vpop.f32.mrb[0].mxu0
        %4543 = vmatprep.mubr.bf16.mxu0 0
        %4544 = vmatmul.mubr.bf16.gmra.mrb[0].mxu0 %v4053
        %v4545 = vpop.f32.mrb[0].mxu0
        %v4546 = vadd.f32 %v4385, %v4545
        %v4547 = vpop.f32.mrb[0].mxu0
        %v4548 = vpop.f32.mrb[0].mxu0
        %v4549 = vadd.f32 %v4388, %v4548
        %v4550 = vpop.f32.mrb[0].mxu0
        %4551 = vmatprep.mubr.bf16.mxu0 0
        %4552 = vmatmul.mubr.bf16.gmra.mrb[0].mxu0 %v4056
        %v4553 = vpop.f32.mrb[0].mxu0
        %v4554 = vadd.f32 %v4393, %v4553
        %v4555 = vpop.f32.mrb[0].mxu0
        %v4556 = vpop.f32.mrb[0].mxu0
        %v4557 = vadd.f32 %v4396, %v4556
        %v4558 = vpop.f32.mrb[0].mxu0
        %4559 = vmatprep.mubr.bf16.mxu0 0
        %4560 = vmatmul.mubr.bf16.gmra.mrb[0].mxu0 %v4059
        %v4561 = vpop.f32.mrb[0].mxu0
        %v4562 = vadd.f32 %v4401, %v4561
        %v4563 = vpop.f32.mrb[0].mxu0
        %v4564 = vpop.f32.mrb[0].mxu0
        %v4565 = vadd.f32 %v4404, %v4564
        %v4566 = vpop.f32.mrb[0].mxu0
        %4567 = vmatprep.mubr.bf16.mxu0 0
        %4568 = vmatmul.mubr.bf16.gmra.mrb[0].mxu0 %v4062
        %v4569 = vpop.f32.mrb[0].mxu0
        %v4570 = vadd.f32 %v4409, %v4569
        %v4571 = vpop.f32.mrb[0].mxu0
        %v4572 = vpop.f32.mrb[0].mxu0
        %v4573 = vadd.f32 %v4412, %v4572
        %v4574 = vpop.f32.mrb[0].mxu0
        %4575 = vmatprep.mubr.bf16.mxu0 0
        %4576 = vmatmul.mubr.bf16.gmra.mrb[0].mxu0 %v4065
        %v4577 = vpop.f32.mrb[0].mxu0
        %v4578 = vadd.f32 %v4417, %v4577
        %v4579 = vpop.f32.mrb[0].mxu0
        %v4580 = vpop.f32.mrb[0].mxu0
        %v4581 = vadd.f32 %v4420, %v4580
        %v4582 = vpop.f32.mrb[0].mxu0
        %4583 = vmatprep.mubr.bf16.mxu0 0
        %4584 = vmatmul.mubr.bf16.gmra.mrb[0].mxu0 %v4068
        %v4585 = vpop.f32.mrb[0].mxu0
        %v4586 = vadd.f32 %v4425, %v4585
        %v4587 = vpop.f32.mrb[0].mxu0
        %v4588 = vpop.f32.mrb[0].mxu0
        %v4589 = vadd.f32 %v4428, %v4588
        %v4590 = vpop.f32.mrb[0].mxu0
        %4591 = vmatprep.mubr.bf16.mxu0 0
        %4592 = vmatmul.mubr.bf16.gmra.mrb[0].mxu0 %v4071
        %v4593 = vpop.f32.mrb[0].mxu0
        %v4594 = vadd.f32 %v4433, %v4593
        %v4595 = vpop.f32.mrb[0].mxu0
        %v4596 = vpop.f32.mrb[0].mxu0
        %v4597 = vadd.f32 %v4436, %v4596
        %v4598 = vpop.f32.mrb[0].mxu0
        %4599 = vmatprep.mubr.bf16.mxu0 0
        %4600 = vmatmul.mubr.bf16.gmra.mrb[0].mxu0 %v4074
        %v4601 = vpop.f32.mrb[0].mxu0
        %v4602 = vadd.f32 %v4441, %v4601
        %v4603 = vpop.f32.mrb[0].mxu0
        %v4604 = vpop.f32.mrb[0].mxu0
        %v4605 = vadd.f32 %v4444, %v4604
        %v4606 = vpop.f32.mrb[0].mxu0
        %4607 = vmatprep.mubr.bf16.mxu0 0
        %4608 = vmatmul.mubr.bf16.gmra.mrb[0].mxu0 %v4077
        %v4609 = vpop.f32.mrb[0].mxu0
        %v4610 = vadd.f32 %v4449, %v4609
        %v4611 = vpop.f32.mrb[0].mxu0
        %v4612 = vpop.f32.mrb[0].mxu0
        %v4613 = vadd.f32 %v4452, %v4612
        %v4614 = vpop.f32.mrb[0].mxu0
        %4615 = vmatprep.mubr.bf16.mxu0 0
        %4616 = vmatmul.mubr.bf16.gmra.mrb[0].mxu0 %v4080
        %v4617 = vpop.f32.mrb[0].mxu0
        %v4618 = vadd.f32 %v4457, %v4617
        %v4619 = vpop.f32.mrb[0].mxu0
        %v4620 = vpop.f32.mrb[0].mxu0
        %v4621 = vadd.f32 %v4460, %v4620
        %v4622 = vpop.f32.mrb[0].mxu0
        %4623 = vmatprep.mubr.bf16.mxu0 0
        %4624 = vmatmul.mubr.bf16.gmra.mrb[0].mxu0 %v4083
        %v4625 = vpop.f32.mrb[0].mxu0
        %v4626 = vadd.f32 %v4465, %v4625
        %v4627 = vpop.f32.mrb[0].mxu0
        %v4628 = vpop.f32.mrb[0].mxu0
        %v4629 = vadd.f32 %v4468, %v4628
        %v4630 = vpop.f32.mrb[0].mxu0
        %4631 = vmatprep.mubr.bf16.mxu0 0
        %4632 = vmatmul.mubr.bf16.gmra.mrb[0].mxu0 %v4086
        %v4633 = vpop.f32.mrb[0].mxu0
        %v4634 = vadd.f32 %v4473, %v4633
        %v4635 = vpop.f32.mrb[0].mxu0
        %v4636 = vpop.f32.mrb[0].mxu0
        %v4637 = vadd.f32 %v4476, %v4636
        %v4638 = vpop.f32.mrb[0].mxu0
        %4639 = vmatprep.mubr.bf16.mxu0 0
        %4640 = vmatmul.mubr.bf16.gmra.mrb[0].mxu0 %v4089
        %v4641 = vpop.f32.mrb[0].mxu0
        %v4642 = vadd.f32 %v4481, %v4641
        %v4643 = vpop.f32.mrb[0].mxu0
        %v4644 = vpop.f32.mrb[0].mxu0
        %v4645 = vadd.f32 %v4484, %v4644
        %v4646 = vpop.f32.mrb[0].mxu0
        %4647 = vmatprep.mubr.bf16.mxu0 0
        %4648 = vmatmul.mubr.bf16.gmra.mrb[0].mxu0 %v4140
        %v4649 = vpop.f32.mrb[0].mxu0
        %v4650 = vadd.f32 %v4489, %v4649
        %v4651 = vpop.f32.mrb[0].mxu0
        %v4652 = vpop.f32.mrb[0].mxu0
        %v4653 = vadd.f32 %v4492, %v4652
        %v4654 = vpop.f32.mrb[0].mxu0
        %4655 = vdwg.mxu0
        %v4704 = vunpack.c.l.b16 %v4090
        %v4705 = vunpack.c.l.b16 %v4091
        %v4706 = vunpack.c.l.b16 %v4092
        %v4707 = vunpack.c.l.b16 %v4093
        %v4708 = vunpack.c.l.b16 %v4094
        %v4709 = vunpack.c.l.b16 %v4095
        %v4710 = vunpack.c.l.b16 %v4096
        %v4711 = vunpack.c.l.b16 %v4097
        %v4712 = vunpack.c.l.b16 %v4098
        %v4713 = vunpack.c.l.b16 %v4099
        %v4714 = vunpack.c.l.b16 %v4100
        %v4715 = vunpack.c.l.b16 %v4101
        %v4716 = vunpack.c.l.b16 %v4102
        %v4717 = vunpack.c.l.b16 %v4103
        %v4718 = vunpack.c.l.b16 %v4104
        %v4719 = vunpack.c.l.b16 %v4105
        %v4720 = vunpack.c.l.b16 %v4106
        %v4721 = vunpack.c.l.b16 %v4107
        %v4722 = vunpack.c.l.b16 %v4108
        %v4723 = vunpack.c.l.b16 %v4109
        %v4724 = vunpack.c.l.b16 %v4110
        %v4725 = vunpack.c.l.b16 %v4111
        %v4726 = vunpack.c.l.b16 %v4112
        %v4727 = vunpack.c.l.b16 %v4113
        %v4728 = vunpack.c.l.b16 %v4114
        %v4729 = vunpack.c.l.b16 %v4115
        %v4730 = vunpack.c.l.b16 %v4116
        %v4731 = vunpack.c.l.b16 %v4117
        %v4732 = vunpack.c.l.b16 %v4118
        %v4733 = vunpack.c.l.b16 %v4119
        %v4734 = vunpack.c.l.b16 %v4120
        %v4735 = vunpack.c.l.b16 %v4121
        %v4736 = vunpack.c.l.b16 %v4122
        %v4737 = vunpack.c.l.b16 %v4123
        %v4738 = vunpack.c.l.b16 %v4124
        %v4739 = vunpack.c.l.b16 %v4125
        %v4740 = vunpack.c.l.b16 %v4126
        %v4741 = vunpack.c.l.b16 %v4127
        %v4742 = vunpack.c.l.b16 %v4128
        %v4743 = vunpack.c.l.b16 %v4129
        %v4744 = vunpack.c.l.b16 %v4130
        %v4745 = vunpack.c.l.b16 %v4131
        %v4746 = vunpack.c.l.b16 %v4132
        %v4747 = vunpack.c.l.b16 %v4133
        %v4748 = vunpack.c.l.b16 %v4134
        %v4749 = vunpack.c.l.b16 %v4135
        %v4750 = vunpack.c.l.b16 %v4136
        %v4751 = vunpack.c.l.b16 %v4137
        %v4752 = vpack.c.b16 %v4705, %v4704
        %v4753 = vpack.c.b16 %v4707, %v4706
        %v4754 = vpack.c.b16 %v4709, %v4708
        %v4755 = vpack.c.b16 %v4711, %v4710
        %v4756 = vpack.c.b16 %v4713, %v4712
        %v4757 = vpack.c.b16 %v4715, %v4714
        %v4758 = vpack.c.b16 %v4717, %v4716
        %v4759 = vpack.c.b16 %v4719, %v4718
        %v4760 = vpack.c.b16 %v4721, %v4720
        %v4761 = vpack.c.b16 %v4723, %v4722
        %v4762 = vpack.c.b16 %v4725, %v4724
        %v4763 = vpack.c.b16 %v4727, %v4726
        %v4764 = vpack.c.b16 %v4729, %v4728
        %v4765 = vpack.c.b16 %v4731, %v4730
        %v4766 = vpack.c.b16 %v4733, %v4732
        %v4767 = vpack.c.b16 %v4735, %v4734
        %v4768 = vpack.c.b16 %v4737, %v4736
        %v4769 = vpack.c.b16 %v4739, %v4738
        %v4770 = vpack.c.b16 %v4741, %v4740
        %v4771 = vpack.c.b16 %v4743, %v4742
        %v4772 = vpack.c.b16 %v4745, %v4744
        %v4773 = vpack.c.b16 %v4747, %v4746
        %v4774 = vpack.c.b16 %v4749, %v4748
        %v4775 = vpack.c.b16 %v4751, %v4750
        %4800 = vmatprep.subr.bf16.mxu0 0
        %4801 = vmatpush1.bf16.msra.mxu0 %v4752
        %4802 = vmatprep.subr.bf16.mxu0 0
        %4803 = vmatpush1.bf16.msra.mxu0 %v4753
        %4804 = vmatprep.subr.bf16.mxu0 0
        %4805 = vmatpush1.bf16.msra.mxu0 %v4754
        %4806 = vmatprep.subr.bf16.mxu0 0
        %4807 = vmatpush1.bf16.msra.mxu0 %v4755
        %4808 = vmatprep.subr.bf16.mxu0 0
        %4809 = vmatpush1.bf16.msra.mxu0 %v4756
        %4810 = vmatprep.subr.bf16.mxu0 0
        %4811 = vmatpush1.bf16.msra.mxu0 %v4757
        %4812 = vmatprep.subr.bf16.mxu0 0
        %4813 = vmatpush1.bf16.msra.mxu0 %v4758
        %4814 = vmatprep.subr.bf16.mxu0 0
        %4815 = vmatpush1.bf16.msra.mxu0 %v4759
        %4816 = vmatprep.subr.bf16.mxu0 0
        %4817 = vmatpush1.bf16.msra.mxu0 %v4760
        %4818 = vmatprep.subr.bf16.mxu0 0
        %4819 = vmatpush1.bf16.msra.mxu0 %v4761
        %4820 = vmatprep.subr.bf16.mxu0 0
        %4821 = vmatpush1.bf16.msra.mxu0 %v4762
        %4822 = vmatprep.subr.bf16.mxu0 0
        %4823 = vmatpush1.bf16.msra.mxu0 %v4763
        %4824 = vmatprep.subr.bf16.mxu0 0
        %4825 = vmatpush1.bf16.msra.mxu0 %v4764
        %4826 = vmatprep.subr.bf16.mxu0 0
        %4827 = vmatpush1.bf16.msra.mxu0 %v4765
        %4828 = vmatprep.subr.bf16.mxu0 0
        %4829 = vmatpush1.bf16.msra.mxu0 %v4766
        %4830 = vmatprep.subr.bf16.mxu0 0
        %4831 = vmatpush1.bf16.msra.mxu0 %v4767
        %4832 = vmatprep.mubr.bf16.mxu0 %v4043
        %4833 = vmatmul.mubr.bf16.gmra.mrb[0].mxu0 %v4042
        %v4834 = vpop.f32.mrb[0].mxu0
        %v4835 = vadd.f32 %v4530, %v4834
        %v4836 = vpop.f32.mrb[0].mxu0
        %v4837 = vpop.f32.mrb[0].mxu0
        %v4838 = vadd.f32 %v4533, %v4837
        %v4839 = vpop.f32.mrb[0].mxu0
        %4840 = vmatprep.mubr.bf16.mxu0 %v4046
        %4841 = vmatmul.mubr.bf16.gmra.mrb[0].mxu0 %v4045
        %v4842 = vpop.f32.mrb[0].mxu0
        %v4843 = vadd.f32 %v4538, %v4842
        %v4844 = vpop.f32.mrb[0].mxu0
        %v4845 = vpop.f32.mrb[0].mxu0
        %v4846 = vadd.f32 %v4541, %v4845
        %v4847 = vpop.f32.mrb[0].mxu0
        %4848 = vmatprep.mubr.bf16.mxu0 %v4049
        %4849 = vmatmul.mubr.bf16.gmra.mrb[0].mxu0 %v4048
        %v4850 = vpop.f32.mrb[0].mxu0
        %v4851 = vadd.f32 %v4546, %v4850
        %v4852 = vpop.f32.mrb[0].mxu0
        %v4853 = vpop.f32.mrb[0].mxu0
        %v4854 = vadd.f32 %v4549, %v4853
        %v4855 = vpop.f32.mrb[0].mxu0
        %4856 = vmatprep.mubr.bf16.mxu0 %v4052
        %4857 = vmatmul.mubr.bf16.gmra.mrb[0].mxu0 %v4051
        %v4858 = vpop.f32.mrb[0].mxu0
        %v4859 = vadd.f32 %v4554, %v4858
        %v4860 = vpop.f32.mrb[0].mxu0
        %v4861 = vpop.f32.mrb[0].mxu0
        %v4862 = vadd.f32 %v4557, %v4861
        %v4863 = vpop.f32.mrb[0].mxu0
        %4864 = vmatprep.mubr.bf16.mxu0 %v4055
        %4865 = vmatmul.mubr.bf16.gmra.mrb[0].mxu0 %v4054
        %v4866 = vpop.f32.mrb[0].mxu0
        %v4867 = vadd.f32 %v4562, %v4866
        %v4868 = vpop.f32.mrb[0].mxu0
        %v4869 = vpop.f32.mrb[0].mxu0
        %v4870 = vadd.f32 %v4565, %v4869
        %v4871 = vpop.f32.mrb[0].mxu0
        %4872 = vmatprep.mubr.bf16.mxu0 %v4058
        %4873 = vmatmul.mubr.bf16.gmra.mrb[0].mxu0 %v4057
        %v4874 = vpop.f32.mrb[0].mxu0
        %v4875 = vadd.f32 %v4570, %v4874
        %v4876 = vpop.f32.mrb[0].mxu0
        %v4877 = vpop.f32.mrb[0].mxu0
        %v4878 = vadd.f32 %v4573, %v4877
        %v4879 = vpop.f32.mrb[0].mxu0
        %4880 = vmatprep.mubr.bf16.mxu0 %v4061
        %4881 = vmatmul.mubr.bf16.gmra.mrb[0].mxu0 %v4060
        %v4882 = vpop.f32.mrb[0].mxu0
        %v4883 = vadd.f32 %v4578, %v4882
        %v4884 = vpop.f32.mrb[0].mxu0
        %v4885 = vpop.f32.mrb[0].mxu0
        %v4886 = vadd.f32 %v4581, %v4885
        %v4887 = vpop.f32.mrb[0].mxu0
        %4888 = vmatprep.mubr.bf16.mxu0 %v4064
        %4889 = vmatmul.mubr.bf16.gmra.mrb[0].mxu0 %v4063
        %v4890 = vpop.f32.mrb[0].mxu0
        %v4891 = vadd.f32 %v4586, %v4890
        %v4892 = vpop.f32.mrb[0].mxu0
        %v4893 = vpop.f32.mrb[0].mxu0
        %v4894 = vadd.f32 %v4589, %v4893
        %v4895 = vpop.f32.mrb[0].mxu0
        %4896 = vmatprep.mubr.bf16.mxu0 %v4067
        %4897 = vmatmul.mubr.bf16.gmra.mrb[0].mxu0 %v4066
        %v4898 = vpop.f32.mrb[0].mxu0
        %v4899 = vadd.f32 %v4594, %v4898
        %v4900 = vpop.f32.mrb[0].mxu0
        %v4901 = vpop.f32.mrb[0].mxu0
        %v4902 = vadd.f32 %v4597, %v4901
        %v4903 = vpop.f32.mrb[0].mxu0
        %4904 = vmatprep.mubr.bf16.mxu0 %v4070
        %4905 = vmatmul.mubr.bf16.gmra.mrb[0].mxu0 %v4069
        %v4906 = vpop.f32.mrb[0].mxu0
        %v4907 = vadd.f32 %v4602, %v4906
        %v4908 = vpop.f32.mrb[0].mxu0
        %v4909 = vpop.f32.mrb[0].mxu0
        %v4910 = vadd.f32 %v4605, %v4909
        %v4911 = vpop.f32.mrb[0].mxu0
        %4912 = vmatprep.mubr.bf16.mxu0 %v4073
        %4913 = vmatmul.mubr.bf16.gmra.mrb[0].mxu0 %v4072
        %v4914 = vpop.f32.mrb[0].mxu0
        %v4915 = vadd.f32 %v4610, %v4914
        %v4916 = vpop.f32.mrb[0].mxu0
        %v4917 = vpop.f32.mrb[0].mxu0
        %v4918 = vadd.f32 %v4613, %v4917
        %v4919 = vpop.f32.mrb[0].mxu0
        %4920 = vmatprep.mubr.bf16.mxu0 %v4076
        %4921 = vmatmul.mubr.bf16.gmra.mrb[0].mxu0 %v4075
        %v4922 = vpop.f32.mrb[0].mxu0
        %v4923 = vadd.f32 %v4618, %v4922
        %v4924 = vpop.f32.mrb[0].mxu0
        %v4925 = vpop.f32.mrb[0].mxu0
        %v4926 = vadd.f32 %v4621, %v4925
        %v4927 = vpop.f32.mrb[0].mxu0
        %4928 = vmatprep.mubr.bf16.mxu0 %v4079
        %4929 = vmatmul.mubr.bf16.gmra.mrb[0].mxu0 %v4078
        %v4930 = vpop.f32.mrb[0].mxu0
        %v4931 = vadd.f32 %v4626, %v4930
        %v4932 = vpop.f32.mrb[0].mxu0
        %v4933 = vpop.f32.mrb[0].mxu0
        %v4934 = vadd.f32 %v4629, %v4933
        %v4935 = vpop.f32.mrb[0].mxu0
        %4936 = vmatprep.mubr.bf16.mxu0 %v4082
        %4937 = vmatmul.mubr.bf16.gmra.mrb[0].mxu0 %v4081
        %v4938 = vpop.f32.mrb[0].mxu0
        %v4939 = vadd.f32 %v4634, %v4938
        %v4940 = vpop.f32.mrb[0].mxu0
        %v4941 = vpop.f32.mrb[0].mxu0
        %v4942 = vadd.f32 %v4637, %v4941
        %v4943 = vpop.f32.mrb[0].mxu0
        %4944 = vmatprep.mubr.bf16.mxu0 %v4085
        %4945 = vmatmul.mubr.bf16.gmra.mrb[0].mxu0 %v4084
        %v4946 = vpop.f32.mrb[0].mxu0
        %v4947 = vadd.f32 %v4642, %v4946
        %v4948 = vpop.f32.mrb[0].mxu0
        %v4949 = vpop.f32.mrb[0].mxu0
        %v4950 = vadd.f32 %v4645, %v4949
        %v4951 = vpop.f32.mrb[0].mxu0
        %4952 = vmatprep.mubr.bf16.mxu0 %v4088
        %4953 = vmatmul.mubr.bf16.gmra.mrb[0].mxu0 %v4087
        %v4954 = vpop.f32.mrb[0].mxu0
        %v4955 = vadd.f32 %v4650, %v4954
        %v4956 = vpop.f32.mrb[0].mxu0
        %v4957 = vpop.f32.mrb[0].mxu0
        %v4958 = vadd.f32 %v4653, %v4957
        %v4959 = vpop.f32.mrb[0].mxu0
        %4960 = vdwg.mxu0
        %4961 = vmatprep.subr.bf16.mxu0 0
        %4962 = vmatpush1.bf16.msra.mxu0 %v4768
        %4963 = vmatprep.subr.bf16.mxu0 0
        %4964 = vmatpush1.bf16.msra.mxu0 %v4769
        %4965 = vmatprep.subr.bf16.mxu0 0
        %4966 = vmatpush1.bf16.msra.mxu0 %v4770
        %4967 = vmatprep.subr.bf16.mxu0 0
        %4968 = vmatpush1.bf16.msra.mxu0 %v4771
        %4969 = vmatprep.subr.bf16.mxu0 0
        %4970 = vmatpush1.bf16.msra.mxu0 %v4772
        %4971 = vmatprep.subr.bf16.mxu0 0
        %4972 = vmatpush1.bf16.msra.mxu0 %v4773
        %4973 = vmatprep.subr.bf16.mxu0 0
        %4974 = vmatpush1.bf16.msra.mxu0 %v4774
        %4975 = vmatprep.subr.bf16.mxu0 0
        %4976 = vmatpush1.bf16.msra.mxu0 %v4775
        %4977 = vmatprep.subr.bf16.mxu0 0
        %4978 = vmatpush1.bf16.msra.mxu0 0
        %4979 = vmatprep.subr.bf16.mxu0 0
        %4980 = vmatpush1.bf16.msra.mxu0 0
        %4981 = vmatprep.subr.bf16.mxu0 0
        %4982 = vmatpush1.bf16.msra.mxu0 0
        %4983 = vmatprep.subr.bf16.mxu0 0
        %4984 = vmatpush1.bf16.msra.mxu0 0
        %4985 = vmatprep.subr.bf16.mxu0 0
        %4986 = vmatpush1.bf16.msra.mxu0 0
        %4987 = vmatprep.subr.bf16.mxu0 0
        %4988 = vmatpush1.bf16.msra.mxu0 0
        %4989 = vmatprep.subr.bf16.mxu0 0
        %4990 = vmatpush1.bf16.msra.mxu0 0
        %4991 = vmatprep.subr.bf16.mxu0 0
        %4992 = vmatpush1.bf16.msra.mxu0 0
        %4993 = vmatprep.mubr.bf16.mxu0 0
        %4994 = vmatmul.mubr.bf16.gmra.mrb[0].mxu0 %v4044
        %v4995 = vpop.f32.mrb[0].mxu0
        %v4996 = vadd.f32 %v4835, %v4995
        %v4997 = vpop.f32.mrb[0].mxu0
        %v4998 = vpop.f32.mrb[0].mxu0
        %v4999 = vadd.f32 %v4838, %v4998
        %v5000 = vpop.f32.mrb[0].mxu0
        %5001 = vmatprep.mubr.bf16.mxu0 0
        %5002 = vmatmul.mubr.bf16.gmra.mrb[0].mxu0 %v4047
        %v5003 = vpop.f32.mrb[0].mxu0
        %v5004 = vadd.f32 %v4843, %v5003
        %v5005 = vpop.f32.mrb[0].mxu0
        %v5006 = vpop.f32.mrb[0].mxu0
        %v5007 = vadd.f32 %v4846, %v5006
        %v5008 = vpop.f32.mrb[0].mxu0
        %5009 = vmatprep.mubr.bf16.mxu0 0
        %5010 = vmatmul.mubr.bf16.gmra.mrb[0].mxu0 %v4050
        %v5011 = vpop.f32.mrb[0].mxu0
        %v5012 = vadd.f32 %v4851, %v5011
        %v5013 = vpop.f32.mrb[0].mxu0
        %v5014 = vpop.f32.mrb[0].mxu0
        %v5015 = vadd.f32 %v4854, %v5014
        %v5016 = vpop.f32.mrb[0].mxu0
        %5017 = vmatprep.mubr.bf16.mxu0 0
        %5018 = vmatmul.mubr.bf16.gmra.mrb[0].mxu0 %v4053
        %v5019 = vpop.f32.mrb[0].mxu0
        %v5020 = vadd.f32 %v4859, %v5019
        %v5021 = vpop.f32.mrb[0].mxu0
        %v5022 = vpop.f32.mrb[0].mxu0
        %v5023 = vadd.f32 %v4862, %v5022
        %v5024 = vpop.f32.mrb[0].mxu0
        %5025 = vmatprep.mubr.bf16.mxu0 0
        %5026 = vmatmul.mubr.bf16.gmra.mrb[0].mxu0 %v4056
        %v5027 = vpop.f32.mrb[0].mxu0
        %v5028 = vadd.f32 %v4867, %v5027
        %v5029 = vpop.f32.mrb[0].mxu0
        %v5030 = vpop.f32.mrb[0].mxu0
        %v5031 = vadd.f32 %v4870, %v5030
        %v5032 = vpop.f32.mrb[0].mxu0
        %5033 = vmatprep.mubr.bf16.mxu0 0
        %5034 = vmatmul.mubr.bf16.gmra.mrb[0].mxu0 %v4059
        %v5035 = vpop.f32.mrb[0].mxu0
        %v5036 = vadd.f32 %v4875, %v5035
        %v5037 = vpop.f32.mrb[0].mxu0
        %v5038 = vpop.f32.mrb[0].mxu0
        %v5039 = vadd.f32 %v4878, %v5038
        %v5040 = vpop.f32.mrb[0].mxu0
        %5041 = vmatprep.mubr.bf16.mxu0 0
        %5042 = vmatmul.mubr.bf16.gmra.mrb[0].mxu0 %v4062
        %v5043 = vpop.f32.mrb[0].mxu0
        %v5044 = vadd.f32 %v4883, %v5043
        %v5045 = vpop.f32.mrb[0].mxu0
        %v5046 = vpop.f32.mrb[0].mxu0
        %v5047 = vadd.f32 %v4886, %v5046
        %v5048 = vpop.f32.mrb[0].mxu0
        %5049 = vmatprep.mubr.bf16.mxu0 0
        %5050 = vmatmul.mubr.bf16.gmra.mrb[0].mxu0 %v4065
        %v5051 = vpop.f32.mrb[0].mxu0
        %v5052 = vadd.f32 %v4891, %v5051
        %v5053 = vpop.f32.mrb[0].mxu0
        %v5054 = vpop.f32.mrb[0].mxu0
        %v5055 = vadd.f32 %v4894, %v5054
        %v5056 = vpop.f32.mrb[0].mxu0
        %5057 = vmatprep.mubr.bf16.mxu0 0
        %5058 = vmatmul.mubr.bf16.gmra.mrb[0].mxu0 %v4068
        %v5059 = vpop.f32.mrb[0].mxu0
        %v5060 = vadd.f32 %v4899, %v5059
        %v5061 = vpop.f32.mrb[0].mxu0
        %v5062 = vpop.f32.mrb[0].mxu0
        %v5063 = vadd.f32 %v4902, %v5062
        %v5064 = vpop.f32.mrb[0].mxu0
        %5065 = vmatprep.mubr.bf16.mxu0 0
        %5066 = vmatmul.mubr.bf16.gmra.mrb[0].mxu0 %v4071
        %v5067 = vpop.f32.mrb[0].mxu0
        %v5068 = vadd.f32 %v4907, %v5067
        %v5069 = vpop.f32.mrb[0].mxu0
        %v5070 = vpop.f32.mrb[0].mxu0
        %v5071 = vadd.f32 %v4910, %v5070
        %v5072 = vpop.f32.mrb[0].mxu0
        %5073 = vmatprep.mubr.bf16.mxu0 0
        %5074 = vmatmul.mubr.bf16.gmra.mrb[0].mxu0 %v4074
        %v5075 = vpop.f32.mrb[0].mxu0
        %v5076 = vadd.f32 %v4915, %v5075
        %v5077 = vpop.f32.mrb[0].mxu0
        %v5078 = vpop.f32.mrb[0].mxu0
        %v5079 = vadd.f32 %v4918, %v5078
        %v5080 = vpop.f32.mrb[0].mxu0
        %5081 = vmatprep.mubr.bf16.mxu0 0
        %5082 = vmatmul.mubr.bf16.gmra.mrb[0].mxu0 %v4077
        %v5083 = vpop.f32.mrb[0].mxu0
        %v5084 = vadd.f32 %v4923, %v5083
        %v5085 = vpop.f32.mrb[0].mxu0
        %v5086 = vpop.f32.mrb[0].mxu0
        %v5087 = vadd.f32 %v4926, %v5086
        %v5088 = vpop.f32.mrb[0].mxu0
        %5089 = vmatprep.mubr.bf16.mxu0 0
        %5090 = vmatmul.mubr.bf16.gmra.mrb[0].mxu0 %v4080
        %v5091 = vpop.f32.mrb[0].mxu0
        %v5092 = vadd.f32 %v4931, %v5091
        %v5093 = vpop.f32.mrb[0].mxu0
        %v5094 = vpop.f32.mrb[0].mxu0
        %v5095 = vadd.f32 %v4934, %v5094
        %v5096 = vpop.f32.mrb[0].mxu0
        %5097 = vmatprep.mubr.bf16.mxu0 0
        %5098 = vmatmul.mubr.bf16.gmra.mrb[0].mxu0 %v4083
        %v5099 = vpop.f32.mrb[0].mxu0
        %v5100 = vadd.f32 %v4939, %v5099
        %v5101 = vpop.f32.mrb[0].mxu0
        %v5102 = vpop.f32.mrb[0].mxu0
        %v5103 = vadd.f32 %v4942, %v5102
        %v5104 = vpop.f32.mrb[0].mxu0
        %5105 = vmatprep.mubr.bf16.mxu0 0
        %5106 = vmatmul.mubr.bf16.gmra.mrb[0].mxu0 %v4086
        %v5107 = vpop.f32.mrb[0].mxu0
        %v5108 = vadd.f32 %v4947, %v5107
        %v5109 = vpop.f32.mrb[0].mxu0
        %v5110 = vpop.f32.mrb[0].mxu0
        %v5111 = vadd.f32 %v4950, %v5110
        %v5112 = vpop.f32.mrb[0].mxu0
        %5113 = vmatprep.mubr.bf16.mxu0 0
        %5114 = vmatmul.mubr.bf16.gmra.mrb[0].mxu0 %v4089
        %v5115 = vpop.f32.mrb[0].mxu0
        %v5116 = vadd.f32 %v4955, %v5115
        %v5117 = vpop.f32.mrb[0].mxu0
        %v5118 = vpop.f32.mrb[0].mxu0
        %v5119 = vadd.f32 %v4958, %v5118
        %v5120 = vpop.f32.mrb[0].mxu0
        %5121 = vdwg.mxu0
        %v5122 = vld [vmem:[#allocation5 + $0x30] sm:$0xff]
        %v5123 = vld [vmem:[#allocation5 + $0x38] sm:$0xff]
        %v5124 = vld [vmem:[#allocation5 + $0x40] sm:$0xff]
        %v5125 = vld [vmem:[#allocation5 + $0x48] sm:$0xff]
        %v5126 = vld [vmem:[#allocation5 + $0x50] sm:$0xff]
        %v5127 = vld [vmem:[#allocation5 + $0x58] sm:$0xff]
        %v5128 = vld [vmem:[#allocation5 + $0x60] sm:$0xff]
        %v5129 = vld [vmem:[#allocation5 + $0x68] sm:$0xff]
        %v5130 = vld [vmem:[#allocation5 + $0x70] sm:$0xff]
        %v5131 = vld [vmem:[#allocation5 + $0x78] sm:$0xff]
        %v5132 = vld [vmem:[#allocation5 + $0x80] sm:$0xff]
        %v5133 = vld [vmem:[#allocation5 + $0x88] sm:$0xff]
        %v5134 = vld [vmem:[#allocation5 + $0x90] sm:$0xff]
        %v5135 = vld [vmem:[#allocation5 + $0x98] sm:$0xff]
        %v5136 = vld [vmem:[#allocation5 + $0xa0] sm:$0xff]
        %v5137 = vld [vmem:[#allocation5 + $0xa8] sm:$0xff]
        %v5138 = vld [vmem:[#allocation5 + $0xb0] sm:$0xff]
        %v5139 = vld [vmem:[#allocation5 + $0xb8] sm:$0xff]
        %v5140 = vld [vmem:[#allocation5 + $0xc0] sm:$0xff]
        %v5141 = vld [vmem:[#allocation5 + $0xc8] sm:$0xff]
        %v5142 = vld [vmem:[#allocation5 + $0xd0] sm:$0xff]
        %v5143 = vld [vmem:[#allocation5 + $0xd8] sm:$0xff]
        %v5144 = vld [vmem:[#allocation5 + $0xe0] sm:$0xff]
        %v5145 = vld [vmem:[#allocation5 + $0xe8] sm:$0xff]
        %v5146 = vld [vmem:[#allocation5 + $0xf0] sm:$0xff]
        %v5147 = vld [vmem:[#allocation5 + $0xf8] sm:$0xff]
        %v5148 = vld [vmem:[#allocation5 + $0x100] sm:$0xff]
        %v5149 = vld [vmem:[#allocation5 + $0x108] sm:$0xff]
        %v5150 = vld [vmem:[#allocation5 + $0x110] sm:$0xff]
        %v5151 = vld [vmem:[#allocation5 + $0x118] sm:$0xff]
        %v5152 = vld [vmem:[#allocation5 + $0x120] sm:$0xff]
        %v5153 = vld [vmem:[#allocation5 + $0x128] sm:$0xff]
        %v5154 = vld [vmem:[#allocation5 + $0x130] sm:$0xff]
        %v5155 = vld [vmem:[#allocation5 + $0x138] sm:$0xff]
        %v5156 = vld [vmem:[#allocation5 + $0x140] sm:$0xff]
        %v5157 = vld [vmem:[#allocation5 + $0x148] sm:$0xff]
        %v5158 = vld [vmem:[#allocation5 + $0x150] sm:$0xff]
        %v5159 = vld [vmem:[#allocation5 + $0x158] sm:$0xff]
        %v5160 = vld [vmem:[#allocation5 + $0x160] sm:$0xff]
        %v5161 = vld [vmem:[#allocation5 + $0x168] sm:$0xff]
        %v5162 = vld [vmem:[#allocation5 + $0x170] sm:$0xff]
        %v5163 = vld [vmem:[#allocation5 + $0x178] sm:$0xff]
        %v5164 = vld [vmem:[#allocation5 + $0x180] sm:$0xff]
        %v5165 = vld [vmem:[#allocation5 + $0x188] sm:$0xff]
        %v5166 = vld [vmem:[#allocation5 + $0x190] sm:$0xff]
        %v5167 = vld [vmem:[#allocation5 + $0x198] sm:$0xff]
        %v5168 = vld [vmem:[#allocation5 + $0x1a0] sm:$0xff]
        %v5169 = vld [vmem:[#allocation5 + $0x1a8] sm:$0xff]
        %s5170 = scalar_lea.vmem %s4, 384
        %v5171 = vld [vmem:[%s5170] sm:$0xf]
        %v5172 = vld [vmem:[%s5170 + $0x4] sm:$0xf]
        %v5173 = vld [vmem:[%s5170 + $0x8] sm:$0xf]
        %v5174 = vld [vmem:[%s5170 + $0xc] sm:$0xf]
        %v5175 = vld [vmem:[%s5170 + $0x10] sm:$0xf]
        %v5176 = vld [vmem:[%s5170 + $0x14] sm:$0xf]
        %v5177 = vld [vmem:[%s5170 + $0x18] sm:$0xf]
        %v5178 = vld [vmem:[%s5170 + $0x1c] sm:$0xf]
        %v5179 = vld [vmem:[%s5170 + $0x20] sm:$0xf]
        %v5180 = vld [vmem:[%s5170 + $0x24] sm:$0xf]
        %v5181 = vld [vmem:[%s5170 + $0x28] sm:$0xf]
        %v5182 = vld [vmem:[%s5170 + $0x2c] sm:$0xf]
        %v5183 = vld [vmem:[%s5170 + $0x30] sm:$0xf]
        %v5184 = vld [vmem:[%s5170 + $0x34] sm:$0xf]
        %v5185 = vld [vmem:[%s5170 + $0x38] sm:$0xf]
        %v5186 = vld [vmem:[%s5170 + $0x3c] sm:$0xf]
        %v5187 = vld [vmem:[%s5170 + $0x40] sm:$0xf]
        %v5188 = vld [vmem:[%s5170 + $0x44] sm:$0xf]
        %v5189 = vld [vmem:[%s5170 + $0x48] sm:$0xf]
        %v5190 = vld [vmem:[%s5170 + $0x4c] sm:$0xf]
        %v5191 = vld [vmem:[%s5170 + $0x50] sm:$0xf]
        %v5192 = vld [vmem:[%s5170 + $0x54] sm:$0xf]
        %v5193 = vld [vmem:[%s5170 + $0x58] sm:$0xf]
        %v5194 = vld [vmem:[%s5170 + $0x5c] sm:$0xf]
        %v5195 = vld [vmem:[%s5170 + $0x60] sm:$0xf]
        %v5196 = vld [vmem:[%s5170 + $0x64] sm:$0xf]
        %v5197 = vld [vmem:[%s5170 + $0x68] sm:$0xf]
        %v5198 = vld [vmem:[%s5170 + $0x6c] sm:$0xf]
        %v5199 = vld [vmem:[%s5170 + $0x70] sm:$0xf]
        %v5200 = vld [vmem:[%s5170 + $0x74] sm:$0xf]
        %v5201 = vld [vmem:[%s5170 + $0x78] sm:$0xf]
        %v5202 = vld [vmem:[%s5170 + $0x7c] sm:$0xf]
        %v5203 = vld [vmem:[%s5170 + $0x80] sm:$0xf]
        %v5204 = vld [vmem:[%s5170 + $0x84] sm:$0xf]
        %v5205 = vld [vmem:[%s5170 + $0x88] sm:$0xf]
        %v5206 = vld [vmem:[%s5170 + $0x8c] sm:$0xf]
        %v5207 = vld [vmem:[%s5170 + $0x90] sm:$0xf]
        %v5208 = vld [vmem:[%s5170 + $0x94] sm:$0xf]
        %v5209 = vld [vmem:[%s5170 + $0x98] sm:$0xf]
        %v5210 = vld [vmem:[%s5170 + $0x9c] sm:$0xf]
        %v5211 = vld [vmem:[%s5170 + $0xa0] sm:$0xf]
        %v5212 = vld [vmem:[%s5170 + $0xa4] sm:$0xf]
        %v5213 = vld [vmem:[%s5170 + $0xa8] sm:$0xf]
        %v5214 = vld [vmem:[%s5170 + $0xac] sm:$0xf]
        %v5215 = vld [vmem:[%s5170 + $0xb0] sm:$0xf]
        %v5216 = vld [vmem:[%s5170 + $0xb4] sm:$0xf]
        %v5217 = vld [vmem:[%s5170 + $0xb8] sm:$0xf]
        %v5218 = vld [vmem:[%s5170 + $0xbc] sm:$0xf]
        %v5267 = vunpack.c.l.b16 %v5171
        %v5268 = vunpack.c.l.b16 %v5172
        %v5269 = vunpack.c.l.b16 %v5173
        %v5270 = vunpack.c.l.b16 %v5174
        %v5271 = vunpack.c.l.b16 %v5175
        %v5272 = vunpack.c.l.b16 %v5176
        %v5273 = vunpack.c.l.b16 %v5177
        %v5274 = vunpack.c.l.b16 %v5178
        %v5275 = vunpack.c.l.b16 %v5179
        %v5276 = vunpack.c.l.b16 %v5180
        %v5277 = vunpack.c.l.b16 %v5181
        %v5278 = vunpack.c.l.b16 %v5182
        %v5279 = vunpack.c.l.b16 %v5183
        %v5280 = vunpack.c.l.b16 %v5184
        %v5281 = vunpack.c.l.b16 %v5185
        %v5282 = vunpack.c.l.b16 %v5186
        %v5283 = vunpack.c.l.b16 %v5187
        %v5284 = vunpack.c.l.b16 %v5188
        %v5285 = vunpack.c.l.b16 %v5189
        %v5286 = vunpack.c.l.b16 %v5190
        %v5287 = vunpack.c.l.b16 %v5191
        %v5288 = vunpack.c.l.b16 %v5192
        %v5289 = vunpack.c.l.b16 %v5193
        %v5290 = vunpack.c.l.b16 %v5194
        %v5291 = vunpack.c.l.b16 %v5195
        %v5292 = vunpack.c.l.b16 %v5196
        %v5293 = vunpack.c.l.b16 %v5197
        %v5294 = vunpack.c.l.b16 %v5198
        %v5295 = vunpack.c.l.b16 %v5199
        %v5296 = vunpack.c.l.b16 %v5200
        %v5297 = vunpack.c.l.b16 %v5201
        %v5298 = vunpack.c.l.b16 %v5202
        %v5299 = vunpack.c.l.b16 %v5203
        %v5300 = vunpack.c.l.b16 %v5204
        %v5301 = vunpack.c.l.b16 %v5205
        %v5302 = vunpack.c.l.b16 %v5206
        %v5303 = vunpack.c.l.b16 %v5207
        %v5304 = vunpack.c.l.b16 %v5208
        %v5305 = vunpack.c.l.b16 %v5209
        %v5306 = vunpack.c.l.b16 %v5210
        %v5307 = vunpack.c.l.b16 %v5211
        %v5308 = vunpack.c.l.b16 %v5212
        %v5309 = vunpack.c.l.b16 %v5213
        %v5310 = vunpack.c.l.b16 %v5214
        %v5311 = vunpack.c.l.b16 %v5215
        %v5312 = vunpack.c.l.b16 %v5216
        %v5313 = vunpack.c.l.b16 %v5217
        %v5314 = vunpack.c.l.b16 %v5218
        %v5315 = vpack.c.b16 %v5268, %v5267
        %v5316 = vpack.c.b16 %v5270, %v5269
        %v5317 = vpack.c.b16 %v5272, %v5271
        %v5318 = vpack.c.b16 %v5274, %v5273
        %v5319 = vpack.c.b16 %v5276, %v5275
        %v5320 = vpack.c.b16 %v5278, %v5277
        %v5321 = vpack.c.b16 %v5280, %v5279
        %v5322 = vpack.c.b16 %v5282, %v5281
        %v5323 = vpack.c.b16 %v5284, %v5283
        %v5324 = vpack.c.b16 %v5286, %v5285
        %v5325 = vpack.c.b16 %v5288, %v5287
        %v5326 = vpack.c.b16 %v5290, %v5289
        %v5327 = vpack.c.b16 %v5292, %v5291
        %v5328 = vpack.c.b16 %v5294, %v5293
        %v5329 = vpack.c.b16 %v5296, %v5295
        %v5330 = vpack.c.b16 %v5298, %v5297
        %v5331 = vpack.c.b16 %v5300, %v5299
        %v5332 = vpack.c.b16 %v5302, %v5301
        %v5333 = vpack.c.b16 %v5304, %v5303
        %v5334 = vpack.c.b16 %v5306, %v5305
        %v5335 = vpack.c.b16 %v5308, %v5307
        %v5336 = vpack.c.b16 %v5310, %v5309
        %v5337 = vpack.c.b16 %v5312, %v5311
        %v5338 = vpack.c.b16 %v5314, %v5313
        %5363 = vmatprep.subr.bf16.mxu0 0
        %5364 = vmatpush1.bf16.msra.mxu0 %v5315
        %5365 = vmatprep.subr.bf16.mxu0 0
        %5366 = vmatpush1.bf16.msra.mxu0 %v5316
        %5367 = vmatprep.subr.bf16.mxu0 0
        %5368 = vmatpush1.bf16.msra.mxu0 %v5317
        %5369 = vmatprep.subr.bf16.mxu0 0
        %5370 = vmatpush1.bf16.msra.mxu0 %v5318
        %5371 = vmatprep.subr.bf16.mxu0 0
        %5372 = vmatpush1.bf16.msra.mxu0 %v5319
        %5373 = vmatprep.subr.bf16.mxu0 0
        %5374 = vmatpush1.bf16.msra.mxu0 %v5320
        %5375 = vmatprep.subr.bf16.mxu0 0
        %5376 = vmatpush1.bf16.msra.mxu0 %v5321
        %5377 = vmatprep.subr.bf16.mxu0 0
        %5378 = vmatpush1.bf16.msra.mxu0 %v5322
        %5379 = vmatprep.subr.bf16.mxu0 0
        %5380 = vmatpush1.bf16.msra.mxu0 %v5323
        %5381 = vmatprep.subr.bf16.mxu0 0
        %5382 = vmatpush1.bf16.msra.mxu0 %v5324
        %5383 = vmatprep.subr.bf16.mxu0 0
        %5384 = vmatpush1.bf16.msra.mxu0 %v5325
        %5385 = vmatprep.subr.bf16.mxu0 0
        %5386 = vmatpush1.bf16.msra.mxu0 %v5326
        %5387 = vmatprep.subr.bf16.mxu0 0
        %5388 = vmatpush1.bf16.msra.mxu0 %v5327
        %5389 = vmatprep.subr.bf16.mxu0 0
        %5390 = vmatpush1.bf16.msra.mxu0 %v5328
        %5391 = vmatprep.subr.bf16.mxu0 0
        %5392 = vmatpush1.bf16.msra.mxu0 %v5329
        %5393 = vmatprep.subr.bf16.mxu0 0
        %5394 = vmatpush1.bf16.msra.mxu0 %v5330
        %5395 = vmatprep.mubr.bf16.mxu0 %v5123
        %5396 = vmatmul.mubr.bf16.gmra.mrb[0].mxu0 %v5122
        %v5397 = vpop.f32.mrb[0].mxu0
        %v5398 = vadd.f32 0.0, %v5397
        %v5399 = vpop.f32.mrb[0].mxu0
        %v5400 = vpop.f32.mrb[0].mxu0
        %v5401 = vadd.f32 0.0, %v5400
        %v5402 = vpop.f32.mrb[0].mxu0
        %5403 = vmatprep.mubr.bf16.mxu0 %v5126
        %5404 = vmatmul.mubr.bf16.gmra.mrb[0].mxu0 %v5125
        %v5405 = vpop.f32.mrb[0].mxu0
        %v5406 = vadd.f32 0.0, %v5405
        %v5407 = vpop.f32.mrb[0].mxu0
        %v5408 = vpop.f32.mrb[0].mxu0
        %v5409 = vadd.f32 0.0, %v5408
        %v5410 = vpop.f32.mrb[0].mxu0
        %5411 = vmatprep.mubr.bf16.mxu0 %v5129
        %5412 = vmatmul.mubr.bf16.gmra.mrb[0].mxu0 %v5128
        %v5413 = vpop.f32.mrb[0].mxu0
        %v5414 = vadd.f32 0.0, %v5413
        %v5415 = vpop.f32.mrb[0].mxu0
        %v5416 = vpop.f32.mrb[0].mxu0
        %v5417 = vadd.f32 0.0, %v5416
        %v5418 = vpop.f32.mrb[0].mxu0
        %5419 = vmatprep.mubr.bf16.mxu0 %v5132
        %5420 = vmatmul.mubr.bf16.gmra.mrb[0].mxu0 %v5131
        %v5421 = vpop.f32.mrb[0].mxu0
        %v5422 = vadd.f32 0.0, %v5421
        %v5423 = vpop.f32.mrb[0].mxu0
        %v5424 = vpop.f32.mrb[0].mxu0
        %v5425 = vadd.f32 0.0, %v5424
        %v5426 = vpop.f32.mrb[0].mxu0
        %5427 = vmatprep.mubr.bf16.mxu0 %v5135
        %5428 = vmatmul.mubr.bf16.gmra.mrb[0].mxu0 %v5134
        %v5429 = vpop.f32.mrb[0].mxu0
        %v5430 = vadd.f32 0.0, %v5429
        %v5431 = vpop.f32.mrb[0].mxu0
        %v5432 = vpop.f32.mrb[0].mxu0
        %v5433 = vadd.f32 0.0, %v5432
        %v5434 = vpop.f32.mrb[0].mxu0
        %5435 = vmatprep.mubr.bf16.mxu0 %v5138
        %5436 = vmatmul.mubr.bf16.gmra.mrb[0].mxu0 %v5137
        %v5437 = vpop.f32.mrb[0].mxu0
        %v5438 = vadd.f32 0.0, %v5437
        %v5439 = vpop.f32.mrb[0].mxu0
        %v5440 = vpop.f32.mrb[0].mxu0
        %v5441 = vadd.f32 0.0, %v5440
        %v5442 = vpop.f32.mrb[0].mxu0
        %5443 = vmatprep.mubr.bf16.mxu0 %v5141
        %5444 = vmatmul.mubr.bf16.gmra.mrb[0].mxu0 %v5140
        %v5445 = vpop.f32.mrb[0].mxu0
        %v5446 = vadd.f32 0.0, %v5445
        %v5447 = vpop.f32.mrb[0].mxu0
        %v5448 = vpop.f32.mrb[0].mxu0
        %v5449 = vadd.f32 0.0, %v5448
        %v5450 = vpop.f32.mrb[0].mxu0
        %5451 = vmatprep.mubr.bf16.mxu0 %v5144
        %5452 = vmatmul.mubr.bf16.gmra.mrb[0].mxu0 %v5143
        %v5453 = vpop.f32.mrb[0].mxu0
        %v5454 = vadd.f32 0.0, %v5453
        %v5455 = vpop.f32.mrb[0].mxu0
        %v5456 = vpop.f32.mrb[0].mxu0
        %v5457 = vadd.f32 0.0, %v5456
        %v5458 = vpop.f32.mrb[0].mxu0
        %5459 = vmatprep.mubr.bf16.mxu0 %v5147
        %5460 = vmatmul.mubr.bf16.gmra.mrb[0].mxu0 %v5146
        %v5461 = vpop.f32.mrb[0].mxu0
        %v5462 = vadd.f32 0.0, %v5461
        %v5463 = vpop.f32.mrb[0].mxu0
        %v5464 = vpop.f32.mrb[0].mxu0
        %v5465 = vadd.f32 0.0, %v5464
        %v5466 = vpop.f32.mrb[0].mxu0
        %5467 = vmatprep.mubr.bf16.mxu0 %v5150
        %5468 = vmatmul.mubr.bf16.gmra.mrb[0].mxu0 %v5149
        %v5469 = vpop.f32.mrb[0].mxu0
        %v5470 = vadd.f32 0.0, %v5469
        %v5471 = vpop.f32.mrb[0].mxu0
        %v5472 = vpop.f32.mrb[0].mxu0
        %v5473 = vadd.f32 0.0, %v5472
        %v5474 = vpop.f32.mrb[0].mxu0
        %5475 = vmatprep.mubr.bf16.mxu0 %v5153
        %5476 = vmatmul.mubr.bf16.gmra.mrb[0].mxu0 %v5152
        %v5477 = vpop.f32.mrb[0].mxu0
        %v5478 = vadd.f32 0.0, %v5477
        %v5479 = vpop.f32.mrb[0].mxu0
        %v5480 = vpop.f32.mrb[0].mxu0
        %v5481 = vadd.f32 0.0, %v5480
        %v5482 = vpop.f32.mrb[0].mxu0
        %5483 = vmatprep.mubr.bf16.mxu0 %v5156
        %5484 = vmatmul.mubr.bf16.gmra.mrb[0].mxu0 %v5155
        %v5485 = vpop.f32.mrb[0].mxu0
        %v5486 = vadd.f32 0.0, %v5485
        %v5487 = vpop.f32.mrb[0].mxu0
        %v5488 = vpop.f32.mrb[0].mxu0
        %v5489 = vadd.f32 0.0, %v5488
        %v5490 = vpop.f32.mrb[0].mxu0
        %5491 = vmatprep.mubr.bf16.mxu0 %v5159
        %5492 = vmatmul.mubr.bf16.gmra.mrb[0].mxu0 %v5158
        %v5493 = vpop.f32.mrb[0].mxu0
        %v5494 = vadd.f32 0.0, %v5493
        %v5495 = vpop.f32.mrb[0].mxu0
        %v5496 = vpop.f32.mrb[0].mxu0
        %v5497 = vadd.f32 0.0, %v5496
        %v5498 = vpop.f32.mrb[0].mxu0
        %5499 = vmatprep.mubr.bf16.mxu0 %v5162
        %5500 = vmatmul.mubr.bf16.gmra.mrb[0].mxu0 %v5161
        %v5501 = vpop.f32.mrb[0].mxu0
        %v5502 = vadd.f32 0.0, %v5501
        %v5503 = vpop.f32.mrb[0].mxu0
        %v5504 = vpop.f32.mrb[0].mxu0
        %v5505 = vadd.f32 0.0, %v5504
        %v5506 = vpop.f32.mrb[0].mxu0
        %5507 = vmatprep.mubr.bf16.mxu0 %v5165
        %5508 = vmatmul.mubr.bf16.gmra.mrb[0].mxu0 %v5164
        %v5509 = vpop.f32.mrb[0].mxu0
        %v5510 = vadd.f32 0.0, %v5509
        %v5511 = vpop.f32.mrb[0].mxu0
        %v5512 = vpop.f32.mrb[0].mxu0
        %v5513 = vadd.f32 0.0, %v5512
        %v5514 = vpop.f32.mrb[0].mxu0
        %5515 = vmatprep.mubr.bf16.mxu0 %v5168
        %5516 = vmatmul.mubr.bf16.gmra.mrb[0].mxu0 %v5167
        %v5517 = vpop.f32.mrb[0].mxu0
        %v5518 = vadd.f32 0.0, %v5517
        %v5519 = vpop.f32.mrb[0].mxu0
        %v5520 = vpop.f32.mrb[0].mxu0
        %v5521 = vadd.f32 0.0, %v5520
        %v5522 = vpop.f32.mrb[0].mxu0
        %5523 = vdwg.mxu0
        %5524 = vmatprep.subr.bf16.mxu0 0
        %5525 = vmatpush1.bf16.msra.mxu0 %v5331
        %5526 = vmatprep.subr.bf16.mxu0 0
        %5527 = vmatpush1.bf16.msra.mxu0 %v5332
        %5528 = vmatprep.subr.bf16.mxu0 0
        %5529 = vmatpush1.bf16.msra.mxu0 %v5333
        %5530 = vmatprep.subr.bf16.mxu0 0
        %5531 = vmatpush1.bf16.msra.mxu0 %v5334
        %5532 = vmatprep.subr.bf16.mxu0 0
        %5533 = vmatpush1.bf16.msra.mxu0 %v5335
        %5534 = vmatprep.subr.bf16.mxu0 0
        %5535 = vmatpush1.bf16.msra.mxu0 %v5336
        %5536 = vmatprep.subr.bf16.mxu0 0
        %5537 = vmatpush1.bf16.msra.mxu0 %v5337
        %5538 = vmatprep.subr.bf16.mxu0 0
        %5539 = vmatpush1.bf16.msra.mxu0 %v5338
        %5540 = vmatprep.subr.bf16.mxu0 0
        %5541 = vmatpush1.bf16.msra.mxu0 0
        %5542 = vmatprep.subr.bf16.mxu0 0
        %5543 = vmatpush1.bf16.msra.mxu0 0
        %5544 = vmatprep.subr.bf16.mxu0 0
        %5545 = vmatpush1.bf16.msra.mxu0 0
        %5546 = vmatprep.subr.bf16.mxu0 0
        %5547 = vmatpush1.bf16.msra.mxu0 0
        %5548 = vmatprep.subr.bf16.mxu0 0
        %5549 = vmatpush1.bf16.msra.mxu0 0
        %5550 = vmatprep.subr.bf16.mxu0 0
        %5551 = vmatpush1.bf16.msra.mxu0 0
        %5552 = vmatprep.subr.bf16.mxu0 0
        %5553 = vmatpush1.bf16.msra.mxu0 0
        %5554 = vmatprep.subr.bf16.mxu0 0
        %5555 = vmatpush1.bf16.msra.mxu0 0
        %5556 = vmatprep.mubr.bf16.mxu0 0
        %5557 = vmatmul.mubr.bf16.gmra.mrb[0].mxu0 %v5124
        %v5558 = vpop.f32.mrb[0].mxu0
        %v5559 = vadd.f32 %v5398, %v5558
        %v5560 = vpop.f32.mrb[0].mxu0
        %v5561 = vpop.f32.mrb[0].mxu0
        %v5562 = vadd.f32 %v5401, %v5561
        %v5563 = vpop.f32.mrb[0].mxu0
        %5564 = vmatprep.mubr.bf16.mxu0 0
        %5565 = vmatmul.mubr.bf16.gmra.mrb[0].mxu0 %v5127
        %v5566 = vpop.f32.mrb[0].mxu0
        %v5567 = vadd.f32 %v5406, %v5566
        %v5568 = vpop.f32.mrb[0].mxu0
        %v5569 = vpop.f32.mrb[0].mxu0
        %v5570 = vadd.f32 %v5409, %v5569
        %v5571 = vpop.f32.mrb[0].mxu0
        %5572 = vmatprep.mubr.bf16.mxu0 0
        %5573 = vmatmul.mubr.bf16.gmra.mrb[0].mxu0 %v5130
        %v5574 = vpop.f32.mrb[0].mxu0
        %v5575 = vadd.f32 %v5414, %v5574
        %v5576 = vpop.f32.mrb[0].mxu0
        %v5577 = vpop.f32.mrb[0].mxu0
        %v5578 = vadd.f32 %v5417, %v5577
        %v5579 = vpop.f32.mrb[0].mxu0
        %5580 = vmatprep.mubr.bf16.mxu0 0
        %5581 = vmatmul.mubr.bf16.gmra.mrb[0].mxu0 %v5133
        %v5582 = vpop.f32.mrb[0].mxu0
        %v5583 = vadd.f32 %v5422, %v5582
        %v5584 = vpop.f32.mrb[0].mxu0
        %v5585 = vpop.f32.mrb[0].mxu0
        %v5586 = vadd.f32 %v5425, %v5585
        %v5587 = vpop.f32.mrb[0].mxu0
        %5588 = vmatprep.mubr.bf16.mxu0 0
        %5589 = vmatmul.mubr.bf16.gmra.mrb[0].mxu0 %v5136
        %v5590 = vpop.f32.mrb[0].mxu0
        %v5591 = vadd.f32 %v5430, %v5590
        %v5592 = vpop.f32.mrb[0].mxu0
        %v5593 = vpop.f32.mrb[0].mxu0
        %v5594 = vadd.f32 %v5433, %v5593
        %v5595 = vpop.f32.mrb[0].mxu0
        %5596 = vmatprep.mubr.bf16.mxu0 0
        %5597 = vmatmul.mubr.bf16.gmra.mrb[0].mxu0 %v5139
        %v5598 = vpop.f32.mrb[0].mxu0
        %v5599 = vadd.f32 %v5438, %v5598
        %v5600 = vpop.f32.mrb[0].mxu0
        %v5601 = vpop.f32.mrb[0].mxu0
        %v5602 = vadd.f32 %v5441, %v5601
        %v5603 = vpop.f32.mrb[0].mxu0
        %5604 = vmatprep.mubr.bf16.mxu0 0
        %5605 = vmatmul.mubr.bf16.gmra.mrb[0].mxu0 %v5142
        %v5606 = vpop.f32.mrb[0].mxu0
        %v5607 = vadd.f32 %v5446, %v5606
        %v5608 = vpop.f32.mrb[0].mxu0
        %v5609 = vpop.f32.mrb[0].mxu0
        %v5610 = vadd.f32 %v5449, %v5609
        %v5611 = vpop.f32.mrb[0].mxu0
        %5612 = vmatprep.mubr.bf16.mxu0 0
        %5613 = vmatmul.mubr.bf16.gmra.mrb[0].mxu0 %v5145
        %v5614 = vpop.f32.mrb[0].mxu0
        %v5615 = vadd.f32 %v5454, %v5614
        %v5616 = vpop.f32.mrb[0].mxu0
        %v5617 = vpop.f32.mrb[0].mxu0
        %v5618 = vadd.f32 %v5457, %v5617
        %v5619 = vpop.f32.mrb[0].mxu0
        %5620 = vmatprep.mubr.bf16.mxu0 0
        %5621 = vmatmul.mubr.bf16.gmra.mrb[0].mxu0 %v5148
        %v5622 = vpop.f32.mrb[0].mxu0
        %v5623 = vadd.f32 %v5462, %v5622
        %v5624 = vpop.f32.mrb[0].mxu0
        %v5625 = vpop.f32.mrb[0].mxu0
        %v5626 = vadd.f32 %v5465, %v5625
        %v5627 = vpop.f32.mrb[0].mxu0
        %5628 = vmatprep.mubr.bf16.mxu0 0
        %5629 = vmatmul.mubr.bf16.gmra.mrb[0].mxu0 %v5151
        %v5630 = vpop.f32.mrb[0].mxu0
        %v5631 = vadd.f32 %v5470, %v5630
        %v5632 = vpop.f32.mrb[0].mxu0
        %v5633 = vpop.f32.mrb[0].mxu0
        %v5634 = vadd.f32 %v5473, %v5633
        %v5635 = vpop.f32.mrb[0].mxu0
        %5636 = vmatprep.mubr.bf16.mxu0 0
        %5637 = vmatmul.mubr.bf16.gmra.mrb[0].mxu0 %v5154
        %v5638 = vpop.f32.mrb[0].mxu0
        %v5639 = vadd.f32 %v5478, %v5638
        %v5640 = vpop.f32.mrb[0].mxu0
        %v5641 = vpop.f32.mrb[0].mxu0
        %v5642 = vadd.f32 %v5481, %v5641
        %v5643 = vpop.f32.mrb[0].mxu0
        %5644 = vmatprep.mubr.bf16.mxu0 0
        %5645 = vmatmul.mubr.bf16.gmra.mrb[0].mxu0 %v5157
        %v5646 = vpop.f32.mrb[0].mxu0
        %v5647 = vadd.f32 %v5486, %v5646
        %v5648 = vpop.f32.mrb[0].mxu0
        %v5649 = vpop.f32.mrb[0].mxu0
        %v5650 = vadd.f32 %v5489, %v5649
        %v5651 = vpop.f32.mrb[0].mxu0
        %5652 = vmatprep.mubr.bf16.mxu0 0
        %5653 = vmatmul.mubr.bf16.gmra.mrb[0].mxu0 %v5160
        %v5654 = vpop.f32.mrb[0].mxu0
        %v5655 = vadd.f32 %v5494, %v5654
        %v5656 = vpop.f32.mrb[0].mxu0
        %v5657 = vpop.f32.mrb[0].mxu0
        %v5658 = vadd.f32 %v5497, %v5657
        %v5659 = vpop.f32.mrb[0].mxu0
        %5660 = vmatprep.mubr.bf16.mxu0 0
        %5661 = vmatmul.mubr.bf16.gmra.mrb[0].mxu0 %v5163
        %v5662 = vpop.f32.mrb[0].mxu0
        %v5663 = vadd.f32 %v5502, %v5662
        %v5664 = vpop.f32.mrb[0].mxu0
        %v5665 = vpop.f32.mrb[0].mxu0
        %v5666 = vadd.f32 %v5505, %v5665
        %v5667 = vpop.f32.mrb[0].mxu0
        %5668 = vmatprep.mubr.bf16.mxu0 0
        %5669 = vmatmul.mubr.bf16.gmra.mrb[0].mxu0 %v5166
        %v5670 = vpop.f32.mrb[0].mxu0
        %v5671 = vadd.f32 %v5510, %v5670
        %v5672 = vpop.f32.mrb[0].mxu0
        %v5673 = vpop.f32.mrb[0].mxu0
        %v5674 = vadd.f32 %v5513, %v5673
        %v5675 = vpop.f32.mrb[0].mxu0
        %5676 = vmatprep.mubr.bf16.mxu0 0
        %5677 = vmatmul.mubr.bf16.gmra.mrb[0].mxu0 %v5169
        %v5678 = vpop.f32.mrb[0].mxu0
        %v5679 = vadd.f32 %v5518, %v5678
        %v5680 = vpop.f32.mrb[0].mxu0
        %v5681 = vpop.f32.mrb[0].mxu0
        %v5682 = vadd.f32 %v5521, %v5681
        %v5683 = vpop.f32.mrb[0].mxu0
        %5684 = vdwg.mxu0
        %v5685 = vadd.f32 %v4996, %v5559
        %v5686 = vadd.f32 %v4999, %v5562
        %v5687 = vadd.f32 %v5004, %v5567
        %v5688 = vadd.f32 %v5007, %v5570
        %v5689 = vadd.f32 %v5012, %v5575
        %v5690 = vadd.f32 %v5015, %v5578
        %v5691 = vadd.f32 %v5020, %v5583
        %v5692 = vadd.f32 %v5023, %v5586
        %v5693 = vadd.f32 %v5028, %v5591
        %v5694 = vadd.f32 %v5031, %v5594
        %v5695 = vadd.f32 %v5036, %v5599
        %v5696 = vadd.f32 %v5039, %v5602
        %v5697 = vadd.f32 %v5044, %v5607
        %v5698 = vadd.f32 %v5047, %v5610
        %v5699 = vadd.f32 %v5052, %v5615
        %v5700 = vadd.f32 %v5055, %v5618
        %v5701 = vadd.f32 %v5060, %v5623
        %v5702 = vadd.f32 %v5063, %v5626
        %v5703 = vadd.f32 %v5068, %v5631
        %v5704 = vadd.f32 %v5071, %v5634
        %v5705 = vadd.f32 %v5076, %v5639
        %v5706 = vadd.f32 %v5079, %v5642
        %v5707 = vadd.f32 %v5084, %v5647
        %v5708 = vadd.f32 %v5087, %v5650
        %v5709 = vadd.f32 %v5092, %v5655
        %v5710 = vadd.f32 %v5095, %v5658
        %v5711 = vadd.f32 %v5100, %v5663
        %v5712 = vadd.f32 %v5103, %v5666
        %v5713 = vadd.f32 %v5108, %v5671
        %v5714 = vadd.f32 %v5111, %v5674
        %v5715 = vadd.f32 %v5116, %v5679
        %v5716 = vadd.f32 %v5119, %v5682
        %v5718 = vlaneseq
        %v5719 = vshrl.u32 %v5718, 7
        %v5720 = vsub.s32 0, %v5719
        %v5721 = vrot.slane %v3578, %v5720
        %v5723 = vmul.f32 %v5685, %v5721
        %v5724 = vmul.f32 %v5686, %v5721
        %v5725 = vmul.f32 %v5687, %v5721
        %v5726 = vmul.f32 %v5688, %v5721
        %v5727 = vmul.f32 %v5689, %v5721
        %v5728 = vmul.f32 %v5690, %v5721
        %v5729 = vmul.f32 %v5691, %v5721
        %v5730 = vmul.f32 %v5692, %v5721
        %v5731 = vmul.f32 %v5693, %v5721
        %v5732 = vmul.f32 %v5694, %v5721
        %v5733 = vmul.f32 %v5695, %v5721
        %v5734 = vmul.f32 %v5696, %v5721
        %v5735 = vmul.f32 %v5697, %v5721
        %v5736 = vmul.f32 %v5698, %v5721
        %v5737 = vmul.f32 %v5699, %v5721
        %v5738 = vmul.f32 %v5700, %v5721
        %v5739 = vmul.f32 %v5701, %v5721
        %v5740 = vmul.f32 %v5702, %v5721
        %v5741 = vmul.f32 %v5703, %v5721
        %v5742 = vmul.f32 %v5704, %v5721
        %v5743 = vmul.f32 %v5705, %v5721
        %v5744 = vmul.f32 %v5706, %v5721
        %v5745 = vmul.f32 %v5707, %v5721
        %v5746 = vmul.f32 %v5708, %v5721
        %v5747 = vmul.f32 %v5709, %v5721
        %v5748 = vmul.f32 %v5710, %v5721
        %v5749 = vmul.f32 %v5711, %v5721
        %v5750 = vmul.f32 %v5712, %v5721
        %v5751 = vmul.f32 %v5713, %v5721
        %v5752 = vmul.f32 %v5714, %v5721
        %v5753 = vmul.f32 %v5715, %v5721
        %v5754 = vmul.f32 %v5716, %v5721
        %v5756 = vlaneseq
        %v5757 = vshrl.u32 %v5756, 7
        %v5758 = vsub.s32 0, %v5757
        %v5759 = vrot.slane %v3579, %v5758
        %v5761 = vadd.f32 %v5723, %v5759
        %v5762 = vadd.f32 %v5724, %v5759
        %v5763 = vadd.f32 %v5725, %v5759
        %v5764 = vadd.f32 %v5726, %v5759
        %v5765 = vadd.f32 %v5727, %v5759
        %v5766 = vadd.f32 %v5728, %v5759
        %v5767 = vadd.f32 %v5729, %v5759
        %v5768 = vadd.f32 %v5730, %v5759
        %v5769 = vadd.f32 %v5731, %v5759
        %v5770 = vadd.f32 %v5732, %v5759
        %v5771 = vadd.f32 %v5733, %v5759
        %v5772 = vadd.f32 %v5734, %v5759
        %v5773 = vadd.f32 %v5735, %v5759
        %v5774 = vadd.f32 %v5736, %v5759
        %v5775 = vadd.f32 %v5737, %v5759
        %v5776 = vadd.f32 %v5738, %v5759
        %v5777 = vadd.f32 %v5739, %v5759
        %v5778 = vadd.f32 %v5740, %v5759
        %v5779 = vadd.f32 %v5741, %v5759
        %v5780 = vadd.f32 %v5742, %v5759
        %v5781 = vadd.f32 %v5743, %v5759
        %v5782 = vadd.f32 %v5744, %v5759
        %v5783 = vadd.f32 %v5745, %v5759
        %v5784 = vadd.f32 %v5746, %v5759
        %v5785 = vadd.f32 %v5747, %v5759
        %v5786 = vadd.f32 %v5748, %v5759
        %v5787 = vadd.f32 %v5749, %v5759
        %v5788 = vadd.f32 %v5750, %v5759
        %v5789 = vadd.f32 %v5751, %v5759
        %v5790 = vadd.f32 %v5752, %v5759
        %v5791 = vadd.f32 %v5753, %v5759
        %v5792 = vadd.f32 %v5754, %v5759
        %v5793 = vmax.f32 %v5761, 0.0
        %v5794 = vmax.f32 %v5762, 0.0
        %v5795 = vmax.f32 %v5763, 0.0
        %v5796 = vmax.f32 %v5764, 0.0
        %v5797 = vmax.f32 %v5765, 0.0
        %v5798 = vmax.f32 %v5766, 0.0
        %v5799 = vmax.f32 %v5767, 0.0
        %v5800 = vmax.f32 %v5768, 0.0
        %v5801 = vmax.f32 %v5769, 0.0
        %v5802 = vmax.f32 %v5770, 0.0
        %v5803 = vmax.f32 %v5771, 0.0
        %v5804 = vmax.f32 %v5772, 0.0
        %v5805 = vmax.f32 %v5773, 0.0
        %v5806 = vmax.f32 %v5774, 0.0
        %v5807 = vmax.f32 %v5775, 0.0
        %v5808 = vmax.f32 %v5776, 0.0
        %v5809 = vmax.f32 %v5777, 0.0
        %v5810 = vmax.f32 %v5778, 0.0
        %v5811 = vmax.f32 %v5779, 0.0
        %v5812 = vmax.f32 %v5780, 0.0
        %v5813 = vmax.f32 %v5781, 0.0
        %v5814 = vmax.f32 %v5782, 0.0
        %v5815 = vmax.f32 %v5783, 0.0
        %v5816 = vmax.f32 %v5784, 0.0
        %v5817 = vmax.f32 %v5785, 0.0
        %v5818 = vmax.f32 %v5786, 0.0
        %v5819 = vmax.f32 %v5787, 0.0
        %v5820 = vmax.f32 %v5788, 0.0
        %v5821 = vmax.f32 %v5789, 0.0
        %v5822 = vmax.f32 %v5790, 0.0
        %v5823 = vmax.f32 %v5791, 0.0
        %v5824 = vmax.f32 %v5792, 0.0
        %5825 = vst [vmem:[%s271] sm:$0xff] %v5793
        %5826 = vst [vmem:[%s271 + $0x8] sm:$0xff] %v5794
        %5827 = vst [vmem:[%s271 + $0x10] sm:$0xff] %v5795
        %5828 = vst [vmem:[%s271 + $0x18] sm:$0xff] %v5796
        %5829 = vst [vmem:[%s271 + $0x20] sm:$0xff] %v5797
        %5830 = vst [vmem:[%s271 + $0x28] sm:$0xff] %v5798
        %5831 = vst [vmem:[%s271 + $0x30] sm:$0xff] %v5799
        %5832 = vst [vmem:[%s271 + $0x38] sm:$0xff] %v5800
        %5833 = vst [vmem:[%s271 + $0x40] sm:$0xff] %v5801
        %5834 = vst [vmem:[%s271 + $0x48] sm:$0xff] %v5802
        %5835 = vst [vmem:[%s271 + $0x50] sm:$0xff] %v5803
        %5836 = vst [vmem:[%s271 + $0x58] sm:$0xff] %v5804
        %5837 = vst [vmem:[%s271 + $0x60] sm:$0xff] %v5805
        %5838 = vst [vmem:[%s271 + $0x68] sm:$0xff] %v5806
        %5839 = vst [vmem:[%s271 + $0x70] sm:$0xff] %v5807
        %5840 = vst [vmem:[%s271 + $0x78] sm:$0xff] %v5808
        %5841 = vst [vmem:[%s271 + $0x80] sm:$0xff] %v5809
        %5842 = vst [vmem:[%s271 + $0x88] sm:$0xff] %v5810
        %5843 = vst [vmem:[%s271 + $0x90] sm:$0xff] %v5811
        %5844 = vst [vmem:[%s271 + $0x98] sm:$0xff] %v5812
        %5845 = vst [vmem:[%s271 + $0xa0] sm:$0xff] %v5813
        %5846 = vst [vmem:[%s271 + $0xa8] sm:$0xff] %v5814
        %5847 = vst [vmem:[%s271 + $0xb0] sm:$0xff] %v5815
        %5848 = vst [vmem:[%s271 + $0xb8] sm:$0xff] %v5816
        %5849 = vst [vmem:[%s271 + $0xc0] sm:$0xff] %v5817
        %5850 = vst [vmem:[%s271 + $0xc8] sm:$0xff] %v5818
        %5851 = vst [vmem:[%s271 + $0xd0] sm:$0xff] %v5819
        %5852 = vst [vmem:[%s271 + $0xd8] sm:$0xff] %v5820
        %5853 = vst [vmem:[%s271 + $0xe0] sm:$0xff] %v5821
        %5854 = vst [vmem:[%s271 + $0xe8] sm:$0xff] %v5822
        %5855 = vst [vmem:[%s271 + $0xf0] sm:$0xff] %v5823
        %5856 = vst [vmem:[%s271 + $0xf8] sm:$0xff] %v5824
        %s5857 = sand.u32 %s181, 1
        %s5858 = scalar_lea.sflag [#allocation7], %s5857
        %s5859 = sand.u32 %s181, 1
        %s5860 = smul.addr %s5859, 256
        %s5861 = scalar_lea.vmem [#allocation6], %s5860
        // Predicated region
        $region49: #{bridge_forward.1} parent=47 // pred_check
          %p5862 = pneg %p191
        $region50: #{bridge_forward.1} parent=47 // pred_check_branch
          %5864 = sbr.rel (%p5862) target = $region52
        $region51: #{bridge_forward.1} parent=47 // pred_region
          %s5866 = ssub.s32 4096, 4096
          %5867 = vsyncadd %s5858, %s5866
          %s5868 = smul.addr %s21, 32
          %s5869 = smul.addr %s5868, 128
          %s5870 = scalar_lea.hbm %s7, %s5869
          %s5871 = sshll.u32 %s5861, 4
          %s5872 = int_to_ptr.vmem [resolvable:$true] %s5871
          %5877 = dma.vmem_to_hbm [thread:$0]  %s5872, 4096, %s5870, %s5858, 128, 128, 8
        $region52: #{bridge_forward.1} parent=47 // pred_fallthru
          _
      $region48: #{bridge_forward.1} parent=5 // pred_fallthru
        _
      %p5878 = scmp.le.s32.totalorder 2, %s16
      // Predicated region
      $region53: #{bridge_forward.1} parent=5 // pred_check
        %p5879 = pneg %p5878
      $region54: #{bridge_forward.1} parent=5 // pred_check_branch
        %5881 = sbr.rel (%p5879) target = $region56
      $region55: #{bridge_forward.1} parent=5 // pred_region
        %s5882 = ssub.s32 %s16, 2
        // Predicated region
        $region57: #{bridge_forward.1} parent=55 // pred_check
          %p5883 = pneg %p197
        $region58: #{bridge_forward.1} parent=55 // pred_check_branch
          %5885 = sbr.rel (%p5883) target = $region60
        $region59: #{bridge_forward.1} parent=55 // pred_region
          %s5886 = sand.u32 %s182, 1
          %s5887 = scalar_lea.sflag [#allocation7], %s5886
          %s5888 = sand.u32 %s182, 1
          %s5889 = smul.addr %s5888, 256
          %s5890 = scalar_lea.vmem [#allocation6], %s5889
          %5891 = dma.done %s5887, 4096
        $region60: #{bridge_forward.1} parent=55 // pred_fallthru
          _
      $region56: #{bridge_forward.1} parent=5 // pred_fallthru
        _
    $region6: #{bridge_forward.1} parent=1 // loop_footer
      %s20 = sadd.s32 1, %s16
    $region7: #{bridge_forward.1} parent=1 // loop_footer_branch
      %15 = sbr.rel target = $region3
    $region8: #{bridge_forward.1} parent=1 // loop_exit
      _
    %5892 = vsyncpa [#allocation7], 1
    %s5893 = scalar_lea.sflag [#allocation7], 1
    %5894 = vsyncpa %s5893, 1

</llo_original>
